<compile_context>
chip_gen: v7x
topology: tpu7x:2x2x1
jax: 0.10.0
libtpu: 0.0.40
codegen_flags: <defaults>
</compile_context>

<pallas_src>
import functools

import jax
import jax.numpy as jnp
from jax.experimental import pallas as pl
from jax.experimental.pallas import tpu as pltpu

# Model dimensions implied by the PyTorch module.
C_IN, C_OUT, K = 3, 6, 5
H_IN = W_IN = 44                    # 44 -> conv(5) -> 40 -> pool(8) -> 5 ; 6*5*5 = 150 = fc1 in
H_CONV = W_CONV = H_IN - K + 1      # 40
POOL = 8
H_POOL = W_POOL = H_CONV // POOL    # 5
FLAT = C_OUT * H_POOL * W_POOL      # 150
HID = 90
N_CLASS = 6

M_IN = C_IN * W_IN                  # 132: per-row feature width, m = c*44 + j
K_CAT = K * M_IN                    # 660: fused conv contraction dim (ky-major)
N_CONV = C_OUT * W_CONV             # 240: conv output columns, n = o*40 + x0
HID_PAD = 128                       # 90 -> 128 (zero padded, numerically exact)
OUT_PAD = 128                       # 6  -> 128 (zero padded, sliced in wrapper)


# ----------------------------- Pallas kernel ------------------------------- #

def cnn_fused_kernel(x_ref, g_ref, bc_ref, w1_ref, b1_ref, w2_ref, b2_ref,
                     w3_ref, b3_ref, o_ref):
    # x_ref : (TB, 44, 132)  raw images, x[b, y, c*44 + j]   (bf16 or f32)
    # g_ref : (660, 240)     fused banded conv weights (ky-major rows)
    # bc_ref: (1, 240)       conv bias repeated over x0                (f32)
    # w1    : (150, 128) b1: (1,128)  w2: (128,128) b2: (1,128)  w3: (128,128) b3: (1,128)
    # o_ref : (TB, 128)      logits (cols 6..127 are zero)
    tb = x_ref.shape[0]
    x = x_ref[...]                                                    # (TB, 44, 132)

    # ky-fused im2col staging (single pass, VMEM only):
    #   lhs[b, y, ky*132 + m] = x[b, y + ky, m]
    lhs = jnp.concatenate([x[:, ky:ky + H_CONV, :] for ky in range(K)], axis=-1)
    lhs = lhs.reshape(tb * H_CONV, K_CAT)                             # (TB*40, 660)

    # Whole 5x5x3 conv as one MXU matmul with f32 accumulation.
    conv = jnp.dot(lhs, g_ref[...], preferred_element_type=jnp.float32)   # (TB*40, 240)
    conv = jnp.maximum(conv + bc_ref[...], 0.0)                       # bias + ReLU
    conv = conv.reshape(tb, H_CONV, N_CONV)

    # 8x8 max pool: rows (8 sublanes) then the 8 adjacent lanes of each window.
    r = jnp.max(conv.reshape(tb, H_POOL, POOL, N_CONV), axis=2)           # (TB, 5, 240)
    p = jnp.max(r.reshape(tb, H_POOL, C_OUT * W_POOL, POOL), axis=-1)     # (TB, 5, 30)
    flat = p.reshape(tb, FLAT)                                        # (TB, 150), order (py, c, px)

    # MLP (fc1 weight columns are pre-permuted to the (py, c, px) flatten order).
    h = jnp.dot(flat, w1_ref[...], preferred_element_type=jnp.float32) + b1_ref[...]
    h = jnp.maximum(h, 0.0)
    # TODO(synk): Dropout(p=0.3) is implemented as eval-mode identity (train-mode
    # torch RNG is not reproducible in a kernel); same for the second dropout.
    h = jnp.dot(h, w2_ref[...], preferred_element_type=jnp.float32) + b2_ref[...]
    h = jnp.maximum(h, 0.0)
    o_ref[...] = jnp.dot(h, w3_ref[...], preferred_element_type=jnp.float32) + b3_ref[...]


# ------------------------------- JAX glue ---------------------------------- #

def _zero_pad(a, shape):
    out = jnp.zeros(shape, a.dtype)
    return out.at[tuple(slice(0, s) for s in a.shape)].set(a)


def _banded_conv_weights(conv_w):
    """G[ky*132 + c*44 + j, o*40 + x0] = conv_w[o, c, ky, j - x0] if 0 <= j-x0 < 5 else 0."""
    j = jnp.arange(W_IN)
    x0 = jnp.arange(W_CONV)
    kx = j[:, None] - x0[None, :]                       # (44, 40)
    valid = (kx >= 0) & (kx < K)
    kxc = jnp.clip(kx, 0, K - 1)
    wg = conv_w[:, :, :, kxc]                           # (O, C, KY, 44, 40)
    wg = jnp.where(valid[None, None, None], wg, 0.0)
    return wg.transpose(2, 1, 3, 0, 4).reshape(K_CAT, N_CONV)        # (660, 240)


def _fc1_permutation():
    """Kernel flat feature order is (py, c, px); torch order is c*25 + py*5 + px."""
    py = jnp.arange(H_POOL)[:, None, None]
    c = jnp.arange(C_OUT)[None, :, None]
    px = jnp.arange(W_POOL)[None, None, :]
    return (c * (H_POOL * W_POOL) + py * W_POOL + px).reshape(-1)    # (150,)


def cnn_forward(x, params, *, tile_b=128, conv_dtype=jnp.bfloat16):
    B = x.shape[0]
    # Single tile for small B; for B > tile_b keep TB=tile_b so the grid has
    # >= 2 steps (lets the "parallel" axis shard across both v7x TensorCores).
    tb = B if B <= tile_b else tile_b
    b_pad = pl.cdiv(B, tb) * tb

    # NCHW -> (B, 44, C*W) relayout + bf16 cast (~23 KB/image, fuses to one XLA op).
    # TODO(synk): produce activations in this layout upstream to avoid the extra HBM pass.
    xr = x.transpose(0, 2, 1, 3).reshape(B, H_IN, M_IN).astype(conv_dtype)
    if b_pad != B:
        xr = jnp.pad(xr, ((0, b_pad - B), (0, 0), (0, 0)))

    g = _banded_conv_weights(params["conv_w"]).astype(conv_dtype)     # (660, 240)
    bc = jnp.repeat(params["conv_b"], W_CONV).reshape(1, N_CONV)      # (1, 240)

    perm = _fc1_permutation()
    w1 = _zero_pad(params["fc1_w"][:, perm].T, (FLAT, HID_PAD))       # (150, 128)
    b1 = _zero_pad(params["fc1_b"].reshape(1, HID), (1, HID_PAD))
    w2 = _zero_pad(params["fc2_w"].T, (HID_PAD, HID_PAD))
    b2 = _zero_pad(params["fc2_b"].reshape(1, HID), (1, HID_PAD))
    w3 = _zero_pad(params["fc3_w"].T, (HID_PAD, OUT_PAD))
    b3 = _zero_pad(params["fc3_b"].reshape(1, N_CLASS), (1, OUT_PAD))

    const2 = lambda b: (0, 0)
    out = pl.pallas_call(
        cnn_fused_kernel,
        out_shape=jax.ShapeDtypeStruct((b_pad, OUT_PAD), jnp.float32),
        grid=(b_pad // tb,),
        in_specs=[
            pl.BlockSpec((tb, H_IN, M_IN), lambda b: (b, 0, 0)),      # raw images (only varying input)
            pl.BlockSpec((K_CAT, N_CONV), const2),                    # fused conv weights, resident
            pl.BlockSpec((1, N_CONV), const2),
            pl.BlockSpec((FLAT, HID_PAD), const2),                    # MLP weights, resident
            pl.BlockSpec((1, HID_PAD), const2),
            pl.BlockSpec((HID_PAD, HID_PAD), const2),
            pl.BlockSpec((1, HID_PAD), const2),
            pl.BlockSpec((HID_PAD, OUT_PAD), const2),
            pl.BlockSpec((1, OUT_PAD), const2),
        ],
        out_specs=pl.BlockSpec((tb, OUT_PAD), lambda b: (b, 0)),
        compiler_params=pltpu.CompilerParams(
            dimension_semantics=("parallel",),
            vmem_limit_bytes=48 * 1024 * 1024),   # v7x-safe (64 MiB physical); plenty on v5e/v6e
    )(xr, g, bc, w1, b1, w2, b2, w3, b3)
    return out[:B, :N_CLASS]


def init_params(key):
    """Deterministic params with PyTorch-default-style uniform(-1/sqrt(fan_in), +)."""
    ks = jax.random.split(key, 8)

    def u(k, shape, fan_in):
        bound = 1.0 / jnp.sqrt(jnp.float32(fan_in))
        return jax.random.uniform(k, shape, jnp.float32, -bound, bound)

    return {
        "conv_w": u(ks[0], (C_OUT, C_IN, K, K), C_IN * K * K),
        "conv_b": u(ks[1], (C_OUT,), C_IN * K * K),
        "fc1_w": u(ks[2], (HID, FLAT), FLAT),
        "fc1_b": u(ks[3], (HID,), FLAT),
        "fc2_w": u(ks[4], (HID, HID), HID),
        "fc2_b": u(ks[5], (HID,), HID),
        "fc3_w": u(ks[6], (N_CLASS, HID), HID),
        "fc3_b": u(ks[7], (N_CLASS,), HID),
    }


def reference_forward(x, params):
    """Pure-JAX f32 reference of the torch forward (dropout in eval mode)."""
    y = jax.lax.conv_general_dilated(
        x, params["conv_w"], (1, 1), "VALID",
        dimension_numbers=("NCHW", "OIHW", "NCHW"))
    y = y + params["conv_b"].reshape(1, C_OUT, 1, 1)
    y = jnp.maximum(y, 0.0)
    y = y.reshape(x.shape[0], C_OUT, H_POOL, POOL, W_POOL, POOL).max(axis=(3, 5))
    y = y.reshape(x.shape[0], FLAT)
    y = jnp.maximum(y @ params["fc1_w"].T + params["fc1_b"], 0.0)
    y = jnp.maximum(y @ params["fc2_w"].T + params["fc2_b"], 0.0)
    return y @ params["fc3_w"].T + params["fc3_b"]


if __name__ == "__main__":
    key = jax.random.PRNGKey(0)
    k_x, k_p = jax.random.split(key)
    x = jax.random.normal(k_x, (2, C_IN, H_IN, W_IN), jnp.float32)   # (2, 3, 44, 44)
    params = init_params(k_p)
    ref = reference_forward(x, params)

    fwd_f32 = jax.jit(functools.partial(cnn_forward, conv_dtype=jnp.float32))
    fwd_bf16 = jax.jit(functools.partial(cnn_forward, conv_dtype=jnp.bfloat16))

    # Exact path (f32 conv operands): tight tolerance.
    out_f32 = jax.block_until_ready(fwd_f32(x, params))
    assert out_f32.shape == (2, N_CLASS)
    assert jnp.allclose(out_f32, ref, atol=1e-3, rtol=1e-3), \
        "Pallas f32 output mismatch vs JAX reference"

    # Fast default path (bf16 conv operands, f32 accumulation): bf16-appropriate tolerance.
    out_bf16 = jax.block_until_ready(fwd_bf16(x, params))
    assert out_bf16.shape == (2, N_CLASS)
    assert jnp.allclose(out_bf16, ref, atol=2e-2, rtol=2e-2), \
        "Pallas bf16-conv output mismatch vs JAX reference"

    print("KERNEL_OK")
</pallas_src>

<mosaic_0001>
module attributes {stable_mosaic.version = 11 : i64} {
  func.func @cnn_fused_kernel(%arg0: i32, %arg1: memref<2x44x132xf32, #tpu.memory_space<vmem>>, %arg2: memref<660x240xf32, #tpu.memory_space<vmem>>, %arg3: memref<1x240xf32, #tpu.memory_space<vmem>>, %arg4: memref<150x128xf32, #tpu.memory_space<vmem>>, %arg5: memref<1x128xf32, #tpu.memory_space<vmem>>, %arg6: memref<128x128xf32, #tpu.memory_space<vmem>>, %arg7: memref<1x128xf32, #tpu.memory_space<vmem>>, %arg8: memref<128x128xf32, #tpu.memory_space<vmem>>, %arg9: memref<1x128xf32, #tpu.memory_space<vmem>>, %arg10: memref<2x128xf32, #tpu.memory_space<vmem>>) attributes {dimension_semantics = [#tpu.dimension_semantics<parallel>], iteration_bounds = array<i64: 1>, scalar_prefetch = 0 : i64, scratch_operands = 0 : i64, tpu.core_type = #tpu.core_type<tc>, window_params = [{transform_indices = @transform_0, window_bounds = array<i64: 2, 44, 132>}, {pipeline_mode = #tpu.pipeline_mode<synchronous>, transform_indices = @transform_1, window_bounds = array<i64: 660, 240>}, {pipeline_mode = #tpu.pipeline_mode<synchronous>, transform_indices = @transform_2, window_bounds = array<i64: 1, 240>}, {pipeline_mode = #tpu.pipeline_mode<synchronous>, transform_indices = @transform_3, window_bounds = array<i64: 150, 128>}, {pipeline_mode = #tpu.pipeline_mode<synchronous>, transform_indices = @transform_4, window_bounds = array<i64: 1, 128>}, {pipeline_mode = #tpu.pipeline_mode<synchronous>, transform_indices = @transform_5, window_bounds = array<i64: 128, 128>}, {pipeline_mode = #tpu.pipeline_mode<synchronous>, transform_indices = @transform_6, window_bounds = array<i64: 1, 128>}, {pipeline_mode = #tpu.pipeline_mode<synchronous>, transform_indices = @transform_7, window_bounds = array<i64: 128, 128>}, {pipeline_mode = #tpu.pipeline_mode<synchronous>, transform_indices = @transform_8, window_bounds = array<i64: 1, 128>}, {transform_indices = @transform_9, window_bounds = array<i64: 2, 128>}]} {
    %c0 = arith.constant 0 : index
    %c0_0 = arith.constant 0 : index
    %c0_1 = arith.constant 0 : index
    %0 = vector.load %arg1[%c0, %c0_0, %c0_1] : memref<2x44x132xf32, #tpu.memory_space<vmem>>, vector<2x44x132xf32>
    %1 = vector.extract_strided_slice %0 {offsets = [0, 0, 0], sizes = [2, 40, 132], strides = [1, 1, 1]} : vector<2x44x132xf32> to vector<2x40x132xf32>
    %2 = vector.extract_strided_slice %0 {offsets = [0, 1, 0], sizes = [2, 40, 132], strides = [1, 1, 1]} : vector<2x44x132xf32> to vector<2x40x132xf32>
    %3 = vector.extract_strided_slice %0 {offsets = [0, 2, 0], sizes = [2, 40, 132], strides = [1, 1, 1]} : vector<2x44x132xf32> to vector<2x40x132xf32>
    %4 = vector.extract_strided_slice %0 {offsets = [0, 3, 0], sizes = [2, 40, 132], strides = [1, 1, 1]} : vector<2x44x132xf32> to vector<2x40x132xf32>
    %5 = vector.extract_strided_slice %0 {offsets = [0, 4, 0], sizes = [2, 40, 132], strides = [1, 1, 1]} : vector<2x44x132xf32> to vector<2x40x132xf32>
    %6 = tpu.concatenate %1, %2, %3, %4, %5 in 2 : vector<2x40x132xf32>, vector<2x40x132xf32>, vector<2x40x132xf32>, vector<2x40x132xf32>, vector<2x40x132xf32> -> vector<2x40x660xf32>
    %7 = vector.shape_cast %6 : vector<2x40x660xf32> to vector<80x660xf32>
    %c0_2 = arith.constant 0 : index
    %c0_3 = arith.constant 0 : index
    %8 = vector.load %arg2[%c0_2, %c0_3] : memref<660x240xf32, #tpu.memory_space<vmem>>, vector<660x240xf32>
    %cst = arith.constant dense<0.000000e+00> : vector<80x240xf32>
    %9 = tpu.matmul %7, %8, %cst {dimension_numbers = #tpu.dot_dimension_numbers<[1], [0], [0], [1], [0, 0, 1, 1], [], []>} : vector<80x660xf32>, vector<660x240xf32>, vector<80x240xf32> -> vector<80x240xf32>
    %c0_4 = arith.constant 0 : index
    %c0_5 = arith.constant 0 : index
    %10 = vector.load %arg3[%c0_4, %c0_5] : memref<1x240xf32, #tpu.memory_space<vmem>>, vector<1x240xf32>
    %11 = vector.broadcast %10 : vector<1x240xf32> to vector<80x240xf32>
    %12 = arith.addf %9, %11 : vector<80x240xf32>
    %cst_6 = arith.constant 0.000000e+00 : f32
    %13 = vector.broadcast %cst_6 : f32 to vector<80x240xf32>
    %14 = arith.maximumf %12, %13 : vector<80x240xf32>
    %15 = vector.shape_cast %14 : vector<80x240xf32> to vector<2x40x240xf32>
    %16 = vector.shape_cast %15 : vector<2x40x240xf32> to vector<2x5x8x240xf32>
    %cst_7 = arith.constant dense<0xFF800000> : vector<2x5x240xf32>
    %17 = vector.multi_reduction <maximumf>, %16, %cst_7 [2] : vector<2x5x8x240xf32> to vector<2x5x240xf32>
    %18 = vector.shape_cast %17 : vector<2x5x240xf32> to vector<2x5x30x8xf32>
    %cst_8 = arith.constant dense<0xFF800000> : vector<2x5x30xf32>
    %19 = vector.multi_reduction <maximumf>, %18, %cst_8 [3] : vector<2x5x30x8xf32> to vector<2x5x30xf32>
    %20 = vector.shape_cast %19 : vector<2x5x30xf32> to vector<2x150xf32>
    %c0_9 = arith.constant 0 : index
    %c0_10 = arith.constant 0 : index
    %21 = vector.load %arg4[%c0_9, %c0_10] : memref<150x128xf32, #tpu.memory_space<vmem>>, vector<150x128xf32>
    %cst_11 = arith.constant dense<0.000000e+00> : vector<2x128xf32>
    %22 = tpu.matmul %20, %21, %cst_11 {dimension_numbers = #tpu.dot_dimension_numbers<[1], [0], [0], [1], [0, 0, 1, 1], [], []>} : vector<2x150xf32>, vector<150x128xf32>, vector<2x128xf32> -> vector<2x128xf32>
    %c0_12 = arith.constant 0 : index
    %c0_13 = arith.constant 0 : index
    %23 = vector.load %arg5[%c0_12, %c0_13] : memref<1x128xf32, #tpu.memory_space<vmem>>, vector<1x128xf32>
    %24 = vector.broadcast %23 : vector<1x128xf32> to vector<2x128xf32>
    %25 = arith.addf %22, %24 : vector<2x128xf32>
    %cst_14 = arith.constant 0.000000e+00 : f32
    %26 = vector.broadcast %cst_14 : f32 to vector<2x128xf32>
    %27 = arith.maximumf %25, %26 : vector<2x128xf32>
    %c0_15 = arith.constant 0 : index
    %c0_16 = arith.constant 0 : index
    %28 = vector.load %arg6[%c0_15, %c0_16] : memref<128x128xf32, #tpu.memory_space<vmem>>, vector<128x128xf32>
    %cst_17 = arith.constant dense<0.000000e+00> : vector<2x128xf32>
    %29 = tpu.matmul %27, %28, %cst_17 {dimension_numbers = #tpu.dot_dimension_numbers<[1], [0], [0], [1], [0, 0, 1, 1], [], []>} : vector<2x128xf32>, vector<128x128xf32>, vector<2x128xf32> -> vector<2x128xf32>
    %c0_18 = arith.constant 0 : index
    %c0_19 = arith.constant 0 : index
    %30 = vector.load %arg7[%c0_18, %c0_19] : memref<1x128xf32, #tpu.memory_space<vmem>>, vector<1x128xf32>
    %31 = vector.broadcast %30 : vector<1x128xf32> to vector<2x128xf32>
    %32 = arith.addf %29, %31 : vector<2x128xf32>
    %cst_20 = arith.constant 0.000000e+00 : f32
    %33 = vector.broadcast %cst_20 : f32 to vector<2x128xf32>
    %34 = arith.maximumf %32, %33 : vector<2x128xf32>
    %c0_21 = arith.constant 0 : index
    %c0_22 = arith.constant 0 : index
    %35 = vector.load %arg8[%c0_21, %c0_22] : memref<128x128xf32, #tpu.memory_space<vmem>>, vector<128x128xf32>
    %cst_23 = arith.constant dense<0.000000e+00> : vector<2x128xf32>
    %36 = tpu.matmul %34, %35, %cst_23 {dimension_numbers = #tpu.dot_dimension_numbers<[1], [0], [0], [1], [0, 0, 1, 1], [], []>} : vector<2x128xf32>, vector<128x128xf32>, vector<2x128xf32> -> vector<2x128xf32>
    %c0_24 = arith.constant 0 : index
    %c0_25 = arith.constant 0 : index
    %37 = vector.load %arg9[%c0_24, %c0_25] : memref<1x128xf32, #tpu.memory_space<vmem>>, vector<1x128xf32>
    %38 = vector.broadcast %37 : vector<1x128xf32> to vector<2x128xf32>
    %39 = arith.addf %36, %38 : vector<2x128xf32>
    %c0_26 = arith.constant 0 : index
    %c0_27 = arith.constant 0 : index
    %40 = vector.load %arg10[%c0_26, %c0_27] : memref<2x128xf32, #tpu.memory_space<vmem>>, vector<2x128xf32>
    tpu.vector_store %arg10[%c0_26, %c0_27], %39 {strides = array<i32>} : memref<2x128xf32, #tpu.memory_space<vmem>>, vector<2x128xf32>,
    return
  }
  func.func @transform_0(%arg0: i32) -> (i32, i32, i32) {
    %c0_i32 = arith.constant 0 : i32
    %c0_i32_0 = arith.constant 0 : i32
    %c0_i32_1 = arith.constant 0 : i32
    return %arg0, %c0_i32, %c0_i32_0 : i32, i32, i32
  }
  func.func @transform_1(%arg0: i32) -> (i32, i32) {
    %c0_i32 = arith.constant 0 : i32
    %c0_i32_0 = arith.constant 0 : i32
    %c0_i32_1 = arith.constant 0 : i32
    return %c0_i32, %c0_i32_0 : i32, i32
  }
  func.func @transform_2(%arg0: i32) -> (i32, i32) {
    %c0_i32 = arith.constant 0 : i32
    %c0_i32_0 = arith.constant 0 : i32
    %c0_i32_1 = arith.constant 0 : i32
    return %c0_i32, %c0_i32_0 : i32, i32
  }
  func.func @transform_3(%arg0: i32) -> (i32, i32) {
    %c0_i32 = arith.constant 0 : i32
    %c0_i32_0 = arith.constant 0 : i32
    %c0_i32_1 = arith.constant 0 : i32
    return %c0_i32, %c0_i32_0 : i32, i32
  }
  func.func @transform_4(%arg0: i32) -> (i32, i32) {
    %c0_i32 = arith.constant 0 : i32
    %c0_i32_0 = arith.constant 0 : i32
    %c0_i32_1 = arith.constant 0 : i32
    return %c0_i32, %c0_i32_0 : i32, i32
  }
  func.func @transform_5(%arg0: i32) -> (i32, i32) {
    %c0_i32 = arith.constant 0 : i32
    %c0_i32_0 = arith.constant 0 : i32
    %c0_i32_1 = arith.constant 0 : i32
    return %c0_i32, %c0_i32_0 : i32, i32
  }
  func.func @transform_6(%arg0: i32) -> (i32, i32) {
    %c0_i32 = arith.constant 0 : i32
    %c0_i32_0 = arith.constant 0 : i32
    %c0_i32_1 = arith.constant 0 : i32
    return %c0_i32, %c0_i32_0 : i32, i32
  }
  func.func @transform_7(%arg0: i32) -> (i32, i32) {
    %c0_i32 = arith.constant 0 : i32
    %c0_i32_0 = arith.constant 0 : i32
    %c0_i32_1 = arith.constant 0 : i32
    return %c0_i32, %c0_i32_0 : i32, i32
  }
  func.func @transform_8(%arg0: i32) -> (i32, i32) {
    %c0_i32 = arith.constant 0 : i32
    %c0_i32_0 = arith.constant 0 : i32
    %c0_i32_1 = arith.constant 0 : i32
    return %c0_i32, %c0_i32_0 : i32, i32
  }
  func.func @transform_9(%arg0: i32) -> (i32, i32) {
    %c0_i32 = arith.constant 0 : i32
    %c0_i32_0 = arith.constant 0 : i32
    return %arg0, %c0_i32 : i32, i32
  }
}

</mosaic_0001>

<llo_original>
// kernel: cnn_forward.1
$region0: #{cnn_forward.1}
  #allocation0 [shape = 'u32[]', space=smem, size = 0x4, offset = 0x4, fixed_abs, tag = 'smem constant byte address 0x4 - core index']
  #allocation1 [shape = 'u32[144,128]{1,0:T(1,128)}', space=vmem, size = 0x12000, scoped, tag = 'internal scratch']
  %s0 = inlined_call_operand.vmem [shape: f32[2,44,132], index: 0, kind: input, shape index: {}]
  %s1 = inlined_call_operand.vmem [shape: f32[660,240], index: 1, kind: input, shape index: {}]
  %s2 = inlined_call_operand.vmem [shape: f32[1,240], index: 2, kind: input, shape index: {}]
  %s3 = inlined_call_operand.vmem [shape: f32[150,128], index: 3, kind: input, shape index: {}]
  %s4 = inlined_call_operand.vmem [shape: f32[1,128], index: 4, kind: input, shape index: {}]
  %s5 = inlined_call_operand.vmem [shape: f32[128,128], index: 5, kind: input, shape index: {}]
  %s6 = inlined_call_operand.vmem [shape: f32[1,128], index: 6, kind: input, shape index: {}]
  %s7 = inlined_call_operand.vmem [shape: f32[128,128], index: 7, kind: input, shape index: {}]
  %s8 = inlined_call_operand.vmem [shape: f32[1,128], index: 8, kind: input, shape index: {}]
  %s9 = inlined_call_operand.hbm [shape: f32[2,128], index: 9, kind: output, shape index: {}]
  %s10 = sld [smem:[#allocation0]]
  $region46: #{cnn_forward.1} parent=0
    _
  %s12 = ssub.s32 1, %s10
  %s13 = scalar_select 0, %s12, %s10
  $region1: #{cnn_forward.1} parent=0
    #allocation2 [shape = 'u8[1024]{0}', space=vmem, size = 0x400, scoped, tag = 'output window, operand 0, single buffered']
    #allocation3 [shape = 's32[1]{0}', space=sflag, size = 0x4, scoped, tag = 'scoped memory for cnn_forward.1']
    %14 = vsyncpa [#allocation3], 0
    // Predicated region
    $region2: #{cnn_forward.1} parent=1 // pred_check
      _
    $region3: #{cnn_forward.1} parent=1 // pred_check_branch
      %16 = sbr.rel (0) target = $region5
    $region4: #{cnn_forward.1} parent=1 // pred_region
      _
    $region5: #{cnn_forward.1} parent=1 // pred_fallthru
      _
    // Predicated region
    $region6: #{cnn_forward.1} parent=1 // pred_check
      _
    $region7: #{cnn_forward.1} parent=1 // pred_check_branch
      %18 = sbr.rel (0) target = $region9
    $region8: #{cnn_forward.1} parent=1 // pred_region
      _
    $region9: #{cnn_forward.1} parent=1 // pred_fallthru
      _
    // Predicated region
    $region10: #{cnn_forward.1} parent=1 // pred_check
      _
    $region11: #{cnn_forward.1} parent=1 // pred_check_branch
      %20 = sbr.rel (0) target = $region13
    $region12: #{cnn_forward.1} parent=1 // pred_region
      _
    $region13: #{cnn_forward.1} parent=1 // pred_fallthru
      _
    // Predicated region
    $region14: #{cnn_forward.1} parent=1 // pred_check
      _
    $region15: #{cnn_forward.1} parent=1 // pred_check_branch
      %22 = sbr.rel (0) target = $region17
    $region16: #{cnn_forward.1} parent=1 // pred_region
      _
    $region17: #{cnn_forward.1} parent=1 // pred_fallthru
      _
    // Predicated region
    $region18: #{cnn_forward.1} parent=1 // pred_check
      _
    $region19: #{cnn_forward.1} parent=1 // pred_check_branch
      %24 = sbr.rel (0) target = $region21
    $region20: #{cnn_forward.1} parent=1 // pred_region
      _
    $region21: #{cnn_forward.1} parent=1 // pred_fallthru
      _
    // Predicated region
    $region22: #{cnn_forward.1} parent=1 // pred_check
      _
    $region23: #{cnn_forward.1} parent=1 // pred_check_branch
      %26 = sbr.rel (0) target = $region25
    $region24: #{cnn_forward.1} parent=1 // pred_region
      _
    $region25: #{cnn_forward.1} parent=1 // pred_fallthru
      _
    // Predicated region
    $region26: #{cnn_forward.1} parent=1 // pred_check
      _
    $region27: #{cnn_forward.1} parent=1 // pred_check_branch
      %28 = sbr.rel (0) target = $region29
    $region28: #{cnn_forward.1} parent=1 // pred_region
      _
    $region29: #{cnn_forward.1} parent=1 // pred_fallthru
      _
    // Predicated region
    $region30: #{cnn_forward.1} parent=1 // pred_check
      _
    $region31: #{cnn_forward.1} parent=1 // pred_check_branch
      %30 = sbr.rel (0) target = $region33
    $region32: #{cnn_forward.1} parent=1 // pred_region
      _
    $region33: #{cnn_forward.1} parent=1 // pred_fallthru
      _
    // Predicated region
    $region34: #{cnn_forward.1} parent=1 // pred_check
      _
    $region35: #{cnn_forward.1} parent=1 // pred_check_branch
      %32 = sbr.rel (0) target = $region37
    $region36: #{cnn_forward.1} parent=1 // pred_region
      _
    $region37: #{cnn_forward.1} parent=1 // pred_fallthru
      _
    %v33 = vld [vmem:[%s0] sm:$0xff]
    %v34 = vld [vmem:[%s0 + $0x8] sm:$0xff]
    %v35 = vld [vmem:[%s0 + $0x10] sm:$0xff]
    %v36 = vld [vmem:[%s0 + $0x18] sm:$0xff]
    %v37 = vld [vmem:[%s0 + $0x20] sm:$0xff]
    %v38 = vld [vmem:[%s0 + $0x28] sm:$0xff]
    %v39 = vld [vmem:[%s0 + $0x30] sm:$0xff]
    %v40 = vld [vmem:[%s0 + $0x38] sm:$0xff]
    %v41 = vld [vmem:[%s0 + $0x40] sm:$0xff]
    %v42 = vld [vmem:[%s0 + $0x48] sm:$0xff]
    %v43 = vld [vmem:[%s0 + $0x50] sm:$0xf]
    %v44 = vld [vmem:[%s0 + $0x58] sm:$0xf]
    %v45 = vld [vmem:[%s0 + $0x60] sm:$0xff]
    %v46 = vld [vmem:[%s0 + $0x68] sm:$0xff]
    %v47 = vld [vmem:[%s0 + $0x70] sm:$0xff]
    %v48 = vld [vmem:[%s0 + $0x78] sm:$0xff]
    %v49 = vld [vmem:[%s0 + $0x80] sm:$0xff]
    %v50 = vld [vmem:[%s0 + $0x88] sm:$0xff]
    %v51 = vld [vmem:[%s0 + $0x90] sm:$0xff]
    %v52 = vld [vmem:[%s0 + $0x98] sm:$0xff]
    %v53 = vld [vmem:[%s0 + $0xa0] sm:$0xff]
    %v54 = vld [vmem:[%s0 + $0xa8] sm:$0xff]
    %v55 = vld [vmem:[%s0 + $0xb0] sm:$0xf]
    %v56 = vld [vmem:[%s0 + $0xb8] sm:$0xf]
    %vm81 = vcmask 1046528
    %v82 = vrot.slane %v33, 1
    %v83 = vrot.slane %v35, 1
    %v84 = vsel %vm81, %v82, %v83
    %v85 = vrot.slane %v34, 1
    %v86 = vrot.slane %v36, 1
    %v87 = vsel %vm81, %v85, %v86
    %v88 = vrot.slane %v37, 1
    %v89 = vsel %vm81, %v83, %v88
    %v90 = vrot.slane %v38, 1
    %v91 = vsel %vm81, %v86, %v90
    %v92 = vrot.slane %v39, 1
    %v93 = vsel %vm81, %v88, %v92
    %v94 = vrot.slane %v40, 1
    %v95 = vsel %vm81, %v90, %v94
    %v96 = vrot.slane %v41, 1
    %v97 = vsel %vm81, %v92, %v96
    %v98 = vrot.slane %v42, 1
    %v99 = vsel %vm81, %v94, %v98
    %v100 = vrot.slane %v43, 1
    %v101 = vsel %vm81, %v96, %v100
    %v102 = vrot.slane %v44, 1
    %v103 = vsel %vm81, %v98, %v102
    %v104 = vrot.slane %v45, 1
    %v105 = vrot.slane %v47, 1
    %v106 = vsel %vm81, %v104, %v105
    %v107 = vrot.slane %v46, 1
    %v108 = vrot.slane %v48, 1
    %v109 = vsel %vm81, %v107, %v108
    %v110 = vrot.slane %v49, 1
    %v111 = vsel %vm81, %v105, %v110
    %v112 = vrot.slane %v50, 1
    %v113 = vsel %vm81, %v108, %v112
    %v114 = vrot.slane %v51, 1
    %v115 = vsel %vm81, %v110, %v114
    %v116 = vrot.slane %v52, 1
    %v117 = vsel %vm81, %v112, %v116
    %v118 = vrot.slane %v53, 1
    %v119 = vsel %vm81, %v114, %v118
    %v120 = vrot.slane %v54, 1
    %v121 = vsel %vm81, %v116, %v120
    %v122 = vrot.slane %v55, 1
    %v123 = vsel %vm81, %v118, %v122
    %v124 = vrot.slane %v56, 1
    %v125 = vsel %vm81, %v120, %v124
    %126 = vrot.lane.b32.xlu0 %v84, 4
    %v127 = vpop.permute.xlu0 %126
    %128 = vrot.lane.b32.xlu0 %v87, 4
    %v129 = vpop.permute.xlu0 %128
    %130 = vrot.lane.b32.xlu0 %v89, 4
    %v131 = vpop.permute.xlu0 %130
    %132 = vrot.lane.b32.xlu0 %v91, 4
    %v133 = vpop.permute.xlu0 %132
    %134 = vrot.lane.b32.xlu0 %v93, 4
    %v135 = vpop.permute.xlu0 %134
    %136 = vrot.lane.b32.xlu0 %v95, 4
    %v137 = vpop.permute.xlu0 %136
    %138 = vrot.lane.b32.xlu0 %v97, 4
    %v139 = vpop.permute.xlu0 %138
    %140 = vrot.lane.b32.xlu0 %v99, 4
    %v141 = vpop.permute.xlu0 %140
    %142 = vrot.lane.b32.xlu0 %v101, 4
    %v143 = vpop.permute.xlu0 %142
    %144 = vrot.lane.b32.xlu0 %v103, 4
    %v145 = vpop.permute.xlu0 %144
    %146 = vrot.lane.b32.xlu0 %v106, 4
    %v147 = vpop.permute.xlu0 %146
    %148 = vrot.lane.b32.xlu0 %v109, 4
    %v149 = vpop.permute.xlu0 %148
    %150 = vrot.lane.b32.xlu0 %v111, 4
    %v151 = vpop.permute.xlu0 %150
    %152 = vrot.lane.b32.xlu0 %v113, 4
    %v153 = vpop.permute.xlu0 %152
    %154 = vrot.lane.b32.xlu0 %v115, 4
    %v155 = vpop.permute.xlu0 %154
    %156 = vrot.lane.b32.xlu0 %v117, 4
    %v157 = vpop.permute.xlu0 %156
    %158 = vrot.lane.b32.xlu0 %v119, 4
    %v159 = vpop.permute.xlu0 %158
    %160 = vrot.lane.b32.xlu0 %v121, 4
    %v161 = vpop.permute.xlu0 %160
    %162 = vrot.lane.b32.xlu0 %v123, 4
    %v163 = vpop.permute.xlu0 %162
    %164 = vrot.lane.b32.xlu0 %v125, 4
    %v165 = vpop.permute.xlu0 %164
    %vm166 = vcmask 31744
    %v167 = vsel %vm166, %v127, %v129
    %v168 = vsel %vm166, %v131, %v133
    %v169 = vsel %vm166, %v135, %v137
    %v170 = vsel %vm166, %v139, %v141
    %v171 = vsel %vm166, %v143, %v145
    %v172 = vsel %vm166, %v147, %v149
    %v173 = vsel %vm166, %v151, %v153
    %v174 = vsel %vm166, %v155, %v157
    %v175 = vsel %vm166, %v159, %v161
    %v176 = vsel %vm166, %v163, %v165
    %vm197 = vcmask 1045504
    %v198 = vrot.slane %v33, 2
    %v199 = vrot.slane %v35, 2
    %v200 = vsel %vm197, %v198, %v199
    %v201 = vrot.slane %v34, 2
    %v202 = vrot.slane %v36, 2
    %v203 = vsel %vm197, %v201, %v202
    %v204 = vrot.slane %v37, 2
    %v205 = vsel %vm197, %v199, %v204
    %v206 = vrot.slane %v38, 2
    %v207 = vsel %vm197, %v202, %v206
    %v208 = vrot.slane %v39, 2
    %v209 = vsel %vm197, %v204, %v208
    %v210 = vrot.slane %v40, 2
    %v211 = vsel %vm197, %v206, %v210
    %v212 = vrot.slane %v41, 2
    %v213 = vsel %vm197, %v208, %v212
    %v214 = vrot.slane %v42, 2
    %v215 = vsel %vm197, %v210, %v214
    %v216 = vrot.slane %v43, 2
    %v217 = vsel %vm197, %v212, %v216
    %v218 = vrot.slane %v44, 2
    %v219 = vsel %vm197, %v214, %v218
    %v220 = vrot.slane %v45, 2
    %v221 = vrot.slane %v47, 2
    %v222 = vsel %vm197, %v220, %v221
    %v223 = vrot.slane %v46, 2
    %v224 = vrot.slane %v48, 2
    %v225 = vsel %vm197, %v223, %v224
    %v226 = vrot.slane %v49, 2
    %v227 = vsel %vm197, %v221, %v226
    %v228 = vrot.slane %v50, 2
    %v229 = vsel %vm197, %v224, %v228
    %v230 = vrot.slane %v51, 2
    %v231 = vsel %vm197, %v226, %v230
    %v232 = vrot.slane %v52, 2
    %v233 = vsel %vm197, %v228, %v232
    %v234 = vrot.slane %v53, 2
    %v235 = vsel %vm197, %v230, %v234
    %v236 = vrot.slane %v54, 2
    %v237 = vsel %vm197, %v232, %v236
    %v238 = vrot.slane %v55, 2
    %v239 = vsel %vm197, %v234, %v238
    %v240 = vrot.slane %v56, 2
    %v241 = vsel %vm197, %v236, %v240
    %242 = vrot.lane.b32.xlu0 %v200, 8
    %v243 = vpop.permute.xlu0 %242
    %244 = vrot.lane.b32.xlu0 %v203, 8
    %v245 = vpop.permute.xlu0 %244
    %246 = vrot.lane.b32.xlu0 %v205, 8
    %v247 = vpop.permute.xlu0 %246
    %248 = vrot.lane.b32.xlu0 %v207, 8
    %v249 = vpop.permute.xlu0 %248
    %250 = vrot.lane.b32.xlu0 %v209, 8
    %v251 = vpop.permute.xlu0 %250
    %252 = vrot.lane.b32.xlu0 %v211, 8
    %v253 = vpop.permute.xlu0 %252
    %254 = vrot.lane.b32.xlu0 %v213, 8
    %v255 = vpop.permute.xlu0 %254
    %256 = vrot.lane.b32.xlu0 %v215, 8
    %v257 = vpop.permute.xlu0 %256
    %258 = vrot.lane.b32.xlu0 %v217, 8
    %v259 = vpop.permute.xlu0 %258
    %260 = vrot.lane.b32.xlu0 %v219, 8
    %v261 = vpop.permute.xlu0 %260
    %262 = vrot.lane.b32.xlu0 %v222, 8
    %v263 = vpop.permute.xlu0 %262
    %264 = vrot.lane.b32.xlu0 %v225, 8
    %v265 = vpop.permute.xlu0 %264
    %266 = vrot.lane.b32.xlu0 %v227, 8
    %v267 = vpop.permute.xlu0 %266
    %268 = vrot.lane.b32.xlu0 %v229, 8
    %v269 = vpop.permute.xlu0 %268
    %270 = vrot.lane.b32.xlu0 %v231, 8
    %v271 = vpop.permute.xlu0 %270
    %272 = vrot.lane.b32.xlu0 %v233, 8
    %v273 = vpop.permute.xlu0 %272
    %274 = vrot.lane.b32.xlu0 %v235, 8
    %v275 = vpop.permute.xlu0 %274
    %276 = vrot.lane.b32.xlu0 %v237, 8
    %v277 = vpop.permute.xlu0 %276
    %278 = vrot.lane.b32.xlu0 %v239, 8
    %v279 = vpop.permute.xlu0 %278
    %280 = vrot.lane.b32.xlu0 %v241, 8
    %v281 = vpop.permute.xlu0 %280
    %vm282 = vcmask 64512
    %v283 = vsel %vm282, %v243, %v245
    %v284 = vsel %vm282, %v247, %v249
    %v285 = vsel %vm282, %v251, %v253
    %v286 = vsel %vm282, %v255, %v257
    %v287 = vsel %vm282, %v259, %v261
    %v288 = vsel %vm282, %v263, %v265
    %v289 = vsel %vm282, %v267, %v269
    %v290 = vsel %vm282, %v271, %v273
    %v291 = vsel %vm282, %v275, %v277
    %v292 = vsel %vm282, %v279, %v281
    %vm313 = vcmask 1044480
    %v314 = vrot.slane %v33, 3
    %v315 = vrot.slane %v35, 3
    %v316 = vsel %vm313, %v314, %v315
    %v317 = vrot.slane %v34, 3
    %v318 = vrot.slane %v36, 3
    %v319 = vsel %vm313, %v317, %v318
    %v320 = vrot.slane %v37, 3
    %v321 = vsel %vm313, %v315, %v320
    %v322 = vrot.slane %v38, 3
    %v323 = vsel %vm313, %v318, %v322
    %v324 = vrot.slane %v39, 3
    %v325 = vsel %vm313, %v320, %v324
    %v326 = vrot.slane %v40, 3
    %v327 = vsel %vm313, %v322, %v326
    %v328 = vrot.slane %v41, 3
    %v329 = vsel %vm313, %v324, %v328
    %v330 = vrot.slane %v42, 3
    %v331 = vsel %vm313, %v326, %v330
    %v332 = vrot.slane %v43, 3
    %v333 = vsel %vm313, %v328, %v332
    %v334 = vrot.slane %v44, 3
    %v335 = vsel %vm313, %v330, %v334
    %v336 = vrot.slane %v45, 3
    %v337 = vrot.slane %v47, 3
    %v338 = vsel %vm313, %v336, %v337
    %v339 = vrot.slane %v46, 3
    %v340 = vrot.slane %v48, 3
    %v341 = vsel %vm313, %v339, %v340
    %v342 = vrot.slane %v49, 3
    %v343 = vsel %vm313, %v337, %v342
    %v344 = vrot.slane %v50, 3
    %v345 = vsel %vm313, %v340, %v344
    %v346 = vrot.slane %v51, 3
    %v347 = vsel %vm313, %v342, %v346
    %v348 = vrot.slane %v52, 3
    %v349 = vsel %vm313, %v344, %v348
    %v350 = vrot.slane %v53, 3
    %v351 = vsel %vm313, %v346, %v350
    %v352 = vrot.slane %v54, 3
    %v353 = vsel %vm313, %v348, %v352
    %v354 = vrot.slane %v55, 3
    %v355 = vsel %vm313, %v350, %v354
    %v356 = vrot.slane %v56, 3
    %v357 = vsel %vm313, %v352, %v356
    %358 = vrot.lane.b32.xlu0 %v316, 12
    %v359 = vpop.permute.xlu0 %358
    %360 = vrot.lane.b32.xlu0 %v319, 12
    %v361 = vpop.permute.xlu0 %360
    %362 = vrot.lane.b32.xlu0 %v321, 12
    %v363 = vpop.permute.xlu0 %362
    %364 = vrot.lane.b32.xlu0 %v323, 12
    %v365 = vpop.permute.xlu0 %364
    %366 = vrot.lane.b32.xlu0 %v325, 12
    %v367 = vpop.permute.xlu0 %366
    %368 = vrot.lane.b32.xlu0 %v327, 12
    %v369 = vpop.permute.xlu0 %368
    %370 = vrot.lane.b32.xlu0 %v329, 12
    %v371 = vpop.permute.xlu0 %370
    %372 = vrot.lane.b32.xlu0 %v331, 12
    %v373 = vpop.permute.xlu0 %372
    %374 = vrot.lane.b32.xlu0 %v333, 12
    %v375 = vpop.permute.xlu0 %374
    %376 = vrot.lane.b32.xlu0 %v335, 12
    %v377 = vpop.permute.xlu0 %376
    %378 = vrot.lane.b32.xlu0 %v338, 12
    %v379 = vpop.permute.xlu0 %378
    %380 = vrot.lane.b32.xlu0 %v341, 12
    %v381 = vpop.permute.xlu0 %380
    %382 = vrot.lane.b32.xlu0 %v343, 12
    %v383 = vpop.permute.xlu0 %382
    %384 = vrot.lane.b32.xlu0 %v345, 12
    %v385 = vpop.permute.xlu0 %384
    %386 = vrot.lane.b32.xlu0 %v347, 12
    %v387 = vpop.permute.xlu0 %386
    %388 = vrot.lane.b32.xlu0 %v349, 12
    %v389 = vpop.permute.xlu0 %388
    %390 = vrot.lane.b32.xlu0 %v351, 12
    %v391 = vpop.permute.xlu0 %390
    %392 = vrot.lane.b32.xlu0 %v353, 12
    %v393 = vpop.permute.xlu0 %392
    %394 = vrot.lane.b32.xlu0 %v355, 12
    %v395 = vpop.permute.xlu0 %394
    %396 = vrot.lane.b32.xlu0 %v357, 12
    %v397 = vpop.permute.xlu0 %396
    %vm398 = vcmask 97280
    %v399 = vsel %vm398, %v359, %v361
    %v400 = vsel %vm398, %v363, %v365
    %v401 = vsel %vm398, %v367, %v369
    %v402 = vsel %vm398, %v371, %v373
    %v403 = vsel %vm398, %v375, %v377
    %v404 = vsel %vm398, %v379, %v381
    %v405 = vsel %vm398, %v383, %v385
    %v406 = vsel %vm398, %v387, %v389
    %v407 = vsel %vm398, %v391, %v393
    %v408 = vsel %vm398, %v395, %v397
    %vm429 = vcmask 1043456
    %v430 = vrot.slane %v33, 4
    %v431 = vrot.slane %v35, 4
    %v432 = vsel %vm429, %v430, %v431
    %v433 = vrot.slane %v34, 4
    %v434 = vrot.slane %v36, 4
    %v435 = vsel %vm429, %v433, %v434
    %v436 = vrot.slane %v37, 4
    %v437 = vsel %vm429, %v431, %v436
    %v438 = vrot.slane %v38, 4
    %v439 = vsel %vm429, %v434, %v438
    %v440 = vrot.slane %v39, 4
    %v441 = vsel %vm429, %v436, %v440
    %v442 = vrot.slane %v40, 4
    %v443 = vsel %vm429, %v438, %v442
    %v444 = vrot.slane %v41, 4
    %v445 = vsel %vm429, %v440, %v444
    %v446 = vrot.slane %v42, 4
    %v447 = vsel %vm429, %v442, %v446
    %v448 = vrot.slane %v43, 4
    %v449 = vsel %vm429, %v444, %v448
    %v450 = vrot.slane %v44, 4
    %v451 = vsel %vm429, %v446, %v450
    %v452 = vrot.slane %v45, 4
    %v453 = vrot.slane %v47, 4
    %v454 = vsel %vm429, %v452, %v453
    %v455 = vrot.slane %v46, 4
    %v456 = vrot.slane %v48, 4
    %v457 = vsel %vm429, %v455, %v456
    %v458 = vrot.slane %v49, 4
    %v459 = vsel %vm429, %v453, %v458
    %v460 = vrot.slane %v50, 4
    %v461 = vsel %vm429, %v456, %v460
    %v462 = vrot.slane %v51, 4
    %v463 = vsel %vm429, %v458, %v462
    %v464 = vrot.slane %v52, 4
    %v465 = vsel %vm429, %v460, %v464
    %v466 = vrot.slane %v53, 4
    %v467 = vsel %vm429, %v462, %v466
    %v468 = vrot.slane %v54, 4
    %v469 = vsel %vm429, %v464, %v468
    %v470 = vrot.slane %v55, 4
    %v471 = vsel %vm429, %v466, %v470
    %v472 = vrot.slane %v56, 4
    %v473 = vsel %vm429, %v468, %v472
    %474 = vrot.lane.b32.xlu0 %v432, 16
    %v475 = vpop.permute.xlu0 %474
    %476 = vrot.lane.b32.xlu0 %v435, 16
    %v477 = vpop.permute.xlu0 %476
    %478 = vrot.lane.b32.xlu0 %v437, 16
    %v479 = vpop.permute.xlu0 %478
    %480 = vrot.lane.b32.xlu0 %v439, 16
    %v481 = vpop.permute.xlu0 %480
    %482 = vrot.lane.b32.xlu0 %v441, 16
    %v483 = vpop.permute.xlu0 %482
    %484 = vrot.lane.b32.xlu0 %v443, 16
    %v485 = vpop.permute.xlu0 %484
    %486 = vrot.lane.b32.xlu0 %v445, 16
    %v487 = vpop.permute.xlu0 %486
    %488 = vrot.lane.b32.xlu0 %v447, 16
    %v489 = vpop.permute.xlu0 %488
    %490 = vrot.lane.b32.xlu0 %v449, 16
    %v491 = vpop.permute.xlu0 %490
    %492 = vrot.lane.b32.xlu0 %v451, 16
    %v493 = vpop.permute.xlu0 %492
    %494 = vrot.lane.b32.xlu0 %v454, 16
    %v495 = vpop.permute.xlu0 %494
    %496 = vrot.lane.b32.xlu0 %v457, 16
    %v497 = vpop.permute.xlu0 %496
    %498 = vrot.lane.b32.xlu0 %v459, 16
    %v499 = vpop.permute.xlu0 %498
    %500 = vrot.lane.b32.xlu0 %v461, 16
    %v501 = vpop.permute.xlu0 %500
    %502 = vrot.lane.b32.xlu0 %v463, 16
    %v503 = vpop.permute.xlu0 %502
    %504 = vrot.lane.b32.xlu0 %v465, 16
    %v505 = vpop.permute.xlu0 %504
    %506 = vrot.lane.b32.xlu0 %v467, 16
    %v507 = vpop.permute.xlu0 %506
    %508 = vrot.lane.b32.xlu0 %v469, 16
    %v509 = vpop.permute.xlu0 %508
    %510 = vrot.lane.b32.xlu0 %v471, 16
    %v511 = vpop.permute.xlu0 %510
    %512 = vrot.lane.b32.xlu0 %v473, 16
    %v513 = vpop.permute.xlu0 %512
    %vm514 = vcmask 130048
    %v515 = vsel %vm514, %v475, %v477
    %v516 = vsel %vm514, %v479, %v481
    %v517 = vsel %vm514, %v483, %v485
    %v518 = vsel %vm514, %v487, %v489
    %v519 = vsel %vm514, %v491, %v493
    %v520 = vsel %vm514, %v495, %v497
    %v521 = vsel %vm514, %v499, %v501
    %v522 = vsel %vm514, %v503, %v505
    %v523 = vsel %vm514, %v507, %v509
    %v524 = vsel %vm514, %v511, %v513
    %v535 = vsel %vm166, %v34, %v127
    %v536 = vsel %vm166, %v36, %v131
    %v537 = vsel %vm166, %v38, %v135
    %v538 = vsel %vm166, %v40, %v139
    %v539 = vsel %vm166, %v42, %v143
    %v540 = vsel %vm166, %v46, %v147
    %v541 = vsel %vm166, %v48, %v151
    %v542 = vsel %vm166, %v50, %v155
    %v543 = vsel %vm166, %v52, %v159
    %v544 = vsel %vm166, %v54, %v163
    %v545 = vsel %vm282, %v167, %v243
    %v546 = vsel %vm282, %v168, %v247
    %v547 = vsel %vm282, %v169, %v251
    %v548 = vsel %vm282, %v170, %v255
    %v549 = vsel %vm282, %v171, %v259
    %v550 = vsel %vm282, %v172, %v263
    %v551 = vsel %vm282, %v173, %v267
    %v552 = vsel %vm282, %v174, %v271
    %v553 = vsel %vm282, %v175, %v275
    %v554 = vsel %vm282, %v176, %v279
    %v555 = vsel %vm398, %v283, %v359
    %v556 = vsel %vm398, %v284, %v363
    %v557 = vsel %vm398, %v285, %v367
    %v558 = vsel %vm398, %v286, %v371
    %v559 = vsel %vm398, %v287, %v375
    %v560 = vsel %vm398, %v288, %v379
    %v561 = vsel %vm398, %v289, %v383
    %v562 = vsel %vm398, %v290, %v387
    %v563 = vsel %vm398, %v291, %v391
    %v564 = vsel %vm398, %v292, %v395
    %v565 = vsel %vm514, %v399, %v475
    %v566 = vsel %vm514, %v400, %v479
    %v567 = vsel %vm514, %v401, %v483
    %v568 = vsel %vm514, %v402, %v487
    %v569 = vsel %vm514, %v403, %v491
    %v570 = vsel %vm514, %v404, %v495
    %v571 = vsel %vm514, %v405, %v499
    %v572 = vsel %vm514, %v406, %v503
    %v573 = vsel %vm514, %v407, %v507
    %v574 = vsel %vm514, %v408, %v511
    %v575 = vld [vmem:[%s1] sm:$0xff]
    %v576 = vld [vmem:[%s1 + $0x8] sm:$0xff]
    %v577 = vld [vmem:[%s1 + $0x10] sm:$0xff]
    %v578 = vld [vmem:[%s1 + $0x18] sm:$0xff]
    %v579 = vld [vmem:[%s1 + $0x20] sm:$0xff]
    %v580 = vld [vmem:[%s1 + $0x28] sm:$0xff]
    %v581 = vld [vmem:[%s1 + $0x30] sm:$0xff]
    %v582 = vld [vmem:[%s1 + $0x38] sm:$0xff]
    %v583 = vld [vmem:[%s1 + $0x40] sm:$0xff]
    %v584 = vld [vmem:[%s1 + $0x48] sm:$0xff]
    %v585 = vld [vmem:[%s1 + $0x50] sm:$0xff]
    %v586 = vld [vmem:[%s1 + $0x58] sm:$0xff]
    %v587 = vld [vmem:[%s1 + $0x60] sm:$0xff]
    %v588 = vld [vmem:[%s1 + $0x68] sm:$0xff]
    %v589 = vld [vmem:[%s1 + $0x70] sm:$0xff]
    %v590 = vld [vmem:[%s1 + $0x78] sm:$0xff]
    %v591 = vld [vmem:[%s1 + $0x80] sm:$0xff]
    %v592 = vld [vmem:[%s1 + $0x88] sm:$0xff]
    %v593 = vld [vmem:[%s1 + $0x90] sm:$0xff]
    %v594 = vld [vmem:[%s1 + $0x98] sm:$0xff]
    %v595 = vld [vmem:[%s1 + $0xa0] sm:$0xff]
    %v596 = vld [vmem:[%s1 + $0xa8] sm:$0xff]
    %v597 = vld [vmem:[%s1 + $0xb0] sm:$0xff]
    %v598 = vld [vmem:[%s1 + $0xb8] sm:$0xff]
    %v599 = vld [vmem:[%s1 + $0xc0] sm:$0xff]
    %v600 = vld [vmem:[%s1 + $0xc8] sm:$0xff]
    %v601 = vld [vmem:[%s1 + $0xd0] sm:$0xff]
    %v602 = vld [vmem:[%s1 + $0xd8] sm:$0xff]
    %v603 = vld [vmem:[%s1 + $0xe0] sm:$0xff]
    %v604 = vld [vmem:[%s1 + $0xe8] sm:$0xff]
    %v605 = vld [vmem:[%s1 + $0xf0] sm:$0xff]
    %v606 = vld [vmem:[%s1 + $0xf8] sm:$0xff]
    %v607 = vld [vmem:[%s1 + $0x100] sm:$0xff]
    %v608 = vld [vmem:[%s1 + $0x108] sm:$0xff]
    %v609 = vld [vmem:[%s1 + $0x110] sm:$0xff]
    %v610 = vld [vmem:[%s1 + $0x118] sm:$0xff]
    %v611 = vld [vmem:[%s1 + $0x120] sm:$0xff]
    %v612 = vld [vmem:[%s1 + $0x128] sm:$0xff]
    %v613 = vld [vmem:[%s1 + $0x130] sm:$0xff]
    %v614 = vld [vmem:[%s1 + $0x138] sm:$0xff]
    %v615 = vld [vmem:[%s1 + $0x140] sm:$0xff]
    %v616 = vld [vmem:[%s1 + $0x148] sm:$0xff]
    %v617 = vld [vmem:[%s1 + $0x150] sm:$0xff]
    %v618 = vld [vmem:[%s1 + $0x158] sm:$0xff]
    %v619 = vld [vmem:[%s1 + $0x160] sm:$0xff]
    %v620 = vld [vmem:[%s1 + $0x168] sm:$0xff]
    %v621 = vld [vmem:[%s1 + $0x170] sm:$0xff]
    %v622 = vld [vmem:[%s1 + $0x178] sm:$0xff]
    %v623 = vld [vmem:[%s1 + $0x180] sm:$0xff]
    %v624 = vld [vmem:[%s1 + $0x188] sm:$0xff]
    %v625 = vld [vmem:[%s1 + $0x190] sm:$0xff]
    %v626 = vld [vmem:[%s1 + $0x198] sm:$0xff]
    %v627 = vld [vmem:[%s1 + $0x1a0] sm:$0xff]
    %v628 = vld [vmem:[%s1 + $0x1a8] sm:$0xff]
    %v629 = vld [vmem:[%s1 + $0x1b0] sm:$0xff]
    %v630 = vld [vmem:[%s1 + $0x1b8] sm:$0xff]
    %v631 = vld [vmem:[%s1 + $0x1c0] sm:$0xff]
    %v632 = vld [vmem:[%s1 + $0x1c8] sm:$0xff]
    %v633 = vld [vmem:[%s1 + $0x1d0] sm:$0xff]
    %v634 = vld [vmem:[%s1 + $0x1d8] sm:$0xff]
    %v635 = vld [vmem:[%s1 + $0x1e0] sm:$0xff]
    %v636 = vld [vmem:[%s1 + $0x1e8] sm:$0xff]
    %v637 = vld [vmem:[%s1 + $0x1f0] sm:$0xff]
    %v638 = vld [vmem:[%s1 + $0x1f8] sm:$0xff]
    %v639 = vld [vmem:[%s1 + $0x200] sm:$0xff]
    %v640 = vld [vmem:[%s1 + $0x208] sm:$0xff]
    %v641 = vld [vmem:[%s1 + $0x210] sm:$0xff]
    %v642 = vld [vmem:[%s1 + $0x218] sm:$0xff]
    %v643 = vld [vmem:[%s1 + $0x220] sm:$0xff]
    %v644 = vld [vmem:[%s1 + $0x228] sm:$0xff]
    %v645 = vld [vmem:[%s1 + $0x230] sm:$0xff]
    %v646 = vld [vmem:[%s1 + $0x238] sm:$0xff]
    %v647 = vld [vmem:[%s1 + $0x240] sm:$0xff]
    %v648 = vld [vmem:[%s1 + $0x248] sm:$0xff]
    %v649 = vld [vmem:[%s1 + $0x250] sm:$0xff]
    %v650 = vld [vmem:[%s1 + $0x258] sm:$0xff]
    %v651 = vld [vmem:[%s1 + $0x260] sm:$0xff]
    %v652 = vld [vmem:[%s1 + $0x268] sm:$0xff]
    %v653 = vld [vmem:[%s1 + $0x270] sm:$0xff]
    %v654 = vld [vmem:[%s1 + $0x278] sm:$0xff]
    %v655 = vld [vmem:[%s1 + $0x280] sm:$0xff]
    %v656 = vld [vmem:[%s1 + $0x288] sm:$0xff]
    %v657 = vld [vmem:[%s1 + $0x290] sm:$0xff]
    %v658 = vld [vmem:[%s1 + $0x298] sm:$0xff]
    %v659 = vld [vmem:[%s1 + $0x2a0] sm:$0xff]
    %v660 = vld [vmem:[%s1 + $0x2a8] sm:$0xff]
    %v661 = vld [vmem:[%s1 + $0x2b0] sm:$0xff]
    %v662 = vld [vmem:[%s1 + $0x2b8] sm:$0xff]
    %v663 = vld [vmem:[%s1 + $0x2c0] sm:$0xff]
    %v664 = vld [vmem:[%s1 + $0x2c8] sm:$0xff]
    %v665 = vld [vmem:[%s1 + $0x2d0] sm:$0xff]
    %v666 = vld [vmem:[%s1 + $0x2d8] sm:$0xff]
    %v667 = vld [vmem:[%s1 + $0x2e0] sm:$0xff]
    %v668 = vld [vmem:[%s1 + $0x2e8] sm:$0xff]
    %v669 = vld [vmem:[%s1 + $0x2f0] sm:$0xff]
    %v670 = vld [vmem:[%s1 + $0x2f8] sm:$0xff]
    %v671 = vld [vmem:[%s1 + $0x300] sm:$0xff]
    %v672 = vld [vmem:[%s1 + $0x308] sm:$0xff]
    %v673 = vld [vmem:[%s1 + $0x310] sm:$0xff]
    %v674 = vld [vmem:[%s1 + $0x318] sm:$0xff]
    %v675 = vld [vmem:[%s1 + $0x320] sm:$0xff]
    %v676 = vld [vmem:[%s1 + $0x328] sm:$0xff]
    %v677 = vld [vmem:[%s1 + $0x330] sm:$0xff]
    %v678 = vld [vmem:[%s1 + $0x338] sm:$0xff]
    %v679 = vld [vmem:[%s1 + $0x340] sm:$0xff]
    %v680 = vld [vmem:[%s1 + $0x348] sm:$0xff]
    %v681 = vld [vmem:[%s1 + $0x350] sm:$0xff]
    %v682 = vld [vmem:[%s1 + $0x358] sm:$0xff]
    %v683 = vld [vmem:[%s1 + $0x360] sm:$0xff]
    %v684 = vld [vmem:[%s1 + $0x368] sm:$0xff]
    %v685 = vld [vmem:[%s1 + $0x370] sm:$0xff]
    %v686 = vld [vmem:[%s1 + $0x378] sm:$0xff]
    %v687 = vld [vmem:[%s1 + $0x380] sm:$0xff]
    %v688 = vld [vmem:[%s1 + $0x388] sm:$0xff]
    %v689 = vld [vmem:[%s1 + $0x390] sm:$0xff]
    %v690 = vld [vmem:[%s1 + $0x398] sm:$0xff]
    %v691 = vld [vmem:[%s1 + $0x3a0] sm:$0xff]
    %v692 = vld [vmem:[%s1 + $0x3a8] sm:$0xff]
    %v693 = vld [vmem:[%s1 + $0x3b0] sm:$0xff]
    %v694 = vld [vmem:[%s1 + $0x3b8] sm:$0xff]
    %v695 = vld [vmem:[%s1 + $0x3c0] sm:$0xff]
    %v696 = vld [vmem:[%s1 + $0x3c8] sm:$0xff]
    %v697 = vld [vmem:[%s1 + $0x3d0] sm:$0xff]
    %v698 = vld [vmem:[%s1 + $0x3d8] sm:$0xff]
    %v699 = vld [vmem:[%s1 + $0x3e0] sm:$0xff]
    %v700 = vld [vmem:[%s1 + $0x3e8] sm:$0xff]
    %v701 = vld [vmem:[%s1 + $0x3f0] sm:$0xff]
    %v702 = vld [vmem:[%s1 + $0x3f8] sm:$0xff]
    %v703 = vld [vmem:[%s1 + $0x400] sm:$0xff]
    %v704 = vld [vmem:[%s1 + $0x408] sm:$0xff]
    %v705 = vld [vmem:[%s1 + $0x410] sm:$0xff]
    %v706 = vld [vmem:[%s1 + $0x418] sm:$0xff]
    %v707 = vld [vmem:[%s1 + $0x420] sm:$0xff]
    %v708 = vld [vmem:[%s1 + $0x428] sm:$0xff]
    %v709 = vld [vmem:[%s1 + $0x430] sm:$0xff]
    %v710 = vld [vmem:[%s1 + $0x438] sm:$0xff]
    %v711 = vld [vmem:[%s1 + $0x440] sm:$0xff]
    %v712 = vld [vmem:[%s1 + $0x448] sm:$0xff]
    %v713 = vld [vmem:[%s1 + $0x450] sm:$0xff]
    %v714 = vld [vmem:[%s1 + $0x458] sm:$0xff]
    %v715 = vld [vmem:[%s1 + $0x460] sm:$0xff]
    %v716 = vld [vmem:[%s1 + $0x468] sm:$0xff]
    %v717 = vld [vmem:[%s1 + $0x470] sm:$0xff]
    %v718 = vld [vmem:[%s1 + $0x478] sm:$0xff]
    %v719 = vld [vmem:[%s1 + $0x480] sm:$0xff]
    %v720 = vld [vmem:[%s1 + $0x488] sm:$0xff]
    %v721 = vld [vmem:[%s1 + $0x490] sm:$0xff]
    %v722 = vld [vmem:[%s1 + $0x498] sm:$0xff]
    %v723 = vld [vmem:[%s1 + $0x4a0] sm:$0xff]
    %v724 = vld [vmem:[%s1 + $0x4a8] sm:$0xff]
    %v725 = vld [vmem:[%s1 + $0x4b0] sm:$0xff]
    %v726 = vld [vmem:[%s1 + $0x4b8] sm:$0xff]
    %v727 = vld [vmem:[%s1 + $0x4c0] sm:$0xff]
    %v728 = vld [vmem:[%s1 + $0x4c8] sm:$0xff]
    %v729 = vld [vmem:[%s1 + $0x4d0] sm:$0xff]
    %v730 = vld [vmem:[%s1 + $0x4d8] sm:$0xff]
    %v731 = vld [vmem:[%s1 + $0x4e0] sm:$0xff]
    %v732 = vld [vmem:[%s1 + $0x4e8] sm:$0xff]
    %v733 = vld [vmem:[%s1 + $0x4f0] sm:$0xff]
    %v734 = vld [vmem:[%s1 + $0x4f8] sm:$0xff]
    %v735 = vld [vmem:[%s1 + $0x500] sm:$0xff]
    %v736 = vld [vmem:[%s1 + $0x508] sm:$0xff]
    %v737 = vld [vmem:[%s1 + $0x510] sm:$0xff]
    %v738 = vld [vmem:[%s1 + $0x518] sm:$0xff]
    %v739 = vld [vmem:[%s1 + $0x520] sm:$0xf]
    %v740 = vld [vmem:[%s1 + $0x528] sm:$0xf]
    %v741 = vld [vmem:[%s2] sm:$0x3]
    %v743 = vlaneseq
    %v744 = vshrl.u32 %v743, 7
    %v745 = vsub.s32 0, %v744
    %v746 = vrot.slane %v741, %v745
    %v747 = vlaneseq
    %v748 = vshrl.u32 %v747, 7
    %v749 = vsub.s32 1, %v748
    %v750 = vrot.slane %v741, %v749
    %vm753 = vcmask 162816
    %v754 = vsel %vm753, %v515, 0
    %v756 = vsel %vm753, %v516, 0
    %v758 = vsel %vm753, %v517, 0
    %v760 = vsel %vm753, %v518, 0
    %v762 = vsel %vm753, %v519, 0
    %v764 = vsel %vm753, %v520, 0
    %v766 = vsel %vm753, %v521, 0
    %v768 = vsel %vm753, %v522, 0
    %v770 = vsel %vm753, %v523, 0
    %v772 = vsel %vm753, %v524, 0
    %v775 = vsel %vm429, %v739, 0
    %v778 = vsel %vm429, %v740, 0
    %780 = vmatprep.subr.mxu0 %v576
    %781 = vmatpush1.msra.mxu0 %v575
    %782 = vmatprep.subr.mxu0 %v578
    %783 = vmatpush1.msra.mxu0 %v577
    %784 = vmatprep.subr.mxu0 %v580
    %785 = vmatpush1.msra.mxu0 %v579
    %786 = vmatprep.subr.mxu0 %v582
    %787 = vmatpush1.msra.mxu0 %v581
    %788 = vmatprep.subr.mxu0 %v584
    %789 = vmatpush1.msra.mxu0 %v583
    %790 = vmatprep.subr.mxu0 %v586
    %791 = vmatpush1.msra.mxu0 %v585
    %792 = vmatprep.subr.mxu0 %v588
    %793 = vmatpush1.msra.mxu0 %v587
    %794 = vmatprep.subr.mxu0 %v590
    %795 = vmatpush1.msra.mxu0 %v589
    %796 = vmatprep.subr.mxu0 %v592
    %797 = vmatpush1.msra.mxu0 %v591
    %798 = vmatprep.subr.mxu0 %v594
    %799 = vmatpush1.msra.mxu0 %v593
    %800 = vmatprep.subr.mxu0 %v596
    %801 = vmatpush1.msra.mxu0 %v595
    %802 = vmatprep.subr.mxu0 %v598
    %803 = vmatpush1.msra.mxu0 %v597
    %804 = vmatprep.subr.mxu0 %v600
    %805 = vmatpush1.msra.mxu0 %v599
    %806 = vmatprep.subr.mxu0 %v602
    %807 = vmatpush1.msra.mxu0 %v601
    %808 = vmatprep.subr.mxu0 %v604
    %809 = vmatpush1.msra.mxu0 %v603
    %810 = vmatprep.subr.mxu0 %v606
    %811 = vmatpush1.msra.mxu0 %v605
    %812 = vmatprep.subr.mxu0 %v608
    %813 = vmatpush1.msra.mxu0 %v607
    %814 = vmatprep.subr.mxu0 %v610
    %815 = vmatpush1.msra.mxu0 %v609
    %816 = vmatprep.subr.mxu0 %v612
    %817 = vmatpush1.msra.mxu0 %v611
    %818 = vmatprep.subr.mxu0 %v614
    %819 = vmatpush1.msra.mxu0 %v613
    %820 = vmatprep.subr.mxu0 %v616
    %821 = vmatpush1.msra.mxu0 %v615
    %822 = vmatprep.subr.mxu0 %v618
    %823 = vmatpush1.msra.mxu0 %v617
    %824 = vmatprep.subr.mxu0 %v620
    %825 = vmatpush1.msra.mxu0 %v619
    %826 = vmatprep.subr.mxu0 %v622
    %827 = vmatpush1.msra.mxu0 %v621
    %828 = vmatprep.subr.mxu0 %v624
    %829 = vmatpush1.msra.mxu0 %v623
    %830 = vmatprep.subr.mxu0 %v626
    %831 = vmatpush1.msra.mxu0 %v625
    %832 = vmatprep.subr.mxu0 %v628
    %833 = vmatpush1.msra.mxu0 %v627
    %834 = vmatprep.subr.mxu0 %v630
    %835 = vmatpush1.msra.mxu0 %v629
    %836 = vmatprep.subr.mxu0 %v632
    %837 = vmatpush1.msra.mxu0 %v631
    %838 = vmatprep.subr.mxu0 %v634
    %839 = vmatpush1.msra.mxu0 %v633
    %840 = vmatprep.subr.mxu0 %v636
    %841 = vmatpush1.msra.mxu0 %v635
    %842 = vmatprep.subr.mxu0 %v638
    %843 = vmatpush1.msra.mxu0 %v637
    %844 = vmatprep.mubr.f32.mxu0 %v535
    %845 = vmatmul.mubr.f32.gmra.mrb[0].mxu0 %v33
    %v846 = vpop.f32.mrb[0].mxu0
    %v847 = vadd.f32 %v746, %v846
    %v848 = vpop.f32.mrb[0].mxu0
    %v849 = vadd.f32 %v750, %v848
    %850 = vmatprep.mubr.f32.mxu0 %v536
    %851 = vmatmul.mubr.f32.gmra.mrb[0].mxu0 %v35
    %v852 = vpop.f32.mrb[0].mxu0
    %v853 = vadd.f32 %v746, %v852
    %v854 = vpop.f32.mrb[0].mxu0
    %v855 = vadd.f32 %v750, %v854
    %856 = vmatprep.mubr.f32.mxu0 %v537
    %857 = vmatmul.mubr.f32.gmra.mrb[0].mxu0 %v37
    %v858 = vpop.f32.mrb[0].mxu0
    %v859 = vadd.f32 %v746, %v858
    %v860 = vpop.f32.mrb[0].mxu0
    %v861 = vadd.f32 %v750, %v860
    %862 = vmatprep.mubr.f32.mxu0 %v538
    %863 = vmatmul.mubr.f32.gmra.mrb[0].mxu0 %v39
    %v864 = vpop.f32.mrb[0].mxu0
    %v865 = vadd.f32 %v746, %v864
    %v866 = vpop.f32.mrb[0].mxu0
    %v867 = vadd.f32 %v750, %v866
    %868 = vmatprep.mubr.f32.mxu0 %v539
    %869 = vmatmul.mubr.f32.gmra.mrb[0].mxu0 %v41
    %v870 = vpop.f32.mrb[0].mxu0
    %v871 = vadd.f32 %v746, %v870
    %v872 = vpop.f32.mrb[0].mxu0
    %v873 = vadd.f32 %v750, %v872
    %874 = vmatprep.mubr.f32.mxu0 %v540
    %875 = vmatmul.mubr.f32.gmra.mrb[0].mxu0 %v45
    %v876 = vpop.f32.mrb[0].mxu0
    %v877 = vadd.f32 %v746, %v876
    %v878 = vpop.f32.mrb[0].mxu0
    %v879 = vadd.f32 %v750, %v878
    %880 = vmatprep.mubr.f32.mxu0 %v541
    %881 = vmatmul.mubr.f32.gmra.mrb[0].mxu0 %v47
    %v882 = vpop.f32.mrb[0].mxu0
    %v883 = vadd.f32 %v746, %v882
    %v884 = vpop.f32.mrb[0].mxu0
    %v885 = vadd.f32 %v750, %v884
    %886 = vmatprep.mubr.f32.mxu0 %v542
    %887 = vmatmul.mubr.f32.gmra.mrb[0].mxu0 %v49
    %v888 = vpop.f32.mrb[0].mxu0
    %v889 = vadd.f32 %v746, %v888
    %v890 = vpop.f32.mrb[0].mxu0
    %v891 = vadd.f32 %v750, %v890
    %892 = vmatprep.mubr.f32.mxu0 %v543
    %893 = vmatmul.mubr.f32.gmra.mrb[0].mxu0 %v51
    %v894 = vpop.f32.mrb[0].mxu0
    %v895 = vadd.f32 %v746, %v894
    %v896 = vpop.f32.mrb[0].mxu0
    %v897 = vadd.f32 %v750, %v896
    %898 = vmatprep.mubr.f32.mxu0 %v544
    %899 = vmatmul.mubr.f32.gmra.mrb[0].mxu0 %v53
    %v900 = vpop.f32.mrb[0].mxu0
    %v901 = vadd.f32 %v746, %v900
    %v902 = vpop.f32.mrb[0].mxu0
    %v903 = vadd.f32 %v750, %v902
    %904 = vdwg.mxu0
    %905 = vmatprep.subr.mxu0 %v640
    %906 = vmatpush1.msra.mxu0 %v639
    %907 = vmatprep.subr.mxu0 %v642
    %908 = vmatpush1.msra.mxu0 %v641
    %909 = vmatprep.subr.mxu0 %v644
    %910 = vmatpush1.msra.mxu0 %v643
    %911 = vmatprep.subr.mxu0 %v646
    %912 = vmatpush1.msra.mxu0 %v645
    %913 = vmatprep.subr.mxu0 %v648
    %914 = vmatpush1.msra.mxu0 %v647
    %915 = vmatprep.subr.mxu0 %v650
    %916 = vmatpush1.msra.mxu0 %v649
    %917 = vmatprep.subr.mxu0 %v652
    %918 = vmatpush1.msra.mxu0 %v651
    %919 = vmatprep.subr.mxu0 %v654
    %920 = vmatpush1.msra.mxu0 %v653
    %921 = vmatprep.subr.mxu0 %v656
    %922 = vmatpush1.msra.mxu0 %v655
    %923 = vmatprep.subr.mxu0 %v658
    %924 = vmatpush1.msra.mxu0 %v657
    %925 = vmatprep.subr.mxu0 %v660
    %926 = vmatpush1.msra.mxu0 %v659
    %927 = vmatprep.subr.mxu0 %v662
    %928 = vmatpush1.msra.mxu0 %v661
    %929 = vmatprep.subr.mxu0 %v664
    %930 = vmatpush1.msra.mxu0 %v663
    %931 = vmatprep.subr.mxu0 %v666
    %932 = vmatpush1.msra.mxu0 %v665
    %933 = vmatprep.subr.mxu0 %v668
    %934 = vmatpush1.msra.mxu0 %v667
    %935 = vmatprep.subr.mxu0 %v670
    %936 = vmatpush1.msra.mxu0 %v669
    %937 = vmatprep.subr.mxu0 %v672
    %938 = vmatpush1.msra.mxu0 %v671
    %939 = vmatprep.subr.mxu0 %v674
    %940 = vmatpush1.msra.mxu0 %v673
    %941 = vmatprep.subr.mxu0 %v676
    %942 = vmatpush1.msra.mxu0 %v675
    %943 = vmatprep.subr.mxu0 %v678
    %944 = vmatpush1.msra.mxu0 %v677
    %945 = vmatprep.subr.mxu0 %v680
    %946 = vmatpush1.msra.mxu0 %v679
    %947 = vmatprep.subr.mxu0 %v682
    %948 = vmatpush1.msra.mxu0 %v681
    %949 = vmatprep.subr.mxu0 %v684
    %950 = vmatpush1.msra.mxu0 %v683
    %951 = vmatprep.subr.mxu0 %v686
    %952 = vmatpush1.msra.mxu0 %v685
    %953 = vmatprep.subr.mxu0 %v688
    %954 = vmatpush1.msra.mxu0 %v687
    %955 = vmatprep.subr.mxu0 %v690
    %956 = vmatpush1.msra.mxu0 %v689
    %957 = vmatprep.subr.mxu0 %v692
    %958 = vmatpush1.msra.mxu0 %v691
    %959 = vmatprep.subr.mxu0 %v694
    %960 = vmatpush1.msra.mxu0 %v693
    %961 = vmatprep.subr.mxu0 %v696
    %962 = vmatpush1.msra.mxu0 %v695
    %963 = vmatprep.subr.mxu0 %v698
    %964 = vmatpush1.msra.mxu0 %v697
    %965 = vmatprep.subr.mxu0 %v700
    %966 = vmatpush1.msra.mxu0 %v699
    %967 = vmatprep.subr.mxu0 %v702
    %968 = vmatpush1.msra.mxu0 %v701
    %969 = vmatprep.mubr.f32.mxu0 %v555
    %970 = vmatmul.mubr.f32.gmra.mrb[0].mxu0 %v545
    %v971 = vpop.f32.mrb[0].mxu0
    %v972 = vadd.f32 %v847, %v971
    %v973 = vpop.f32.mrb[0].mxu0
    %v974 = vadd.f32 %v849, %v973
    %975 = vmatprep.mubr.f32.mxu0 %v556
    %976 = vmatmul.mubr.f32.gmra.mrb[0].mxu0 %v546
    %v977 = vpop.f32.mrb[0].mxu0
    %v978 = vadd.f32 %v853, %v977
    %v979 = vpop.f32.mrb[0].mxu0
    %v980 = vadd.f32 %v855, %v979
    %981 = vmatprep.mubr.f32.mxu0 %v557
    %982 = vmatmul.mubr.f32.gmra.mrb[0].mxu0 %v547
    %v983 = vpop.f32.mrb[0].mxu0
    %v984 = vadd.f32 %v859, %v983
    %v985 = vpop.f32.mrb[0].mxu0
    %v986 = vadd.f32 %v861, %v985
    %987 = vmatprep.mubr.f32.mxu0 %v558
    %988 = vmatmul.mubr.f32.gmra.mrb[0].mxu0 %v548
    %v989 = vpop.f32.mrb[0].mxu0
    %v990 = vadd.f32 %v865, %v989
    %v991 = vpop.f32.mrb[0].mxu0
    %v992 = vadd.f32 %v867, %v991
    %993 = vmatprep.mubr.f32.mxu0 %v559
    %994 = vmatmul.mubr.f32.gmra.mrb[0].mxu0 %v549
    %v995 = vpop.f32.mrb[0].mxu0
    %v996 = vadd.f32 %v871, %v995
    %v997 = vpop.f32.mrb[0].mxu0
    %v998 = vadd.f32 %v873, %v997
    %999 = vmatprep.mubr.f32.mxu0 %v560
    %1000 = vmatmul.mubr.f32.gmra.mrb[0].mxu0 %v550
    %v1001 = vpop.f32.mrb[0].mxu0
    %v1002 = vadd.f32 %v877, %v1001
    %v1003 = vpop.f32.mrb[0].mxu0
    %v1004 = vadd.f32 %v879, %v1003
    %1005 = vmatprep.mubr.f32.mxu0 %v561
    %1006 = vmatmul.mubr.f32.gmra.mrb[0].mxu0 %v551
    %v1007 = vpop.f32.mrb[0].mxu0
    %v1008 = vadd.f32 %v883, %v1007
    %v1009 = vpop.f32.mrb[0].mxu0
    %v1010 = vadd.f32 %v885, %v1009
    %1011 = vmatprep.mubr.f32.mxu0 %v562
    %1012 = vmatmul.mubr.f32.gmra.mrb[0].mxu0 %v552
    %v1013 = vpop.f32.mrb[0].mxu0
    %v1014 = vadd.f32 %v889, %v1013
    %v1015 = vpop.f32.mrb[0].mxu0
    %v1016 = vadd.f32 %v891, %v1015
    %1017 = vmatprep.mubr.f32.mxu0 %v563
    %1018 = vmatmul.mubr.f32.gmra.mrb[0].mxu0 %v553
    %v1019 = vpop.f32.mrb[0].mxu0
    %v1020 = vadd.f32 %v895, %v1019
    %v1021 = vpop.f32.mrb[0].mxu0
    %v1022 = vadd.f32 %v897, %v1021
    %1023 = vmatprep.mubr.f32.mxu0 %v564
    %1024 = vmatmul.mubr.f32.gmra.mrb[0].mxu0 %v554
    %v1025 = vpop.f32.mrb[0].mxu0
    %v1026 = vadd.f32 %v901, %v1025
    %v1027 = vpop.f32.mrb[0].mxu0
    %v1028 = vadd.f32 %v903, %v1027
    %1029 = vdwg.mxu0
    %1030 = vmatprep.subr.mxu0 %v704
    %1031 = vmatpush1.msra.mxu0 %v703
    %1032 = vmatprep.subr.mxu0 %v706
    %1033 = vmatpush1.msra.mxu0 %v705
    %1034 = vmatprep.subr.mxu0 %v708
    %1035 = vmatpush1.msra.mxu0 %v707
    %1036 = vmatprep.subr.mxu0 %v710
    %1037 = vmatpush1.msra.mxu0 %v709
    %1038 = vmatprep.subr.mxu0 %v712
    %1039 = vmatpush1.msra.mxu0 %v711
    %1040 = vmatprep.subr.mxu0 %v714
    %1041 = vmatpush1.msra.mxu0 %v713
    %1042 = vmatprep.subr.mxu0 %v716
    %1043 = vmatpush1.msra.mxu0 %v715
    %1044 = vmatprep.subr.mxu0 %v718
    %1045 = vmatpush1.msra.mxu0 %v717
    %1046 = vmatprep.subr.mxu0 %v720
    %1047 = vmatpush1.msra.mxu0 %v719
    %1048 = vmatprep.subr.mxu0 %v722
    %1049 = vmatpush1.msra.mxu0 %v721
    %1050 = vmatprep.subr.mxu0 %v724
    %1051 = vmatpush1.msra.mxu0 %v723
    %1052 = vmatprep.subr.mxu0 %v726
    %1053 = vmatpush1.msra.mxu0 %v725
    %1054 = vmatprep.subr.mxu0 %v728
    %1055 = vmatpush1.msra.mxu0 %v727
    %1056 = vmatprep.subr.mxu0 %v730
    %1057 = vmatpush1.msra.mxu0 %v729
    %1058 = vmatprep.subr.mxu0 %v732
    %1059 = vmatpush1.msra.mxu0 %v731
    %1060 = vmatprep.subr.mxu0 %v734
    %1061 = vmatpush1.msra.mxu0 %v733
    %1062 = vmatprep.subr.mxu0 %v736
    %1063 = vmatpush1.msra.mxu0 %v735
    %1064 = vmatprep.subr.mxu0 %v738
    %1065 = vmatpush1.msra.mxu0 %v737
    %1066 = vmatprep.subr.mxu0 %v778
    %1067 = vmatpush1.msra.mxu0 %v775
    %1068 = vmatprep.subr.mxu0 0.0
    %1069 = vmatpush1.msra.mxu0 0.0
    %1070 = vmatprep.subr.mxu0 0.0
    %1071 = vmatpush1.msra.mxu0 0.0
    %1072 = vmatprep.subr.mxu0 0.0
    %1073 = vmatpush1.msra.mxu0 0.0
    %1074 = vmatprep.subr.mxu0 0.0
    %1075 = vmatpush1.msra.mxu0 0.0
    %1076 = vmatprep.subr.mxu0 0.0
    %1077 = vmatpush1.msra.mxu0 0.0
    %1078 = vmatprep.subr.mxu0 0.0
    %1079 = vmatpush1.msra.mxu0 0.0
    %1080 = vmatprep.subr.mxu0 0.0
    %1081 = vmatpush1.msra.mxu0 0.0
    %1082 = vmatprep.subr.mxu0 0.0
    %1083 = vmatpush1.msra.mxu0 0.0
    %1084 = vmatprep.subr.mxu0 0.0
    %1085 = vmatpush1.msra.mxu0 0.0
    %1086 = vmatprep.subr.mxu0 0.0
    %1087 = vmatpush1.msra.mxu0 0.0
    %1088 = vmatprep.subr.mxu0 0.0
    %1089 = vmatpush1.msra.mxu0 0.0
    %1090 = vmatprep.subr.mxu0 0.0
    %1091 = vmatpush1.msra.mxu0 0.0
    %1092 = vmatprep.subr.mxu0 0.0
    %1093 = vmatpush1.msra.mxu0 0.0
    %1094 = vmatprep.mubr.f32.mxu0 %v754
    %1095 = vmatmul.mubr.f32.gmra.mrb[0].mxu0 %v565
    %v1096 = vpop.f32.mrb[0].mxu0
    %v1097 = vadd.f32 %v972, %v1096
    %v1098 = vpop.f32.mrb[0].mxu0
    %v1099 = vadd.f32 %v974, %v1098
    %1100 = vmatprep.mubr.f32.mxu0 %v756
    %1101 = vmatmul.mubr.f32.gmra.mrb[0].mxu0 %v566
    %v1102 = vpop.f32.mrb[0].mxu0
    %v1103 = vadd.f32 %v978, %v1102
    %v1104 = vpop.f32.mrb[0].mxu0
    %v1105 = vadd.f32 %v980, %v1104
    %1106 = vmatprep.mubr.f32.mxu0 %v758
    %1107 = vmatmul.mubr.f32.gmra.mrb[0].mxu0 %v567
    %v1108 = vpop.f32.mrb[0].mxu0
    %v1109 = vadd.f32 %v984, %v1108
    %v1110 = vpop.f32.mrb[0].mxu0
    %v1111 = vadd.f32 %v986, %v1110
    %1112 = vmatprep.mubr.f32.mxu0 %v760
    %1113 = vmatmul.mubr.f32.gmra.mrb[0].mxu0 %v568
    %v1114 = vpop.f32.mrb[0].mxu0
    %v1115 = vadd.f32 %v990, %v1114
    %v1116 = vpop.f32.mrb[0].mxu0
    %v1117 = vadd.f32 %v992, %v1116
    %1118 = vmatprep.mubr.f32.mxu0 %v762
    %1119 = vmatmul.mubr.f32.gmra.mrb[0].mxu0 %v569
    %v1120 = vpop.f32.mrb[0].mxu0
    %v1121 = vadd.f32 %v996, %v1120
    %v1122 = vpop.f32.mrb[0].mxu0
    %v1123 = vadd.f32 %v998, %v1122
    %1124 = vmatprep.mubr.f32.mxu0 %v764
    %1125 = vmatmul.mubr.f32.gmra.mrb[0].mxu0 %v570
    %v1126 = vpop.f32.mrb[0].mxu0
    %v1127 = vadd.f32 %v1002, %v1126
    %v1128 = vpop.f32.mrb[0].mxu0
    %v1129 = vadd.f32 %v1004, %v1128
    %1130 = vmatprep.mubr.f32.mxu0 %v766
    %1131 = vmatmul.mubr.f32.gmra.mrb[0].mxu0 %v571
    %v1132 = vpop.f32.mrb[0].mxu0
    %v1133 = vadd.f32 %v1008, %v1132
    %v1134 = vpop.f32.mrb[0].mxu0
    %v1135 = vadd.f32 %v1010, %v1134
    %1136 = vmatprep.mubr.f32.mxu0 %v768
    %1137 = vmatmul.mubr.f32.gmra.mrb[0].mxu0 %v572
    %v1138 = vpop.f32.mrb[0].mxu0
    %v1139 = vadd.f32 %v1014, %v1138
    %v1140 = vpop.f32.mrb[0].mxu0
    %v1141 = vadd.f32 %v1016, %v1140
    %1142 = vmatprep.mubr.f32.mxu0 %v770
    %1143 = vmatmul.mubr.f32.gmra.mrb[0].mxu0 %v573
    %v1144 = vpop.f32.mrb[0].mxu0
    %v1145 = vadd.f32 %v1020, %v1144
    %v1146 = vpop.f32.mrb[0].mxu0
    %v1147 = vadd.f32 %v1022, %v1146
    %1148 = vmatprep.mubr.f32.mxu0 %v772
    %1149 = vmatmul.mubr.f32.gmra.mrb[0].mxu0 %v574
    %v1150 = vpop.f32.mrb[0].mxu0
    %v1151 = vadd.f32 %v1026, %v1150
    %v1152 = vpop.f32.mrb[0].mxu0
    %v1153 = vadd.f32 %v1028, %v1152
    %1154 = vdwg.mxu0
    %v1155 = vmax.f32 %v1097, 0.0
    %v1156 = vmax.f32 %v1099, 0.0
    %v1157 = vmax.f32 %v1103, 0.0
    %v1158 = vmax.f32 %v1105, 0.0
    %v1159 = vmax.f32 %v1109, 0.0
    %v1160 = vmax.f32 %v1111, 0.0
    %v1161 = vmax.f32 %v1115, 0.0
    %v1162 = vmax.f32 %v1117, 0.0
    %v1163 = vmax.f32 %v1121, 0.0
    %v1164 = vmax.f32 %v1123, 0.0
    %v1165 = vmax.f32 %v1127, 0.0
    %v1166 = vmax.f32 %v1129, 0.0
    %v1167 = vmax.f32 %v1133, 0.0
    %v1168 = vmax.f32 %v1135, 0.0
    %v1169 = vmax.f32 %v1139, 0.0
    %v1170 = vmax.f32 %v1141, 0.0
    %v1171 = vmax.f32 %v1145, 0.0
    %v1172 = vmax.f32 %v1147, 0.0
    %v1173 = vmax.f32 %v1151, 0.0
    %v1174 = vmax.f32 %v1153, 0.0
    %v1175 = vrot.slane %v1155, 4
    %v1176 = vmax.f32 %v1155, %v1175
    %v1177 = vrot.slane %v1176, 2
    %v1178 = vmax.f32 %v1176, %v1177
    %v1179 = vrot.slane %v1178, 1
    %v1180 = vmax.f32 %v1178, %v1179
    %vm1181 = vcmask 916480
    %v1182 = vsel %vm1181, %v1156, -inf
    %v1183 = vrot.slane %v1182, 4
    %v1184 = vmax.f32 %v1182, %v1183
    %v1185 = vrot.slane %v1184, 2
    %v1186 = vmax.f32 %v1184, %v1185
    %v1187 = vrot.slane %v1186, 1
    %v1188 = vmax.f32 %v1186, %v1187
    %v1189 = vrot.slane %v1157, 4
    %v1190 = vmax.f32 %v1157, %v1189
    %v1191 = vrot.slane %v1190, 2
    %v1192 = vmax.f32 %v1190, %v1191
    %v1193 = vrot.slane %v1192, 1
    %v1194 = vmax.f32 %v1192, %v1193
    %v1195 = vsel %vm1181, %v1158, -inf
    %v1196 = vrot.slane %v1195, 4
    %v1197 = vmax.f32 %v1195, %v1196
    %v1198 = vrot.slane %v1197, 2
    %v1199 = vmax.f32 %v1197, %v1198
    %v1200 = vrot.slane %v1199, 1
    %v1201 = vmax.f32 %v1199, %v1200
    %v1202 = vrot.slane %v1159, 4
    %v1203 = vmax.f32 %v1159, %v1202
    %v1204 = vrot.slane %v1203, 2
    %v1205 = vmax.f32 %v1203, %v1204
    %v1206 = vrot.slane %v1205, 1
    %v1207 = vmax.f32 %v1205, %v1206
    %v1208 = vsel %vm1181, %v1160, -inf
    %v1209 = vrot.slane %v1208, 4
    %v1210 = vmax.f32 %v1208, %v1209
    %v1211 = vrot.slane %v1210, 2
    %v1212 = vmax.f32 %v1210, %v1211
    %v1213 = vrot.slane %v1212, 1
    %v1214 = vmax.f32 %v1212, %v1213
    %v1215 = vrot.slane %v1161, 4
    %v1216 = vmax.f32 %v1161, %v1215
    %v1217 = vrot.slane %v1216, 2
    %v1218 = vmax.f32 %v1216, %v1217
    %v1219 = vrot.slane %v1218, 1
    %v1220 = vmax.f32 %v1218, %v1219
    %v1221 = vsel %vm1181, %v1162, -inf
    %v1222 = vrot.slane %v1221, 4
    %v1223 = vmax.f32 %v1221, %v1222
    %v1224 = vrot.slane %v1223, 2
    %v1225 = vmax.f32 %v1223, %v1224
    %v1226 = vrot.slane %v1225, 1
    %v1227 = vmax.f32 %v1225, %v1226
    %v1228 = vrot.slane %v1163, 4
    %v1229 = vmax.f32 %v1163, %v1228
    %v1230 = vrot.slane %v1229, 2
    %v1231 = vmax.f32 %v1229, %v1230
    %v1232 = vrot.slane %v1231, 1
    %v1233 = vmax.f32 %v1231, %v1232
    %v1234 = vsel %vm1181, %v1164, -inf
    %v1235 = vrot.slane %v1234, 4
    %v1236 = vmax.f32 %v1234, %v1235
    %v1237 = vrot.slane %v1236, 2
    %v1238 = vmax.f32 %v1236, %v1237
    %v1239 = vrot.slane %v1238, 1
    %v1240 = vmax.f32 %v1238, %v1239
    %v1241 = vrot.slane %v1165, 4
    %v1242 = vmax.f32 %v1165, %v1241
    %v1243 = vrot.slane %v1242, 2
    %v1244 = vmax.f32 %v1242, %v1243
    %v1245 = vrot.slane %v1244, 1
    %v1246 = vmax.f32 %v1244, %v1245
    %v1247 = vsel %vm1181, %v1166, -inf
    %v1248 = vrot.slane %v1247, 4
    %v1249 = vmax.f32 %v1247, %v1248
    %v1250 = vrot.slane %v1249, 2
    %v1251 = vmax.f32 %v1249, %v1250
    %v1252 = vrot.slane %v1251, 1
    %v1253 = vmax.f32 %v1251, %v1252
    %v1254 = vrot.slane %v1167, 4
    %v1255 = vmax.f32 %v1167, %v1254
    %v1256 = vrot.slane %v1255, 2
    %v1257 = vmax.f32 %v1255, %v1256
    %v1258 = vrot.slane %v1257, 1
    %v1259 = vmax.f32 %v1257, %v1258
    %v1260 = vsel %vm1181, %v1168, -inf
    %v1261 = vrot.slane %v1260, 4
    %v1262 = vmax.f32 %v1260, %v1261
    %v1263 = vrot.slane %v1262, 2
    %v1264 = vmax.f32 %v1262, %v1263
    %v1265 = vrot.slane %v1264, 1
    %v1266 = vmax.f32 %v1264, %v1265
    %v1267 = vrot.slane %v1169, 4
    %v1268 = vmax.f32 %v1169, %v1267
    %v1269 = vrot.slane %v1268, 2
    %v1270 = vmax.f32 %v1268, %v1269
    %v1271 = vrot.slane %v1270, 1
    %v1272 = vmax.f32 %v1270, %v1271
    %v1273 = vsel %vm1181, %v1170, -inf
    %v1274 = vrot.slane %v1273, 4
    %v1275 = vmax.f32 %v1273, %v1274
    %v1276 = vrot.slane %v1275, 2
    %v1277 = vmax.f32 %v1275, %v1276
    %v1278 = vrot.slane %v1277, 1
    %v1279 = vmax.f32 %v1277, %v1278
    %v1280 = vrot.slane %v1171, 4
    %v1281 = vmax.f32 %v1171, %v1280
    %v1282 = vrot.slane %v1281, 2
    %v1283 = vmax.f32 %v1281, %v1282
    %v1284 = vrot.slane %v1283, 1
    %v1285 = vmax.f32 %v1283, %v1284
    %v1286 = vsel %vm1181, %v1172, -inf
    %v1287 = vrot.slane %v1286, 4
    %v1288 = vmax.f32 %v1286, %v1287
    %v1289 = vrot.slane %v1288, 2
    %v1290 = vmax.f32 %v1288, %v1289
    %v1291 = vrot.slane %v1290, 1
    %v1292 = vmax.f32 %v1290, %v1291
    %v1293 = vrot.slane %v1173, 4
    %v1294 = vmax.f32 %v1173, %v1293
    %v1295 = vrot.slane %v1294, 2
    %v1296 = vmax.f32 %v1294, %v1295
    %v1297 = vrot.slane %v1296, 1
    %v1298 = vmax.f32 %v1296, %v1297
    %v1299 = vsel %vm1181, %v1174, -inf
    %v1300 = vrot.slane %v1299, 4
    %v1301 = vmax.f32 %v1299, %v1300
    %v1302 = vrot.slane %v1301, 2
    %v1303 = vmax.f32 %v1301, %v1302
    %v1304 = vrot.slane %v1303, 1
    %v1305 = vmax.f32 %v1303, %v1304
    %1316 = vrot.lane.b32.xlu0 %v1180, 120
    %v1317 = vpop.permute.xlu0 %1316
    %1318 = vrot.lane.b32.xlu0 %v1194, 120
    %v1319 = vpop.permute.xlu0 %1318
    %1320 = vrot.lane.b32.xlu0 %v1207, 120
    %v1321 = vpop.permute.xlu0 %1320
    %1322 = vrot.lane.b32.xlu0 %v1220, 120
    %v1323 = vpop.permute.xlu0 %1322
    %1324 = vrot.lane.b32.xlu0 %v1233, 120
    %v1325 = vpop.permute.xlu0 %1324
    %1326 = vrot.lane.b32.xlu0 %v1246, 120
    %v1327 = vpop.permute.xlu0 %1326
    %1328 = vrot.lane.b32.xlu0 %v1259, 120
    %v1329 = vpop.permute.xlu0 %1328
    %1330 = vrot.lane.b32.xlu0 %v1272, 120
    %v1331 = vpop.permute.xlu0 %1330
    %1332 = vrot.lane.b32.xlu0 %v1285, 120
    %v1333 = vpop.permute.xlu0 %1332
    %1334 = vrot.lane.b32.xlu0 %v1298, 120
    %v1335 = vpop.permute.xlu0 %1334
    %1336 = vrot.lane.b32.xlu0 %v1180, 112
    %v1337 = vpop.permute.xlu0 %1336
    %1338 = vrot.lane.b32.xlu0 %v1194, 112
    %v1339 = vpop.permute.xlu0 %1338
    %1340 = vrot.lane.b32.xlu0 %v1207, 112
    %v1341 = vpop.permute.xlu0 %1340
    %1342 = vrot.lane.b32.xlu0 %v1220, 112
    %v1343 = vpop.permute.xlu0 %1342
    %1344 = vrot.lane.b32.xlu0 %v1233, 112
    %v1345 = vpop.permute.xlu0 %1344
    %1346 = vrot.lane.b32.xlu0 %v1246, 112
    %v1347 = vpop.permute.xlu0 %1346
    %1348 = vrot.lane.b32.xlu0 %v1259, 112
    %v1349 = vpop.permute.xlu0 %1348
    %1350 = vrot.lane.b32.xlu0 %v1272, 112
    %v1351 = vpop.permute.xlu0 %1350
    %1352 = vrot.lane.b32.xlu0 %v1285, 112
    %v1353 = vpop.permute.xlu0 %1352
    %1354 = vrot.lane.b32.xlu0 %v1298, 112
    %v1355 = vpop.permute.xlu0 %1354
    %1356 = vrot.lane.b32.xlu0 %v1180, 104
    %v1357 = vpop.permute.xlu0 %1356
    %1358 = vrot.lane.b32.xlu0 %v1194, 104
    %v1359 = vpop.permute.xlu0 %1358
    %1360 = vrot.lane.b32.xlu0 %v1207, 104
    %v1361 = vpop.permute.xlu0 %1360
    %1362 = vrot.lane.b32.xlu0 %v1220, 104
    %v1363 = vpop.permute.xlu0 %1362
    %1364 = vrot.lane.b32.xlu0 %v1233, 104
    %v1365 = vpop.permute.xlu0 %1364
    %1366 = vrot.lane.b32.xlu0 %v1246, 104
    %v1367 = vpop.permute.xlu0 %1366
    %1368 = vrot.lane.b32.xlu0 %v1259, 104
    %v1369 = vpop.permute.xlu0 %1368
    %1370 = vrot.lane.b32.xlu0 %v1272, 104
    %v1371 = vpop.permute.xlu0 %1370
    %1372 = vrot.lane.b32.xlu0 %v1285, 104
    %v1373 = vpop.permute.xlu0 %1372
    %1374 = vrot.lane.b32.xlu0 %v1298, 104
    %v1375 = vpop.permute.xlu0 %1374
    %1376 = vrot.lane.b32.xlu0 %v1180, 96
    %v1377 = vpop.permute.xlu0 %1376
    %1378 = vrot.lane.b32.xlu0 %v1194, 96
    %v1379 = vpop.permute.xlu0 %1378
    %1380 = vrot.lane.b32.xlu0 %v1207, 96
    %v1381 = vpop.permute.xlu0 %1380
    %1382 = vrot.lane.b32.xlu0 %v1220, 96
    %v1383 = vpop.permute.xlu0 %1382
    %1384 = vrot.lane.b32.xlu0 %v1233, 96
    %v1385 = vpop.permute.xlu0 %1384
    %1386 = vrot.lane.b32.xlu0 %v1246, 96
    %v1387 = vpop.permute.xlu0 %1386
    %1388 = vrot.lane.b32.xlu0 %v1259, 96
    %v1389 = vpop.permute.xlu0 %1388
    %1390 = vrot.lane.b32.xlu0 %v1272, 96
    %v1391 = vpop.permute.xlu0 %1390
    %1392 = vrot.lane.b32.xlu0 %v1285, 96
    %v1393 = vpop.permute.xlu0 %1392
    %1394 = vrot.lane.b32.xlu0 %v1298, 96
    %v1395 = vpop.permute.xlu0 %1394
    %1396 = vrot.lane.b32.xlu0 %v1180, 88
    %v1397 = vpop.permute.xlu0 %1396
    %1398 = vrot.lane.b32.xlu0 %v1194, 88
    %v1399 = vpop.permute.xlu0 %1398
    %1400 = vrot.lane.b32.xlu0 %v1207, 88
    %v1401 = vpop.permute.xlu0 %1400
    %1402 = vrot.lane.b32.xlu0 %v1220, 88
    %v1403 = vpop.permute.xlu0 %1402
    %1404 = vrot.lane.b32.xlu0 %v1233, 88
    %v1405 = vpop.permute.xlu0 %1404
    %1406 = vrot.lane.b32.xlu0 %v1246, 88
    %v1407 = vpop.permute.xlu0 %1406
    %1408 = vrot.lane.b32.xlu0 %v1259, 88
    %v1409 = vpop.permute.xlu0 %1408
    %1410 = vrot.lane.b32.xlu0 %v1272, 88
    %v1411 = vpop.permute.xlu0 %1410
    %1412 = vrot.lane.b32.xlu0 %v1285, 88
    %v1413 = vpop.permute.xlu0 %1412
    %1414 = vrot.lane.b32.xlu0 %v1298, 88
    %v1415 = vpop.permute.xlu0 %1414
    %1416 = vrot.lane.b32.xlu0 %v1180, 80
    %v1417 = vpop.permute.xlu0 %1416
    %1418 = vrot.lane.b32.xlu0 %v1194, 80
    %v1419 = vpop.permute.xlu0 %1418
    %1420 = vrot.lane.b32.xlu0 %v1207, 80
    %v1421 = vpop.permute.xlu0 %1420
    %1422 = vrot.lane.b32.xlu0 %v1220, 80
    %v1423 = vpop.permute.xlu0 %1422
    %1424 = vrot.lane.b32.xlu0 %v1233, 80
    %v1425 = vpop.permute.xlu0 %1424
    %1426 = vrot.lane.b32.xlu0 %v1246, 80
    %v1427 = vpop.permute.xlu0 %1426
    %1428 = vrot.lane.b32.xlu0 %v1259, 80
    %v1429 = vpop.permute.xlu0 %1428
    %1430 = vrot.lane.b32.xlu0 %v1272, 80
    %v1431 = vpop.permute.xlu0 %1430
    %1432 = vrot.lane.b32.xlu0 %v1285, 80
    %v1433 = vpop.permute.xlu0 %1432
    %1434 = vrot.lane.b32.xlu0 %v1298, 80
    %v1435 = vpop.permute.xlu0 %1434
    %1436 = vrot.lane.b32.xlu0 %v1180, 72
    %v1437 = vpop.permute.xlu0 %1436
    %1438 = vrot.lane.b32.xlu0 %v1194, 72
    %v1439 = vpop.permute.xlu0 %1438
    %1440 = vrot.lane.b32.xlu0 %v1207, 72
    %v1441 = vpop.permute.xlu0 %1440
    %1442 = vrot.lane.b32.xlu0 %v1220, 72
    %v1443 = vpop.permute.xlu0 %1442
    %1444 = vrot.lane.b32.xlu0 %v1233, 72
    %v1445 = vpop.permute.xlu0 %1444
    %1446 = vrot.lane.b32.xlu0 %v1246, 72
    %v1447 = vpop.permute.xlu0 %1446
    %1448 = vrot.lane.b32.xlu0 %v1259, 72
    %v1449 = vpop.permute.xlu0 %1448
    %1450 = vrot.lane.b32.xlu0 %v1272, 72
    %v1451 = vpop.permute.xlu0 %1450
    %1452 = vrot.lane.b32.xlu0 %v1285, 72
    %v1453 = vpop.permute.xlu0 %1452
    %1454 = vrot.lane.b32.xlu0 %v1298, 72
    %v1455 = vpop.permute.xlu0 %1454
    %1456 = vrot.lane.b32.xlu0 %v1180, 64
    %v1457 = vpop.permute.xlu0 %1456
    %1458 = vrot.lane.b32.xlu0 %v1194, 64
    %v1459 = vpop.permute.xlu0 %1458
    %1460 = vrot.lane.b32.xlu0 %v1207, 64
    %v1461 = vpop.permute.xlu0 %1460
    %1462 = vrot.lane.b32.xlu0 %v1220, 64
    %v1463 = vpop.permute.xlu0 %1462
    %1464 = vrot.lane.b32.xlu0 %v1233, 64
    %v1465 = vpop.permute.xlu0 %1464
    %1466 = vrot.lane.b32.xlu0 %v1246, 64
    %v1467 = vpop.permute.xlu0 %1466
    %1468 = vrot.lane.b32.xlu0 %v1259, 64
    %v1469 = vpop.permute.xlu0 %1468
    %1470 = vrot.lane.b32.xlu0 %v1272, 64
    %v1471 = vpop.permute.xlu0 %1470
    %1472 = vrot.lane.b32.xlu0 %v1285, 64
    %v1473 = vpop.permute.xlu0 %1472
    %1474 = vrot.lane.b32.xlu0 %v1298, 64
    %v1475 = vpop.permute.xlu0 %1474
    %1476 = vrot.lane.b32.xlu0 %v1180, 56
    %v1477 = vpop.permute.xlu0 %1476
    %1478 = vrot.lane.b32.xlu0 %v1194, 56
    %v1479 = vpop.permute.xlu0 %1478
    %1480 = vrot.lane.b32.xlu0 %v1207, 56
    %v1481 = vpop.permute.xlu0 %1480
    %1482 = vrot.lane.b32.xlu0 %v1220, 56
    %v1483 = vpop.permute.xlu0 %1482
    %1484 = vrot.lane.b32.xlu0 %v1233, 56
    %v1485 = vpop.permute.xlu0 %1484
    %1486 = vrot.lane.b32.xlu0 %v1246, 56
    %v1487 = vpop.permute.xlu0 %1486
    %1488 = vrot.lane.b32.xlu0 %v1259, 56
    %v1489 = vpop.permute.xlu0 %1488
    %1490 = vrot.lane.b32.xlu0 %v1272, 56
    %v1491 = vpop.permute.xlu0 %1490
    %1492 = vrot.lane.b32.xlu0 %v1285, 56
    %v1493 = vpop.permute.xlu0 %1492
    %1494 = vrot.lane.b32.xlu0 %v1298, 56
    %v1495 = vpop.permute.xlu0 %1494
    %1496 = vrot.lane.b32.xlu0 %v1180, 48
    %v1497 = vpop.permute.xlu0 %1496
    %1498 = vrot.lane.b32.xlu0 %v1194, 48
    %v1499 = vpop.permute.xlu0 %1498
    %1500 = vrot.lane.b32.xlu0 %v1207, 48
    %v1501 = vpop.permute.xlu0 %1500
    %1502 = vrot.lane.b32.xlu0 %v1220, 48
    %v1503 = vpop.permute.xlu0 %1502
    %1504 = vrot.lane.b32.xlu0 %v1233, 48
    %v1505 = vpop.permute.xlu0 %1504
    %1506 = vrot.lane.b32.xlu0 %v1246, 48
    %v1507 = vpop.permute.xlu0 %1506
    %1508 = vrot.lane.b32.xlu0 %v1259, 48
    %v1509 = vpop.permute.xlu0 %1508
    %1510 = vrot.lane.b32.xlu0 %v1272, 48
    %v1511 = vpop.permute.xlu0 %1510
    %1512 = vrot.lane.b32.xlu0 %v1285, 48
    %v1513 = vpop.permute.xlu0 %1512
    %1514 = vrot.lane.b32.xlu0 %v1298, 48
    %v1515 = vpop.permute.xlu0 %1514
    %1516 = vrot.lane.b32.xlu0 %v1180, 40
    %v1517 = vpop.permute.xlu0 %1516
    %1518 = vrot.lane.b32.xlu0 %v1194, 40
    %v1519 = vpop.permute.xlu0 %1518
    %1520 = vrot.lane.b32.xlu0 %v1207, 40
    %v1521 = vpop.permute.xlu0 %1520
    %1522 = vrot.lane.b32.xlu0 %v1220, 40
    %v1523 = vpop.permute.xlu0 %1522
    %1524 = vrot.lane.b32.xlu0 %v1233, 40
    %v1525 = vpop.permute.xlu0 %1524
    %1526 = vrot.lane.b32.xlu0 %v1246, 40
    %v1527 = vpop.permute.xlu0 %1526
    %1528 = vrot.lane.b32.xlu0 %v1259, 40
    %v1529 = vpop.permute.xlu0 %1528
    %1530 = vrot.lane.b32.xlu0 %v1272, 40
    %v1531 = vpop.permute.xlu0 %1530
    %1532 = vrot.lane.b32.xlu0 %v1285, 40
    %v1533 = vpop.permute.xlu0 %1532
    %1534 = vrot.lane.b32.xlu0 %v1298, 40
    %v1535 = vpop.permute.xlu0 %1534
    %1536 = vrot.lane.b32.xlu0 %v1180, 32
    %v1537 = vpop.permute.xlu0 %1536
    %1538 = vrot.lane.b32.xlu0 %v1194, 32
    %v1539 = vpop.permute.xlu0 %1538
    %1540 = vrot.lane.b32.xlu0 %v1207, 32
    %v1541 = vpop.permute.xlu0 %1540
    %1542 = vrot.lane.b32.xlu0 %v1220, 32
    %v1543 = vpop.permute.xlu0 %1542
    %1544 = vrot.lane.b32.xlu0 %v1233, 32
    %v1545 = vpop.permute.xlu0 %1544
    %1546 = vrot.lane.b32.xlu0 %v1246, 32
    %v1547 = vpop.permute.xlu0 %1546
    %1548 = vrot.lane.b32.xlu0 %v1259, 32
    %v1549 = vpop.permute.xlu0 %1548
    %1550 = vrot.lane.b32.xlu0 %v1272, 32
    %v1551 = vpop.permute.xlu0 %1550
    %1552 = vrot.lane.b32.xlu0 %v1285, 32
    %v1553 = vpop.permute.xlu0 %1552
    %1554 = vrot.lane.b32.xlu0 %v1298, 32
    %v1555 = vpop.permute.xlu0 %1554
    %1556 = vrot.lane.b32.xlu0 %v1180, 24
    %v1557 = vpop.permute.xlu0 %1556
    %1558 = vrot.lane.b32.xlu0 %v1194, 24
    %v1559 = vpop.permute.xlu0 %1558
    %1560 = vrot.lane.b32.xlu0 %v1207, 24
    %v1561 = vpop.permute.xlu0 %1560
    %1562 = vrot.lane.b32.xlu0 %v1220, 24
    %v1563 = vpop.permute.xlu0 %1562
    %1564 = vrot.lane.b32.xlu0 %v1233, 24
    %v1565 = vpop.permute.xlu0 %1564
    %1566 = vrot.lane.b32.xlu0 %v1246, 24
    %v1567 = vpop.permute.xlu0 %1566
    %1568 = vrot.lane.b32.xlu0 %v1259, 24
    %v1569 = vpop.permute.xlu0 %1568
    %1570 = vrot.lane.b32.xlu0 %v1272, 24
    %v1571 = vpop.permute.xlu0 %1570
    %1572 = vrot.lane.b32.xlu0 %v1285, 24
    %v1573 = vpop.permute.xlu0 %1572
    %1574 = vrot.lane.b32.xlu0 %v1298, 24
    %v1575 = vpop.permute.xlu0 %1574
    %1576 = vrot.lane.b32.xlu0 %v1180, 16
    %v1577 = vpop.permute.xlu0 %1576
    %1578 = vrot.lane.b32.xlu0 %v1194, 16
    %v1579 = vpop.permute.xlu0 %1578
    %1580 = vrot.lane.b32.xlu0 %v1207, 16
    %v1581 = vpop.permute.xlu0 %1580
    %1582 = vrot.lane.b32.xlu0 %v1220, 16
    %v1583 = vpop.permute.xlu0 %1582
    %1584 = vrot.lane.b32.xlu0 %v1233, 16
    %v1585 = vpop.permute.xlu0 %1584
    %1586 = vrot.lane.b32.xlu0 %v1246, 16
    %v1587 = vpop.permute.xlu0 %1586
    %1588 = vrot.lane.b32.xlu0 %v1259, 16
    %v1589 = vpop.permute.xlu0 %1588
    %1590 = vrot.lane.b32.xlu0 %v1272, 16
    %v1591 = vpop.permute.xlu0 %1590
    %1592 = vrot.lane.b32.xlu0 %v1285, 16
    %v1593 = vpop.permute.xlu0 %1592
    %1594 = vrot.lane.b32.xlu0 %v1298, 16
    %v1595 = vpop.permute.xlu0 %1594
    %1596 = vrot.lane.b32.xlu0 %v1180, 8
    %v1597 = vpop.permute.xlu0 %1596
    %1598 = vrot.lane.b32.xlu0 %v1194, 8
    %v1599 = vpop.permute.xlu0 %1598
    %1600 = vrot.lane.b32.xlu0 %v1207, 8
    %v1601 = vpop.permute.xlu0 %1600
    %1602 = vrot.lane.b32.xlu0 %v1220, 8
    %v1603 = vpop.permute.xlu0 %1602
    %1604 = vrot.lane.b32.xlu0 %v1233, 8
    %v1605 = vpop.permute.xlu0 %1604
    %1606 = vrot.lane.b32.xlu0 %v1246, 8
    %v1607 = vpop.permute.xlu0 %1606
    %1608 = vrot.lane.b32.xlu0 %v1259, 8
    %v1609 = vpop.permute.xlu0 %1608
    %1610 = vrot.lane.b32.xlu0 %v1272, 8
    %v1611 = vpop.permute.xlu0 %1610
    %1612 = vrot.lane.b32.xlu0 %v1285, 8
    %v1613 = vpop.permute.xlu0 %1612
    %1614 = vrot.lane.b32.xlu0 %v1298, 8
    %v1615 = vpop.permute.xlu0 %1614
    %1626 = vrot.lane.b32.xlu0 %v1188, 120
    %v1627 = vpop.permute.xlu0 %1626
    %1628 = vrot.lane.b32.xlu0 %v1201, 120
    %v1629 = vpop.permute.xlu0 %1628
    %1630 = vrot.lane.b32.xlu0 %v1214, 120
    %v1631 = vpop.permute.xlu0 %1630
    %1632 = vrot.lane.b32.xlu0 %v1227, 120
    %v1633 = vpop.permute.xlu0 %1632
    %1634 = vrot.lane.b32.xlu0 %v1240, 120
    %v1635 = vpop.permute.xlu0 %1634
    %1636 = vrot.lane.b32.xlu0 %v1253, 120
    %v1637 = vpop.permute.xlu0 %1636
    %1638 = vrot.lane.b32.xlu0 %v1266, 120
    %v1639 = vpop.permute.xlu0 %1638
    %1640 = vrot.lane.b32.xlu0 %v1279, 120
    %v1641 = vpop.permute.xlu0 %1640
    %1642 = vrot.lane.b32.xlu0 %v1292, 120
    %v1643 = vpop.permute.xlu0 %1642
    %1644 = vrot.lane.b32.xlu0 %v1305, 120
    %v1645 = vpop.permute.xlu0 %1644
    %1646 = vrot.lane.b32.xlu0 %v1188, 112
    %v1647 = vpop.permute.xlu0 %1646
    %1648 = vrot.lane.b32.xlu0 %v1201, 112
    %v1649 = vpop.permute.xlu0 %1648
    %1650 = vrot.lane.b32.xlu0 %v1214, 112
    %v1651 = vpop.permute.xlu0 %1650
    %1652 = vrot.lane.b32.xlu0 %v1227, 112
    %v1653 = vpop.permute.xlu0 %1652
    %1654 = vrot.lane.b32.xlu0 %v1240, 112
    %v1655 = vpop.permute.xlu0 %1654
    %1656 = vrot.lane.b32.xlu0 %v1253, 112
    %v1657 = vpop.permute.xlu0 %1656
    %1658 = vrot.lane.b32.xlu0 %v1266, 112
    %v1659 = vpop.permute.xlu0 %1658
    %1660 = vrot.lane.b32.xlu0 %v1279, 112
    %v1661 = vpop.permute.xlu0 %1660
    %1662 = vrot.lane.b32.xlu0 %v1292, 112
    %v1663 = vpop.permute.xlu0 %1662
    %1664 = vrot.lane.b32.xlu0 %v1305, 112
    %v1665 = vpop.permute.xlu0 %1664
    %1666 = vrot.lane.b32.xlu0 %v1188, 104
    %v1667 = vpop.permute.xlu0 %1666
    %1668 = vrot.lane.b32.xlu0 %v1201, 104
    %v1669 = vpop.permute.xlu0 %1668
    %1670 = vrot.lane.b32.xlu0 %v1214, 104
    %v1671 = vpop.permute.xlu0 %1670
    %1672 = vrot.lane.b32.xlu0 %v1227, 104
    %v1673 = vpop.permute.xlu0 %1672
    %1674 = vrot.lane.b32.xlu0 %v1240, 104
    %v1675 = vpop.permute.xlu0 %1674
    %1676 = vrot.lane.b32.xlu0 %v1253, 104
    %v1677 = vpop.permute.xlu0 %1676
    %1678 = vrot.lane.b32.xlu0 %v1266, 104
    %v1679 = vpop.permute.xlu0 %1678
    %1680 = vrot.lane.b32.xlu0 %v1279, 104
    %v1681 = vpop.permute.xlu0 %1680
    %1682 = vrot.lane.b32.xlu0 %v1292, 104
    %v1683 = vpop.permute.xlu0 %1682
    %1684 = vrot.lane.b32.xlu0 %v1305, 104
    %v1685 = vpop.permute.xlu0 %1684
    %1686 = vrot.lane.b32.xlu0 %v1188, 96
    %v1687 = vpop.permute.xlu0 %1686
    %1688 = vrot.lane.b32.xlu0 %v1201, 96
    %v1689 = vpop.permute.xlu0 %1688
    %1690 = vrot.lane.b32.xlu0 %v1214, 96
    %v1691 = vpop.permute.xlu0 %1690
    %1692 = vrot.lane.b32.xlu0 %v1227, 96
    %v1693 = vpop.permute.xlu0 %1692
    %1694 = vrot.lane.b32.xlu0 %v1240, 96
    %v1695 = vpop.permute.xlu0 %1694
    %1696 = vrot.lane.b32.xlu0 %v1253, 96
    %v1697 = vpop.permute.xlu0 %1696
    %1698 = vrot.lane.b32.xlu0 %v1266, 96
    %v1699 = vpop.permute.xlu0 %1698
    %1700 = vrot.lane.b32.xlu0 %v1279, 96
    %v1701 = vpop.permute.xlu0 %1700
    %1702 = vrot.lane.b32.xlu0 %v1292, 96
    %v1703 = vpop.permute.xlu0 %1702
    %1704 = vrot.lane.b32.xlu0 %v1305, 96
    %v1705 = vpop.permute.xlu0 %1704
    %1706 = vrot.lane.b32.xlu0 %v1188, 88
    %v1707 = vpop.permute.xlu0 %1706
    %1708 = vrot.lane.b32.xlu0 %v1201, 88
    %v1709 = vpop.permute.xlu0 %1708
    %1710 = vrot.lane.b32.xlu0 %v1214, 88
    %v1711 = vpop.permute.xlu0 %1710
    %1712 = vrot.lane.b32.xlu0 %v1227, 88
    %v1713 = vpop.permute.xlu0 %1712
    %1714 = vrot.lane.b32.xlu0 %v1240, 88
    %v1715 = vpop.permute.xlu0 %1714
    %1716 = vrot.lane.b32.xlu0 %v1253, 88
    %v1717 = vpop.permute.xlu0 %1716
    %1718 = vrot.lane.b32.xlu0 %v1266, 88
    %v1719 = vpop.permute.xlu0 %1718
    %1720 = vrot.lane.b32.xlu0 %v1279, 88
    %v1721 = vpop.permute.xlu0 %1720
    %1722 = vrot.lane.b32.xlu0 %v1292, 88
    %v1723 = vpop.permute.xlu0 %1722
    %1724 = vrot.lane.b32.xlu0 %v1305, 88
    %v1725 = vpop.permute.xlu0 %1724
    %1726 = vrot.lane.b32.xlu0 %v1188, 80
    %v1727 = vpop.permute.xlu0 %1726
    %1728 = vrot.lane.b32.xlu0 %v1201, 80
    %v1729 = vpop.permute.xlu0 %1728
    %1730 = vrot.lane.b32.xlu0 %v1214, 80
    %v1731 = vpop.permute.xlu0 %1730
    %1732 = vrot.lane.b32.xlu0 %v1227, 80
    %v1733 = vpop.permute.xlu0 %1732
    %1734 = vrot.lane.b32.xlu0 %v1240, 80
    %v1735 = vpop.permute.xlu0 %1734
    %1736 = vrot.lane.b32.xlu0 %v1253, 80
    %v1737 = vpop.permute.xlu0 %1736
    %1738 = vrot.lane.b32.xlu0 %v1266, 80
    %v1739 = vpop.permute.xlu0 %1738
    %1740 = vrot.lane.b32.xlu0 %v1279, 80
    %v1741 = vpop.permute.xlu0 %1740
    %1742 = vrot.lane.b32.xlu0 %v1292, 80
    %v1743 = vpop.permute.xlu0 %1742
    %1744 = vrot.lane.b32.xlu0 %v1305, 80
    %v1745 = vpop.permute.xlu0 %1744
    %1746 = vrot.lane.b32.xlu0 %v1188, 72
    %v1747 = vpop.permute.xlu0 %1746
    %1748 = vrot.lane.b32.xlu0 %v1201, 72
    %v1749 = vpop.permute.xlu0 %1748
    %1750 = vrot.lane.b32.xlu0 %v1214, 72
    %v1751 = vpop.permute.xlu0 %1750
    %1752 = vrot.lane.b32.xlu0 %v1227, 72
    %v1753 = vpop.permute.xlu0 %1752
    %1754 = vrot.lane.b32.xlu0 %v1240, 72
    %v1755 = vpop.permute.xlu0 %1754
    %1756 = vrot.lane.b32.xlu0 %v1253, 72
    %v1757 = vpop.permute.xlu0 %1756
    %1758 = vrot.lane.b32.xlu0 %v1266, 72
    %v1759 = vpop.permute.xlu0 %1758
    %1760 = vrot.lane.b32.xlu0 %v1279, 72
    %v1761 = vpop.permute.xlu0 %1760
    %1762 = vrot.lane.b32.xlu0 %v1292, 72
    %v1763 = vpop.permute.xlu0 %1762
    %1764 = vrot.lane.b32.xlu0 %v1305, 72
    %v1765 = vpop.permute.xlu0 %1764
    %1766 = vrot.lane.b32.xlu0 %v1188, 64
    %v1767 = vpop.permute.xlu0 %1766
    %1768 = vrot.lane.b32.xlu0 %v1201, 64
    %v1769 = vpop.permute.xlu0 %1768
    %1770 = vrot.lane.b32.xlu0 %v1214, 64
    %v1771 = vpop.permute.xlu0 %1770
    %1772 = vrot.lane.b32.xlu0 %v1227, 64
    %v1773 = vpop.permute.xlu0 %1772
    %1774 = vrot.lane.b32.xlu0 %v1240, 64
    %v1775 = vpop.permute.xlu0 %1774
    %1776 = vrot.lane.b32.xlu0 %v1253, 64
    %v1777 = vpop.permute.xlu0 %1776
    %1778 = vrot.lane.b32.xlu0 %v1266, 64
    %v1779 = vpop.permute.xlu0 %1778
    %1780 = vrot.lane.b32.xlu0 %v1279, 64
    %v1781 = vpop.permute.xlu0 %1780
    %1782 = vrot.lane.b32.xlu0 %v1292, 64
    %v1783 = vpop.permute.xlu0 %1782
    %1784 = vrot.lane.b32.xlu0 %v1305, 64
    %v1785 = vpop.permute.xlu0 %1784
    %1786 = vrot.lane.b32.xlu0 %v1188, 56
    %v1787 = vpop.permute.xlu0 %1786
    %1788 = vrot.lane.b32.xlu0 %v1201, 56
    %v1789 = vpop.permute.xlu0 %1788
    %1790 = vrot.lane.b32.xlu0 %v1214, 56
    %v1791 = vpop.permute.xlu0 %1790
    %1792 = vrot.lane.b32.xlu0 %v1227, 56
    %v1793 = vpop.permute.xlu0 %1792
    %1794 = vrot.lane.b32.xlu0 %v1240, 56
    %v1795 = vpop.permute.xlu0 %1794
    %1796 = vrot.lane.b32.xlu0 %v1253, 56
    %v1797 = vpop.permute.xlu0 %1796
    %1798 = vrot.lane.b32.xlu0 %v1266, 56
    %v1799 = vpop.permute.xlu0 %1798
    %1800 = vrot.lane.b32.xlu0 %v1279, 56
    %v1801 = vpop.permute.xlu0 %1800
    %1802 = vrot.lane.b32.xlu0 %v1292, 56
    %v1803 = vpop.permute.xlu0 %1802
    %1804 = vrot.lane.b32.xlu0 %v1305, 56
    %v1805 = vpop.permute.xlu0 %1804
    %1806 = vrot.lane.b32.xlu0 %v1188, 48
    %v1807 = vpop.permute.xlu0 %1806
    %1808 = vrot.lane.b32.xlu0 %v1201, 48
    %v1809 = vpop.permute.xlu0 %1808
    %1810 = vrot.lane.b32.xlu0 %v1214, 48
    %v1811 = vpop.permute.xlu0 %1810
    %1812 = vrot.lane.b32.xlu0 %v1227, 48
    %v1813 = vpop.permute.xlu0 %1812
    %1814 = vrot.lane.b32.xlu0 %v1240, 48
    %v1815 = vpop.permute.xlu0 %1814
    %1816 = vrot.lane.b32.xlu0 %v1253, 48
    %v1817 = vpop.permute.xlu0 %1816
    %1818 = vrot.lane.b32.xlu0 %v1266, 48
    %v1819 = vpop.permute.xlu0 %1818
    %1820 = vrot.lane.b32.xlu0 %v1279, 48
    %v1821 = vpop.permute.xlu0 %1820
    %1822 = vrot.lane.b32.xlu0 %v1292, 48
    %v1823 = vpop.permute.xlu0 %1822
    %1824 = vrot.lane.b32.xlu0 %v1305, 48
    %v1825 = vpop.permute.xlu0 %1824
    %1826 = vrot.lane.b32.xlu0 %v1188, 40
    %v1827 = vpop.permute.xlu0 %1826
    %1828 = vrot.lane.b32.xlu0 %v1201, 40
    %v1829 = vpop.permute.xlu0 %1828
    %1830 = vrot.lane.b32.xlu0 %v1214, 40
    %v1831 = vpop.permute.xlu0 %1830
    %1832 = vrot.lane.b32.xlu0 %v1227, 40
    %v1833 = vpop.permute.xlu0 %1832
    %1834 = vrot.lane.b32.xlu0 %v1240, 40
    %v1835 = vpop.permute.xlu0 %1834
    %1836 = vrot.lane.b32.xlu0 %v1253, 40
    %v1837 = vpop.permute.xlu0 %1836
    %1838 = vrot.lane.b32.xlu0 %v1266, 40
    %v1839 = vpop.permute.xlu0 %1838
    %1840 = vrot.lane.b32.xlu0 %v1279, 40
    %v1841 = vpop.permute.xlu0 %1840
    %1842 = vrot.lane.b32.xlu0 %v1292, 40
    %v1843 = vpop.permute.xlu0 %1842
    %1844 = vrot.lane.b32.xlu0 %v1305, 40
    %v1845 = vpop.permute.xlu0 %1844
    %1846 = vrot.lane.b32.xlu0 %v1188, 32
    %v1847 = vpop.permute.xlu0 %1846
    %1848 = vrot.lane.b32.xlu0 %v1201, 32
    %v1849 = vpop.permute.xlu0 %1848
    %1850 = vrot.lane.b32.xlu0 %v1214, 32
    %v1851 = vpop.permute.xlu0 %1850
    %1852 = vrot.lane.b32.xlu0 %v1227, 32
    %v1853 = vpop.permute.xlu0 %1852
    %1854 = vrot.lane.b32.xlu0 %v1240, 32
    %v1855 = vpop.permute.xlu0 %1854
    %1856 = vrot.lane.b32.xlu0 %v1253, 32
    %v1857 = vpop.permute.xlu0 %1856
    %1858 = vrot.lane.b32.xlu0 %v1266, 32
    %v1859 = vpop.permute.xlu0 %1858
    %1860 = vrot.lane.b32.xlu0 %v1279, 32
    %v1861 = vpop.permute.xlu0 %1860
    %1862 = vrot.lane.b32.xlu0 %v1292, 32
    %v1863 = vpop.permute.xlu0 %1862
    %1864 = vrot.lane.b32.xlu0 %v1305, 32
    %v1865 = vpop.permute.xlu0 %1864
    %1866 = vrot.lane.b32.xlu0 %v1188, 24
    %v1867 = vpop.permute.xlu0 %1866
    %1868 = vrot.lane.b32.xlu0 %v1201, 24
    %v1869 = vpop.permute.xlu0 %1868
    %1870 = vrot.lane.b32.xlu0 %v1214, 24
    %v1871 = vpop.permute.xlu0 %1870
    %1872 = vrot.lane.b32.xlu0 %v1227, 24
    %v1873 = vpop.permute.xlu0 %1872
    %1874 = vrot.lane.b32.xlu0 %v1240, 24
    %v1875 = vpop.permute.xlu0 %1874
    %1876 = vrot.lane.b32.xlu0 %v1253, 24
    %v1877 = vpop.permute.xlu0 %1876
    %1878 = vrot.lane.b32.xlu0 %v1266, 24
    %v1879 = vpop.permute.xlu0 %1878
    %1880 = vrot.lane.b32.xlu0 %v1279, 24
    %v1881 = vpop.permute.xlu0 %1880
    %1882 = vrot.lane.b32.xlu0 %v1292, 24
    %v1883 = vpop.permute.xlu0 %1882
    %1884 = vrot.lane.b32.xlu0 %v1305, 24
    %v1885 = vpop.permute.xlu0 %1884
    %v1886 = vrot.slane %v1194, 7
    %vm1887 = vcmask 1041409
    %v1888 = vsel %vm1887, %v1886, %v1180
    %v1889 = vrot.slane %v1207, 6
    %vm1890 = vcmask 1042434
    %v1891 = vsel %vm1890, %v1889, %v1888
    %v1892 = vrot.slane %v1220, 5
    %vm1893 = vcmask 1043459
    %v1894 = vsel %vm1893, %v1892, %v1891
    %v1895 = vrot.slane %v1233, 4
    %vm1896 = vcmask 1044484
    %v1897 = vsel %vm1896, %v1895, %v1894
    %v1898 = vrot.slane %v1319, 7
    %v1899 = vsel %vm1887, %v1898, %v1317
    %v1900 = vrot.slane %v1321, 6
    %v1901 = vsel %vm1890, %v1900, %v1899
    %v1902 = vrot.slane %v1323, 5
    %v1903 = vsel %vm1893, %v1902, %v1901
    %v1904 = vrot.slane %v1325, 4
    %v1905 = vsel %vm1896, %v1904, %v1903
    %v1906 = vrot.slane %v1339, 7
    %v1907 = vsel %vm1887, %v1906, %v1337
    %v1908 = vrot.slane %v1341, 6
    %v1909 = vsel %vm1890, %v1908, %v1907
    %v1910 = vrot.slane %v1343, 5
    %v1911 = vsel %vm1893, %v1910, %v1909
    %v1912 = vrot.slane %v1345, 4
    %v1913 = vsel %vm1896, %v1912, %v1911
    %v1914 = vrot.slane %v1359, 7
    %v1915 = vsel %vm1887, %v1914, %v1357
    %v1916 = vrot.slane %v1361, 6
    %v1917 = vsel %vm1890, %v1916, %v1915
    %v1918 = vrot.slane %v1363, 5
    %v1919 = vsel %vm1893, %v1918, %v1917
    %v1920 = vrot.slane %v1365, 4
    %v1921 = vsel %vm1896, %v1920, %v1919
    %v1922 = vrot.slane %v1379, 7
    %v1923 = vsel %vm1887, %v1922, %v1377
    %v1924 = vrot.slane %v1381, 6
    %v1925 = vsel %vm1890, %v1924, %v1923
    %v1926 = vrot.slane %v1383, 5
    %v1927 = vsel %vm1893, %v1926, %v1925
    %v1928 = vrot.slane %v1385, 4
    %v1929 = vsel %vm1896, %v1928, %v1927
    %v1930 = vrot.slane %v1399, 7
    %v1931 = vsel %vm1887, %v1930, %v1397
    %v1932 = vrot.slane %v1401, 6
    %v1933 = vsel %vm1890, %v1932, %v1931
    %v1934 = vrot.slane %v1403, 5
    %v1935 = vsel %vm1893, %v1934, %v1933
    %v1936 = vrot.slane %v1405, 4
    %v1937 = vsel %vm1896, %v1936, %v1935
    %v1938 = vrot.slane %v1419, 7
    %v1939 = vsel %vm1887, %v1938, %v1417
    %v1940 = vrot.slane %v1421, 6
    %v1941 = vsel %vm1890, %v1940, %v1939
    %v1942 = vrot.slane %v1423, 5
    %v1943 = vsel %vm1893, %v1942, %v1941
    %v1944 = vrot.slane %v1425, 4
    %v1945 = vsel %vm1896, %v1944, %v1943
    %v1946 = vrot.slane %v1439, 7
    %v1947 = vsel %vm1887, %v1946, %v1437
    %v1948 = vrot.slane %v1441, 6
    %v1949 = vsel %vm1890, %v1948, %v1947
    %v1950 = vrot.slane %v1443, 5
    %v1951 = vsel %vm1893, %v1950, %v1949
    %v1952 = vrot.slane %v1445, 4
    %v1953 = vsel %vm1896, %v1952, %v1951
    %v1954 = vrot.slane %v1459, 7
    %v1955 = vsel %vm1887, %v1954, %v1457
    %v1956 = vrot.slane %v1461, 6
    %v1957 = vsel %vm1890, %v1956, %v1955
    %v1958 = vrot.slane %v1463, 5
    %v1959 = vsel %vm1893, %v1958, %v1957
    %v1960 = vrot.slane %v1465, 4
    %v1961 = vsel %vm1896, %v1960, %v1959
    %v1962 = vrot.slane %v1479, 7
    %v1963 = vsel %vm1887, %v1962, %v1477
    %v1964 = vrot.slane %v1481, 6
    %v1965 = vsel %vm1890, %v1964, %v1963
    %v1966 = vrot.slane %v1483, 5
    %v1967 = vsel %vm1893, %v1966, %v1965
    %v1968 = vrot.slane %v1485, 4
    %v1969 = vsel %vm1896, %v1968, %v1967
    %v1970 = vrot.slane %v1499, 7
    %v1971 = vsel %vm1887, %v1970, %v1497
    %v1972 = vrot.slane %v1501, 6
    %v1973 = vsel %vm1890, %v1972, %v1971
    %v1974 = vrot.slane %v1503, 5
    %v1975 = vsel %vm1893, %v1974, %v1973
    %v1976 = vrot.slane %v1505, 4
    %v1977 = vsel %vm1896, %v1976, %v1975
    %v1978 = vrot.slane %v1519, 7
    %v1979 = vsel %vm1887, %v1978, %v1517
    %v1980 = vrot.slane %v1521, 6
    %v1981 = vsel %vm1890, %v1980, %v1979
    %v1982 = vrot.slane %v1523, 5
    %v1983 = vsel %vm1893, %v1982, %v1981
    %v1984 = vrot.slane %v1525, 4
    %v1985 = vsel %vm1896, %v1984, %v1983
    %v1986 = vrot.slane %v1539, 7
    %v1987 = vsel %vm1887, %v1986, %v1537
    %v1988 = vrot.slane %v1541, 6
    %v1989 = vsel %vm1890, %v1988, %v1987
    %v1990 = vrot.slane %v1543, 5
    %v1991 = vsel %vm1893, %v1990, %v1989
    %v1992 = vrot.slane %v1545, 4
    %v1993 = vsel %vm1896, %v1992, %v1991
    %v1994 = vrot.slane %v1559, 7
    %v1995 = vsel %vm1887, %v1994, %v1557
    %v1996 = vrot.slane %v1561, 6
    %v1997 = vsel %vm1890, %v1996, %v1995
    %v1998 = vrot.slane %v1563, 5
    %v1999 = vsel %vm1893, %v1998, %v1997
    %v2000 = vrot.slane %v1565, 4
    %v2001 = vsel %vm1896, %v2000, %v1999
    %v2002 = vrot.slane %v1579, 7
    %v2003 = vsel %vm1887, %v2002, %v1577
    %v2004 = vrot.slane %v1581, 6
    %v2005 = vsel %vm1890, %v2004, %v2003
    %v2006 = vrot.slane %v1583, 5
    %v2007 = vsel %vm1893, %v2006, %v2005
    %v2008 = vrot.slane %v1585, 4
    %v2009 = vsel %vm1896, %v2008, %v2007
    %v2010 = vrot.slane %v1599, 7
    %v2011 = vsel %vm1887, %v2010, %v1597
    %v2012 = vrot.slane %v1601, 6
    %v2013 = vsel %vm1890, %v2012, %v2011
    %v2014 = vrot.slane %v1603, 5
    %v2015 = vsel %vm1893, %v2014, %v2013
    %v2016 = vrot.slane %v1605, 4
    %v2017 = vsel %vm1896, %v2016, %v2015
    %v2018 = vrot.slane %v1201, 7
    %v2019 = vsel %vm1887, %v2018, %v1188
    %v2020 = vrot.slane %v1214, 6
    %v2021 = vsel %vm1890, %v2020, %v2019
    %v2022 = vrot.slane %v1227, 5
    %v2023 = vsel %vm1893, %v2022, %v2021
    %v2024 = vrot.slane %v1240, 4
    %v2025 = vsel %vm1896, %v2024, %v2023
    %v2026 = vrot.slane %v1629, 7
    %v2027 = vsel %vm1887, %v2026, %v1627
    %v2028 = vrot.slane %v1631, 6
    %v2029 = vsel %vm1890, %v2028, %v2027
    %v2030 = vrot.slane %v1633, 5
    %v2031 = vsel %vm1893, %v2030, %v2029
    %v2032 = vrot.slane %v1635, 4
    %v2033 = vsel %vm1896, %v2032, %v2031
    %v2034 = vrot.slane %v1649, 7
    %v2035 = vsel %vm1887, %v2034, %v1647
    %v2036 = vrot.slane %v1651, 6
    %v2037 = vsel %vm1890, %v2036, %v2035
    %v2038 = vrot.slane %v1653, 5
    %v2039 = vsel %vm1893, %v2038, %v2037
    %v2040 = vrot.slane %v1655, 4
    %v2041 = vsel %vm1896, %v2040, %v2039
    %v2042 = vrot.slane %v1669, 7
    %v2043 = vsel %vm1887, %v2042, %v1667
    %v2044 = vrot.slane %v1671, 6
    %v2045 = vsel %vm1890, %v2044, %v2043
    %v2046 = vrot.slane %v1673, 5
    %v2047 = vsel %vm1893, %v2046, %v2045
    %v2048 = vrot.slane %v1675, 4
    %v2049 = vsel %vm1896, %v2048, %v2047
    %v2050 = vrot.slane %v1689, 7
    %v2051 = vsel %vm1887, %v2050, %v1687
    %v2052 = vrot.slane %v1691, 6
    %v2053 = vsel %vm1890, %v2052, %v2051
    %v2054 = vrot.slane %v1693, 5
    %v2055 = vsel %vm1893, %v2054, %v2053
    %v2056 = vrot.slane %v1695, 4
    %v2057 = vsel %vm1896, %v2056, %v2055
    %v2058 = vrot.slane %v1709, 7
    %v2059 = vsel %vm1887, %v2058, %v1707
    %v2060 = vrot.slane %v1711, 6
    %v2061 = vsel %vm1890, %v2060, %v2059
    %v2062 = vrot.slane %v1713, 5
    %v2063 = vsel %vm1893, %v2062, %v2061
    %v2064 = vrot.slane %v1715, 4
    %v2065 = vsel %vm1896, %v2064, %v2063
    %v2066 = vrot.slane %v1729, 7
    %v2067 = vsel %vm1887, %v2066, %v1727
    %v2068 = vrot.slane %v1731, 6
    %v2069 = vsel %vm1890, %v2068, %v2067
    %v2070 = vrot.slane %v1733, 5
    %v2071 = vsel %vm1893, %v2070, %v2069
    %v2072 = vrot.slane %v1735, 4
    %v2073 = vsel %vm1896, %v2072, %v2071
    %v2074 = vrot.slane %v1749, 7
    %v2075 = vsel %vm1887, %v2074, %v1747
    %v2076 = vrot.slane %v1751, 6
    %v2077 = vsel %vm1890, %v2076, %v2075
    %v2078 = vrot.slane %v1753, 5
    %v2079 = vsel %vm1893, %v2078, %v2077
    %v2080 = vrot.slane %v1755, 4
    %v2081 = vsel %vm1896, %v2080, %v2079
    %v2082 = vrot.slane %v1769, 7
    %v2083 = vsel %vm1887, %v2082, %v1767
    %v2084 = vrot.slane %v1771, 6
    %v2085 = vsel %vm1890, %v2084, %v2083
    %v2086 = vrot.slane %v1773, 5
    %v2087 = vsel %vm1893, %v2086, %v2085
    %v2088 = vrot.slane %v1775, 4
    %v2089 = vsel %vm1896, %v2088, %v2087
    %v2090 = vrot.slane %v1789, 7
    %v2091 = vsel %vm1887, %v2090, %v1787
    %v2092 = vrot.slane %v1791, 6
    %v2093 = vsel %vm1890, %v2092, %v2091
    %v2094 = vrot.slane %v1793, 5
    %v2095 = vsel %vm1893, %v2094, %v2093
    %v2096 = vrot.slane %v1795, 4
    %v2097 = vsel %vm1896, %v2096, %v2095
    %v2098 = vrot.slane %v1809, 7
    %v2099 = vsel %vm1887, %v2098, %v1807
    %v2100 = vrot.slane %v1811, 6
    %v2101 = vsel %vm1890, %v2100, %v2099
    %v2102 = vrot.slane %v1813, 5
    %v2103 = vsel %vm1893, %v2102, %v2101
    %v2104 = vrot.slane %v1815, 4
    %v2105 = vsel %vm1896, %v2104, %v2103
    %v2106 = vrot.slane %v1829, 7
    %v2107 = vsel %vm1887, %v2106, %v1827
    %v2108 = vrot.slane %v1831, 6
    %v2109 = vsel %vm1890, %v2108, %v2107
    %v2110 = vrot.slane %v1833, 5
    %v2111 = vsel %vm1893, %v2110, %v2109
    %v2112 = vrot.slane %v1835, 4
    %v2113 = vsel %vm1896, %v2112, %v2111
    %v2114 = vrot.slane %v1849, 7
    %v2115 = vsel %vm1887, %v2114, %v1847
    %v2116 = vrot.slane %v1851, 6
    %v2117 = vsel %vm1890, %v2116, %v2115
    %v2118 = vrot.slane %v1853, 5
    %v2119 = vsel %vm1893, %v2118, %v2117
    %v2120 = vrot.slane %v1855, 4
    %v2121 = vsel %vm1896, %v2120, %v2119
    %v2122 = vrot.slane %v1869, 7
    %v2123 = vsel %vm1887, %v2122, %v1867
    %v2124 = vrot.slane %v1871, 6
    %v2125 = vsel %vm1890, %v2124, %v2123
    %v2126 = vrot.slane %v1873, 5
    %v2127 = vsel %vm1893, %v2126, %v2125
    %v2128 = vrot.slane %v1875, 4
    %v2129 = vsel %vm1896, %v2128, %v2127
    %v2130 = vrot.slane %v1259, 7
    %v2131 = vsel %vm1887, %v2130, %v1246
    %v2132 = vrot.slane %v1272, 6
    %v2133 = vsel %vm1890, %v2132, %v2131
    %v2134 = vrot.slane %v1285, 5
    %v2135 = vsel %vm1893, %v2134, %v2133
    %v2136 = vrot.slane %v1298, 4
    %v2137 = vsel %vm1896, %v2136, %v2135
    %v2138 = vrot.slane %v1329, 7
    %v2139 = vsel %vm1887, %v2138, %v1327
    %v2140 = vrot.slane %v1331, 6
    %v2141 = vsel %vm1890, %v2140, %v2139
    %v2142 = vrot.slane %v1333, 5
    %v2143 = vsel %vm1893, %v2142, %v2141
    %v2144 = vrot.slane %v1335, 4
    %v2145 = vsel %vm1896, %v2144, %v2143
    %v2146 = vrot.slane %v1349, 7
    %v2147 = vsel %vm1887, %v2146, %v1347
    %v2148 = vrot.slane %v1351, 6
    %v2149 = vsel %vm1890, %v2148, %v2147
    %v2150 = vrot.slane %v1353, 5
    %v2151 = vsel %vm1893, %v2150, %v2149
    %v2152 = vrot.slane %v1355, 4
    %v2153 = vsel %vm1896, %v2152, %v2151
    %v2154 = vrot.slane %v1369, 7
    %v2155 = vsel %vm1887, %v2154, %v1367
    %v2156 = vrot.slane %v1371, 6
    %v2157 = vsel %vm1890, %v2156, %v2155
    %v2158 = vrot.slane %v1373, 5
    %v2159 = vsel %vm1893, %v2158, %v2157
    %v2160 = vrot.slane %v1375, 4
    %v2161 = vsel %vm1896, %v2160, %v2159
    %v2162 = vrot.slane %v1389, 7
    %v2163 = vsel %vm1887, %v2162, %v1387
    %v2164 = vrot.slane %v1391, 6
    %v2165 = vsel %vm1890, %v2164, %v2163
    %v2166 = vrot.slane %v1393, 5
    %v2167 = vsel %vm1893, %v2166, %v2165
    %v2168 = vrot.slane %v1395, 4
    %v2169 = vsel %vm1896, %v2168, %v2167
    %v2170 = vrot.slane %v1409, 7
    %v2171 = vsel %vm1887, %v2170, %v1407
    %v2172 = vrot.slane %v1411, 6
    %v2173 = vsel %vm1890, %v2172, %v2171
    %v2174 = vrot.slane %v1413, 5
    %v2175 = vsel %vm1893, %v2174, %v2173
    %v2176 = vrot.slane %v1415, 4
    %v2177 = vsel %vm1896, %v2176, %v2175
    %v2178 = vrot.slane %v1429, 7
    %v2179 = vsel %vm1887, %v2178, %v1427
    %v2180 = vrot.slane %v1431, 6
    %v2181 = vsel %vm1890, %v2180, %v2179
    %v2182 = vrot.slane %v1433, 5
    %v2183 = vsel %vm1893, %v2182, %v2181
    %v2184 = vrot.slane %v1435, 4
    %v2185 = vsel %vm1896, %v2184, %v2183
    %v2186 = vrot.slane %v1449, 7
    %v2187 = vsel %vm1887, %v2186, %v1447
    %v2188 = vrot.slane %v1451, 6
    %v2189 = vsel %vm1890, %v2188, %v2187
    %v2190 = vrot.slane %v1453, 5
    %v2191 = vsel %vm1893, %v2190, %v2189
    %v2192 = vrot.slane %v1455, 4
    %v2193 = vsel %vm1896, %v2192, %v2191
    %v2194 = vrot.slane %v1469, 7
    %v2195 = vsel %vm1887, %v2194, %v1467
    %v2196 = vrot.slane %v1471, 6
    %v2197 = vsel %vm1890, %v2196, %v2195
    %v2198 = vrot.slane %v1473, 5
    %v2199 = vsel %vm1893, %v2198, %v2197
    %v2200 = vrot.slane %v1475, 4
    %v2201 = vsel %vm1896, %v2200, %v2199
    %v2202 = vrot.slane %v1489, 7
    %v2203 = vsel %vm1887, %v2202, %v1487
    %v2204 = vrot.slane %v1491, 6
    %v2205 = vsel %vm1890, %v2204, %v2203
    %v2206 = vrot.slane %v1493, 5
    %v2207 = vsel %vm1893, %v2206, %v2205
    %v2208 = vrot.slane %v1495, 4
    %v2209 = vsel %vm1896, %v2208, %v2207
    %v2210 = vrot.slane %v1509, 7
    %v2211 = vsel %vm1887, %v2210, %v1507
    %v2212 = vrot.slane %v1511, 6
    %v2213 = vsel %vm1890, %v2212, %v2211
    %v2214 = vrot.slane %v1513, 5
    %v2215 = vsel %vm1893, %v2214, %v2213
    %v2216 = vrot.slane %v1515, 4
    %v2217 = vsel %vm1896, %v2216, %v2215
    %v2218 = vrot.slane %v1529, 7
    %v2219 = vsel %vm1887, %v2218, %v1527
    %v2220 = vrot.slane %v1531, 6
    %v2221 = vsel %vm1890, %v2220, %v2219
    %v2222 = vrot.slane %v1533, 5
    %v2223 = vsel %vm1893, %v2222, %v2221
    %v2224 = vrot.slane %v1535, 4
    %v2225 = vsel %vm1896, %v2224, %v2223
    %v2226 = vrot.slane %v1549, 7
    %v2227 = vsel %vm1887, %v2226, %v1547
    %v2228 = vrot.slane %v1551, 6
    %v2229 = vsel %vm1890, %v2228, %v2227
    %v2230 = vrot.slane %v1553, 5
    %v2231 = vsel %vm1893, %v2230, %v2229
    %v2232 = vrot.slane %v1555, 4
    %v2233 = vsel %vm1896, %v2232, %v2231
    %v2234 = vrot.slane %v1569, 7
    %v2235 = vsel %vm1887, %v2234, %v1567
    %v2236 = vrot.slane %v1571, 6
    %v2237 = vsel %vm1890, %v2236, %v2235
    %v2238 = vrot.slane %v1573, 5
    %v2239 = vsel %vm1893, %v2238, %v2237
    %v2240 = vrot.slane %v1575, 4
    %v2241 = vsel %vm1896, %v2240, %v2239
    %v2242 = vrot.slane %v1589, 7
    %v2243 = vsel %vm1887, %v2242, %v1587
    %v2244 = vrot.slane %v1591, 6
    %v2245 = vsel %vm1890, %v2244, %v2243
    %v2246 = vrot.slane %v1593, 5
    %v2247 = vsel %vm1893, %v2246, %v2245
    %v2248 = vrot.slane %v1595, 4
    %v2249 = vsel %vm1896, %v2248, %v2247
    %v2250 = vrot.slane %v1609, 7
    %v2251 = vsel %vm1887, %v2250, %v1607
    %v2252 = vrot.slane %v1611, 6
    %v2253 = vsel %vm1890, %v2252, %v2251
    %v2254 = vrot.slane %v1613, 5
    %v2255 = vsel %vm1893, %v2254, %v2253
    %v2256 = vrot.slane %v1615, 4
    %v2257 = vsel %vm1896, %v2256, %v2255
    %v2258 = vrot.slane %v1266, 7
    %v2259 = vsel %vm1887, %v2258, %v1253
    %v2260 = vrot.slane %v1279, 6
    %v2261 = vsel %vm1890, %v2260, %v2259
    %v2262 = vrot.slane %v1292, 5
    %v2263 = vsel %vm1893, %v2262, %v2261
    %v2264 = vrot.slane %v1305, 4
    %v2265 = vsel %vm1896, %v2264, %v2263
    %v2266 = vrot.slane %v1639, 7
    %v2267 = vsel %vm1887, %v2266, %v1637
    %v2268 = vrot.slane %v1641, 6
    %v2269 = vsel %vm1890, %v2268, %v2267
    %v2270 = vrot.slane %v1643, 5
    %v2271 = vsel %vm1893, %v2270, %v2269
    %v2272 = vrot.slane %v1645, 4
    %v2273 = vsel %vm1896, %v2272, %v2271
    %v2274 = vrot.slane %v1659, 7
    %v2275 = vsel %vm1887, %v2274, %v1657
    %v2276 = vrot.slane %v1661, 6
    %v2277 = vsel %vm1890, %v2276, %v2275
    %v2278 = vrot.slane %v1663, 5
    %v2279 = vsel %vm1893, %v2278, %v2277
    %v2280 = vrot.slane %v1665, 4
    %v2281 = vsel %vm1896, %v2280, %v2279
    %v2282 = vrot.slane %v1679, 7
    %v2283 = vsel %vm1887, %v2282, %v1677
    %v2284 = vrot.slane %v1681, 6
    %v2285 = vsel %vm1890, %v2284, %v2283
    %v2286 = vrot.slane %v1683, 5
    %v2287 = vsel %vm1893, %v2286, %v2285
    %v2288 = vrot.slane %v1685, 4
    %v2289 = vsel %vm1896, %v2288, %v2287
    %v2290 = vrot.slane %v1699, 7
    %v2291 = vsel %vm1887, %v2290, %v1697
    %v2292 = vrot.slane %v1701, 6
    %v2293 = vsel %vm1890, %v2292, %v2291
    %v2294 = vrot.slane %v1703, 5
    %v2295 = vsel %vm1893, %v2294, %v2293
    %v2296 = vrot.slane %v1705, 4
    %v2297 = vsel %vm1896, %v2296, %v2295
    %v2298 = vrot.slane %v1719, 7
    %v2299 = vsel %vm1887, %v2298, %v1717
    %v2300 = vrot.slane %v1721, 6
    %v2301 = vsel %vm1890, %v2300, %v2299
    %v2302 = vrot.slane %v1723, 5
    %v2303 = vsel %vm1893, %v2302, %v2301
    %v2304 = vrot.slane %v1725, 4
    %v2305 = vsel %vm1896, %v2304, %v2303
    %v2306 = vrot.slane %v1739, 7
    %v2307 = vsel %vm1887, %v2306, %v1737
    %v2308 = vrot.slane %v1741, 6
    %v2309 = vsel %vm1890, %v2308, %v2307
    %v2310 = vrot.slane %v1743, 5
    %v2311 = vsel %vm1893, %v2310, %v2309
    %v2312 = vrot.slane %v1745, 4
    %v2313 = vsel %vm1896, %v2312, %v2311
    %v2314 = vrot.slane %v1759, 7
    %v2315 = vsel %vm1887, %v2314, %v1757
    %v2316 = vrot.slane %v1761, 6
    %v2317 = vsel %vm1890, %v2316, %v2315
    %v2318 = vrot.slane %v1763, 5
    %v2319 = vsel %vm1893, %v2318, %v2317
    %v2320 = vrot.slane %v1765, 4
    %v2321 = vsel %vm1896, %v2320, %v2319
    %v2322 = vrot.slane %v1779, 7
    %v2323 = vsel %vm1887, %v2322, %v1777
    %v2324 = vrot.slane %v1781, 6
    %v2325 = vsel %vm1890, %v2324, %v2323
    %v2326 = vrot.slane %v1783, 5
    %v2327 = vsel %vm1893, %v2326, %v2325
    %v2328 = vrot.slane %v1785, 4
    %v2329 = vsel %vm1896, %v2328, %v2327
    %v2330 = vrot.slane %v1799, 7
    %v2331 = vsel %vm1887, %v2330, %v1797
    %v2332 = vrot.slane %v1801, 6
    %v2333 = vsel %vm1890, %v2332, %v2331
    %v2334 = vrot.slane %v1803, 5
    %v2335 = vsel %vm1893, %v2334, %v2333
    %v2336 = vrot.slane %v1805, 4
    %v2337 = vsel %vm1896, %v2336, %v2335
    %v2338 = vrot.slane %v1819, 7
    %v2339 = vsel %vm1887, %v2338, %v1817
    %v2340 = vrot.slane %v1821, 6
    %v2341 = vsel %vm1890, %v2340, %v2339
    %v2342 = vrot.slane %v1823, 5
    %v2343 = vsel %vm1893, %v2342, %v2341
    %v2344 = vrot.slane %v1825, 4
    %v2345 = vsel %vm1896, %v2344, %v2343
    %v2346 = vrot.slane %v1839, 7
    %v2347 = vsel %vm1887, %v2346, %v1837
    %v2348 = vrot.slane %v1841, 6
    %v2349 = vsel %vm1890, %v2348, %v2347
    %v2350 = vrot.slane %v1843, 5
    %v2351 = vsel %vm1893, %v2350, %v2349
    %v2352 = vrot.slane %v1845, 4
    %v2353 = vsel %vm1896, %v2352, %v2351
    %v2354 = vrot.slane %v1859, 7
    %v2355 = vsel %vm1887, %v2354, %v1857
    %v2356 = vrot.slane %v1861, 6
    %v2357 = vsel %vm1890, %v2356, %v2355
    %v2358 = vrot.slane %v1863, 5
    %v2359 = vsel %vm1893, %v2358, %v2357
    %v2360 = vrot.slane %v1865, 4
    %v2361 = vsel %vm1896, %v2360, %v2359
    %v2362 = vrot.slane %v1879, 7
    %v2363 = vsel %vm1887, %v2362, %v1877
    %v2364 = vrot.slane %v1881, 6
    %v2365 = vsel %vm1890, %v2364, %v2363
    %v2366 = vrot.slane %v1883, 5
    %v2367 = vsel %vm1893, %v2366, %v2365
    %v2368 = vrot.slane %v1885, 4
    %v2369 = vsel %vm1896, %v2368, %v2367
    %v2430 = vcombine.low %v1897, %v1913
    %v2431 = vcombine.high %v1897, %v1913
    %v2433 = vunpack.c.l.s4 1983009808
    %v2434 = vunpack.c.0.s8 %v2433
    %v2435 = vlaneseq
    %v2436 = vshrl.u32 %v2435, 7
    %v2437 = vsub.s32 %v2434, %v2436
    %v2438 = vrot.slane %v2430, %v2437
    %v2440 = vunpack.c.l.s4 1983009808
    %v2441 = vunpack.c.0.s8 %v2440
    %v2442 = vlaneseq
    %v2443 = vshrl.u32 %v2442, 7
    %v2444 = vsub.s32 %v2441, %v2443
    %v2445 = vrot.slane %v2431, %v2444
    %v2446 = vcombine.low %v1905, %v1921
    %v2447 = vcombine.high %v1905, %v1921
    %v2449 = vunpack.c.l.s4 1983009808
    %v2450 = vunpack.c.0.s8 %v2449
    %v2451 = vlaneseq
    %v2452 = vshrl.u32 %v2451, 7
    %v2453 = vsub.s32 %v2450, %v2452
    %v2454 = vrot.slane %v2446, %v2453
    %v2456 = vunpack.c.l.s4 1983009808
    %v2457 = vunpack.c.0.s8 %v2456
    %v2458 = vlaneseq
    %v2459 = vshrl.u32 %v2458, 7
    %v2460 = vsub.s32 %v2457, %v2459
    %v2461 = vrot.slane %v2447, %v2460
    %v2462 = vcombine.low %v1929, %v1945
    %v2463 = vcombine.high %v1929, %v1945
    %v2465 = vunpack.c.l.s4 1983009808
    %v2466 = vunpack.c.0.s8 %v2465
    %v2467 = vlaneseq
    %v2468 = vshrl.u32 %v2467, 7
    %v2469 = vsub.s32 %v2466, %v2468
    %v2470 = vrot.slane %v2462, %v2469
    %v2472 = vunpack.c.l.s4 1983009808
    %v2473 = vunpack.c.0.s8 %v2472
    %v2474 = vlaneseq
    %v2475 = vshrl.u32 %v2474, 7
    %v2476 = vsub.s32 %v2473, %v2475
    %v2477 = vrot.slane %v2463, %v2476
    %v2478 = vcombine.low %v1937, %v1953
    %v2479 = vcombine.high %v1937, %v1953
    %v2481 = vunpack.c.l.s4 1983009808
    %v2482 = vunpack.c.0.s8 %v2481
    %v2483 = vlaneseq
    %v2484 = vshrl.u32 %v2483, 7
    %v2485 = vsub.s32 %v2482, %v2484
    %v2486 = vrot.slane %v2478, %v2485
    %v2488 = vunpack.c.l.s4 1983009808
    %v2489 = vunpack.c.0.s8 %v2488
    %v2490 = vlaneseq
    %v2491 = vshrl.u32 %v2490, 7
    %v2492 = vsub.s32 %v2489, %v2491
    %v2493 = vrot.slane %v2479, %v2492
    %v2494 = vcombine.low %v2438, %v2454
    %v2495 = vcombine.high %v2438, %v2454
    %v2497 = vunpack.c.l.s4 1934713408
    %v2498 = vunpack.c.0.s8 %v2497
    %v2499 = vlaneseq
    %v2500 = vshrl.u32 %v2499, 7
    %v2501 = vsub.s32 %v2498, %v2500
    %v2502 = vrot.slane %v2494, %v2501
    %v2504 = vunpack.c.l.s4 1934713408
    %v2505 = vunpack.c.0.s8 %v2504
    %v2506 = vlaneseq
    %v2507 = vshrl.u32 %v2506, 7
    %v2508 = vsub.s32 %v2505, %v2507
    %v2509 = vrot.slane %v2495, %v2508
    %v2510 = vcombine.low %v2445, %v2461
    %v2512 = vunpack.c.l.s4 1934713408
    %v2513 = vunpack.c.0.s8 %v2512
    %v2514 = vlaneseq
    %v2515 = vshrl.u32 %v2514, 7
    %v2516 = vsub.s32 %v2513, %v2515
    %v2517 = vrot.slane %v2510, %v2516
    %v2518 = vcombine.low %v2470, %v2486
    %v2519 = vcombine.high %v2470, %v2486
    %v2521 = vunpack.c.l.s4 1934713408
    %v2522 = vunpack.c.0.s8 %v2521
    %v2523 = vlaneseq
    %v2524 = vshrl.u32 %v2523, 7
    %v2525 = vsub.s32 %v2522, %v2524
    %v2526 = vrot.slane %v2518, %v2525
    %v2528 = vunpack.c.l.s4 1934713408
    %v2529 = vunpack.c.0.s8 %v2528
    %v2530 = vlaneseq
    %v2531 = vshrl.u32 %v2530, 7
    %v2532 = vsub.s32 %v2529, %v2531
    %v2533 = vrot.slane %v2519, %v2532
    %v2534 = vcombine.low %v2477, %v2493
    %v2536 = vunpack.c.l.s4 1934713408
    %v2537 = vunpack.c.0.s8 %v2536
    %v2538 = vlaneseq
    %v2539 = vshrl.u32 %v2538, 7
    %v2540 = vsub.s32 %v2537, %v2539
    %v2541 = vrot.slane %v2534, %v2540
    %v2542 = vcombine.low %v2502, %v2526
    %v2543 = vcombine.high %v2502, %v2526
    %v2544 = vcombine.low %v2509, %v2533
    %v2545 = vcombine.high %v2509, %v2533
    %v2546 = vcombine.low %v2517, %v2541
    %v2547 = vcombine.low %v1961, %v1977
    %v2548 = vcombine.high %v1961, %v1977
    %v2550 = vunpack.c.l.s4 1983009808
    %v2551 = vunpack.c.0.s8 %v2550
    %v2552 = vlaneseq
    %v2553 = vshrl.u32 %v2552, 7
    %v2554 = vsub.s32 %v2551, %v2553
    %v2555 = vrot.slane %v2547, %v2554
    %v2557 = vunpack.c.l.s4 1983009808
    %v2558 = vunpack.c.0.s8 %v2557
    %v2559 = vlaneseq
    %v2560 = vshrl.u32 %v2559, 7
    %v2561 = vsub.s32 %v2558, %v2560
    %v2562 = vrot.slane %v2548, %v2561
    %v2563 = vcombine.low %v1969, %v1985
    %v2564 = vcombine.high %v1969, %v1985
    %v2566 = vunpack.c.l.s4 1983009808
    %v2567 = vunpack.c.0.s8 %v2566
    %v2568 = vlaneseq
    %v2569 = vshrl.u32 %v2568, 7
    %v2570 = vsub.s32 %v2567, %v2569
    %v2571 = vrot.slane %v2563, %v2570
    %v2573 = vunpack.c.l.s4 1983009808
    %v2574 = vunpack.c.0.s8 %v2573
    %v2575 = vlaneseq
    %v2576 = vshrl.u32 %v2575, 7
    %v2577 = vsub.s32 %v2574, %v2576
    %v2578 = vrot.slane %v2564, %v2577
    %v2579 = vcombine.low %v1993, %v2009
    %v2580 = vcombine.high %v1993, %v2009
    %v2582 = vunpack.c.l.s4 1983009808
    %v2583 = vunpack.c.0.s8 %v2582
    %v2584 = vlaneseq
    %v2585 = vshrl.u32 %v2584, 7
    %v2586 = vsub.s32 %v2583, %v2585
    %v2587 = vrot.slane %v2579, %v2586
    %v2589 = vunpack.c.l.s4 1983009808
    %v2590 = vunpack.c.0.s8 %v2589
    %v2591 = vlaneseq
    %v2592 = vshrl.u32 %v2591, 7
    %v2593 = vsub.s32 %v2590, %v2592
    %v2594 = vrot.slane %v2580, %v2593
    %v2595 = vcombine.low %v2001, %v2017
    %v2596 = vcombine.high %v2001, %v2017
    %v2598 = vunpack.c.l.s4 1983009808
    %v2599 = vunpack.c.0.s8 %v2598
    %v2600 = vlaneseq
    %v2601 = vshrl.u32 %v2600, 7
    %v2602 = vsub.s32 %v2599, %v2601
    %v2603 = vrot.slane %v2595, %v2602
    %v2605 = vunpack.c.l.s4 1983009808
    %v2606 = vunpack.c.0.s8 %v2605
    %v2607 = vlaneseq
    %v2608 = vshrl.u32 %v2607, 7
    %v2609 = vsub.s32 %v2606, %v2608
    %v2610 = vrot.slane %v2596, %v2609
    %v2611 = vcombine.low %v2555, %v2571
    %v2612 = vcombine.high %v2555, %v2571
    %v2614 = vunpack.c.l.s4 1934713408
    %v2615 = vunpack.c.0.s8 %v2614
    %v2616 = vlaneseq
    %v2617 = vshrl.u32 %v2616, 7
    %v2618 = vsub.s32 %v2615, %v2617
    %v2619 = vrot.slane %v2611, %v2618
    %v2621 = vunpack.c.l.s4 1934713408
    %v2622 = vunpack.c.0.s8 %v2621
    %v2623 = vlaneseq
    %v2624 = vshrl.u32 %v2623, 7
    %v2625 = vsub.s32 %v2622, %v2624
    %v2626 = vrot.slane %v2612, %v2625
    %v2627 = vcombine.low %v2562, %v2578
    %v2629 = vunpack.c.l.s4 1934713408
    %v2630 = vunpack.c.0.s8 %v2629
    %v2631 = vlaneseq
    %v2632 = vshrl.u32 %v2631, 7
    %v2633 = vsub.s32 %v2630, %v2632
    %v2634 = vrot.slane %v2627, %v2633
    %v2635 = vcombine.low %v2587, %v2603
    %v2636 = vcombine.high %v2587, %v2603
    %v2638 = vunpack.c.l.s4 1934713408
    %v2639 = vunpack.c.0.s8 %v2638
    %v2640 = vlaneseq
    %v2641 = vshrl.u32 %v2640, 7
    %v2642 = vsub.s32 %v2639, %v2641
    %v2643 = vrot.slane %v2635, %v2642
    %v2645 = vunpack.c.l.s4 1934713408
    %v2646 = vunpack.c.0.s8 %v2645
    %v2647 = vlaneseq
    %v2648 = vshrl.u32 %v2647, 7
    %v2649 = vsub.s32 %v2646, %v2648
    %v2650 = vrot.slane %v2636, %v2649
    %v2651 = vcombine.low %v2594, %v2610
    %v2653 = vunpack.c.l.s4 1934713408
    %v2654 = vunpack.c.0.s8 %v2653
    %v2655 = vlaneseq
    %v2656 = vshrl.u32 %v2655, 7
    %v2657 = vsub.s32 %v2654, %v2656
    %v2658 = vrot.slane %v2651, %v2657
    %v2659 = vcombine.low %v2619, %v2643
    %v2660 = vcombine.high %v2619, %v2643
    %v2661 = vcombine.low %v2626, %v2650
    %v2662 = vcombine.high %v2626, %v2650
    %v2663 = vcombine.low %v2634, %v2658
    %v2664 = vcombine.low %v2025, %v2041
    %v2665 = vcombine.high %v2025, %v2041
    %v2667 = vunpack.c.l.s4 1983009808
    %v2668 = vunpack.c.0.s8 %v2667
    %v2669 = vlaneseq
    %v2670 = vshrl.u32 %v2669, 7
    %v2671 = vsub.s32 %v2668, %v2670
    %v2672 = vrot.slane %v2664, %v2671
    %v2674 = vunpack.c.l.s4 1983009808
    %v2675 = vunpack.c.0.s8 %v2674
    %v2676 = vlaneseq
    %v2677 = vshrl.u32 %v2676, 7
    %v2678 = vsub.s32 %v2675, %v2677
    %v2679 = vrot.slane %v2665, %v2678
    %v2680 = vcombine.low %v2033, %v2049
    %v2681 = vcombine.high %v2033, %v2049
    %v2683 = vunpack.c.l.s4 1983009808
    %v2684 = vunpack.c.0.s8 %v2683
    %v2685 = vlaneseq
    %v2686 = vshrl.u32 %v2685, 7
    %v2687 = vsub.s32 %v2684, %v2686
    %v2688 = vrot.slane %v2680, %v2687
    %v2690 = vunpack.c.l.s4 1983009808
    %v2691 = vunpack.c.0.s8 %v2690
    %v2692 = vlaneseq
    %v2693 = vshrl.u32 %v2692, 7
    %v2694 = vsub.s32 %v2691, %v2693
    %v2695 = vrot.slane %v2681, %v2694
    %v2696 = vcombine.low %v2057, %v2073
    %v2697 = vcombine.high %v2057, %v2073
    %v2699 = vunpack.c.l.s4 1983009808
    %v2700 = vunpack.c.0.s8 %v2699
    %v2701 = vlaneseq
    %v2702 = vshrl.u32 %v2701, 7
    %v2703 = vsub.s32 %v2700, %v2702
    %v2704 = vrot.slane %v2696, %v2703
    %v2706 = vunpack.c.l.s4 1983009808
    %v2707 = vunpack.c.0.s8 %v2706
    %v2708 = vlaneseq
    %v2709 = vshrl.u32 %v2708, 7
    %v2710 = vsub.s32 %v2707, %v2709
    %v2711 = vrot.slane %v2697, %v2710
    %v2712 = vcombine.low %v2065, %v2081
    %v2713 = vcombine.high %v2065, %v2081
    %v2715 = vunpack.c.l.s4 1983009808
    %v2716 = vunpack.c.0.s8 %v2715
    %v2717 = vlaneseq
    %v2718 = vshrl.u32 %v2717, 7
    %v2719 = vsub.s32 %v2716, %v2718
    %v2720 = vrot.slane %v2712, %v2719
    %v2722 = vunpack.c.l.s4 1983009808
    %v2723 = vunpack.c.0.s8 %v2722
    %v2724 = vlaneseq
    %v2725 = vshrl.u32 %v2724, 7
    %v2726 = vsub.s32 %v2723, %v2725
    %v2727 = vrot.slane %v2713, %v2726
    %v2728 = vcombine.low %v2672, %v2688
    %v2729 = vcombine.high %v2672, %v2688
    %v2731 = vunpack.c.l.s4 1934713408
    %v2732 = vunpack.c.0.s8 %v2731
    %v2733 = vlaneseq
    %v2734 = vshrl.u32 %v2733, 7
    %v2735 = vsub.s32 %v2732, %v2734
    %v2736 = vrot.slane %v2728, %v2735
    %v2738 = vunpack.c.l.s4 1934713408
    %v2739 = vunpack.c.0.s8 %v2738
    %v2740 = vlaneseq
    %v2741 = vshrl.u32 %v2740, 7
    %v2742 = vsub.s32 %v2739, %v2741
    %v2743 = vrot.slane %v2729, %v2742
    %v2744 = vcombine.low %v2679, %v2695
    %v2746 = vunpack.c.l.s4 1934713408
    %v2747 = vunpack.c.0.s8 %v2746
    %v2748 = vlaneseq
    %v2749 = vshrl.u32 %v2748, 7
    %v2750 = vsub.s32 %v2747, %v2749
    %v2751 = vrot.slane %v2744, %v2750
    %v2752 = vcombine.low %v2704, %v2720
    %v2753 = vcombine.high %v2704, %v2720
    %v2755 = vunpack.c.l.s4 1934713408
    %v2756 = vunpack.c.0.s8 %v2755
    %v2757 = vlaneseq
    %v2758 = vshrl.u32 %v2757, 7
    %v2759 = vsub.s32 %v2756, %v2758
    %v2760 = vrot.slane %v2752, %v2759
    %v2762 = vunpack.c.l.s4 1934713408
    %v2763 = vunpack.c.0.s8 %v2762
    %v2764 = vlaneseq
    %v2765 = vshrl.u32 %v2764, 7
    %v2766 = vsub.s32 %v2763, %v2765
    %v2767 = vrot.slane %v2753, %v2766
    %v2768 = vcombine.low %v2711, %v2727
    %v2770 = vunpack.c.l.s4 1934713408
    %v2771 = vunpack.c.0.s8 %v2770
    %v2772 = vlaneseq
    %v2773 = vshrl.u32 %v2772, 7
    %v2774 = vsub.s32 %v2771, %v2773
    %v2775 = vrot.slane %v2768, %v2774
    %v2776 = vcombine.low %v2736, %v2760
    %v2777 = vcombine.high %v2736, %v2760
    %v2778 = vcombine.low %v2743, %v2767
    %v2779 = vcombine.high %v2743, %v2767
    %v2780 = vcombine.low %v2751, %v2775
    %v2781 = vcombine.low %v2089, %v2105
    %v2782 = vcombine.high %v2089, %v2105
    %v2784 = vunpack.c.l.s4 1983009808
    %v2785 = vunpack.c.0.s8 %v2784
    %v2786 = vlaneseq
    %v2787 = vshrl.u32 %v2786, 7
    %v2788 = vsub.s32 %v2785, %v2787
    %v2789 = vrot.slane %v2781, %v2788
    %v2791 = vunpack.c.l.s4 1983009808
    %v2792 = vunpack.c.0.s8 %v2791
    %v2793 = vlaneseq
    %v2794 = vshrl.u32 %v2793, 7
    %v2795 = vsub.s32 %v2792, %v2794
    %v2796 = vrot.slane %v2782, %v2795
    %v2797 = vcombine.low %v2097, %v2113
    %v2798 = vcombine.high %v2097, %v2113
    %v2800 = vunpack.c.l.s4 1983009808
    %v2801 = vunpack.c.0.s8 %v2800
    %v2802 = vlaneseq
    %v2803 = vshrl.u32 %v2802, 7
    %v2804 = vsub.s32 %v2801, %v2803
    %v2805 = vrot.slane %v2797, %v2804
    %v2807 = vunpack.c.l.s4 1983009808
    %v2808 = vunpack.c.0.s8 %v2807
    %v2809 = vlaneseq
    %v2810 = vshrl.u32 %v2809, 7
    %v2811 = vsub.s32 %v2808, %v2810
    %v2812 = vrot.slane %v2798, %v2811
    %v2814 = vunpack.c.l.s4 1983009808
    %v2815 = vunpack.c.0.s8 %v2814
    %v2816 = vlaneseq
    %v2817 = vshrl.u32 %v2816, 7
    %v2818 = vsub.s32 %v2815, %v2817
    %v2819 = vrot.slane %v2121, %v2818
    %v2820 = vcombine.high %v2121, 0.0
    %v2822 = vunpack.c.l.s4 1983009808
    %v2823 = vunpack.c.0.s8 %v2822
    %v2824 = vlaneseq
    %v2825 = vshrl.u32 %v2824, 7
    %v2826 = vsub.s32 %v2823, %v2825
    %v2827 = vrot.slane %v2129, %v2826
    %v2828 = vcombine.high %v2129, 0.0
    %v2829 = vcombine.low %v2789, %v2805
    %v2830 = vcombine.high %v2789, %v2805
    %v2832 = vunpack.c.l.s4 1934713408
    %v2833 = vunpack.c.0.s8 %v2832
    %v2834 = vlaneseq
    %v2835 = vshrl.u32 %v2834, 7
    %v2836 = vsub.s32 %v2833, %v2835
    %v2837 = vrot.slane %v2829, %v2836
    %v2839 = vunpack.c.l.s4 1934713408
    %v2840 = vunpack.c.0.s8 %v2839
    %v2841 = vlaneseq
    %v2842 = vshrl.u32 %v2841, 7
    %v2843 = vsub.s32 %v2840, %v2842
    %v2844 = vrot.slane %v2830, %v2843
    %v2845 = vcombine.low %v2796, %v2812
    %v2847 = vunpack.c.l.s4 1934713408
    %v2848 = vunpack.c.0.s8 %v2847
    %v2849 = vlaneseq
    %v2850 = vshrl.u32 %v2849, 7
    %v2851 = vsub.s32 %v2848, %v2850
    %v2852 = vrot.slane %v2845, %v2851
    %v2853 = vcombine.low %v2819, %v2827
    %v2854 = vcombine.high %v2819, %v2827
    %v2856 = vunpack.c.l.s4 1934713408
    %v2857 = vunpack.c.0.s8 %v2856
    %v2858 = vlaneseq
    %v2859 = vshrl.u32 %v2858, 7
    %v2860 = vsub.s32 %v2857, %v2859
    %v2861 = vrot.slane %v2853, %v2860
    %v2863 = vunpack.c.l.s4 1934713408
    %v2864 = vunpack.c.0.s8 %v2863
    %v2865 = vlaneseq
    %v2866 = vshrl.u32 %v2865, 7
    %v2867 = vsub.s32 %v2864, %v2866
    %v2868 = vrot.slane %v2854, %v2867
    %v2869 = vcombine.low %v2820, %v2828
    %v2871 = vunpack.c.l.s4 1934713408
    %v2872 = vunpack.c.0.s8 %v2871
    %v2873 = vlaneseq
    %v2874 = vshrl.u32 %v2873, 7
    %v2875 = vsub.s32 %v2872, %v2874
    %v2876 = vrot.slane %v2869, %v2875
    %v2877 = vcombine.low %v2837, %v2861
    %v2878 = vcombine.high %v2837, %v2861
    %v2879 = vcombine.low %v2844, %v2868
    %v2880 = vcombine.high %v2844, %v2868
    %v2881 = vcombine.low %v2852, %v2876
    %v2882 = vcombine.low %v2137, %v2153
    %v2883 = vcombine.high %v2137, %v2153
    %v2885 = vunpack.c.l.s4 1983009808
    %v2886 = vunpack.c.0.s8 %v2885
    %v2887 = vlaneseq
    %v2888 = vshrl.u32 %v2887, 7
    %v2889 = vsub.s32 %v2886, %v2888
    %v2890 = vrot.slane %v2882, %v2889
    %v2892 = vunpack.c.l.s4 1983009808
    %v2893 = vunpack.c.0.s8 %v2892
    %v2894 = vlaneseq
    %v2895 = vshrl.u32 %v2894, 7
    %v2896 = vsub.s32 %v2893, %v2895
    %v2897 = vrot.slane %v2883, %v2896
    %v2898 = vcombine.low %v2145, %v2161
    %v2899 = vcombine.high %v2145, %v2161
    %v2901 = vunpack.c.l.s4 1983009808
    %v2902 = vunpack.c.0.s8 %v2901
    %v2903 = vlaneseq
    %v2904 = vshrl.u32 %v2903, 7
    %v2905 = vsub.s32 %v2902, %v2904
    %v2906 = vrot.slane %v2898, %v2905
    %v2908 = vunpack.c.l.s4 1983009808
    %v2909 = vunpack.c.0.s8 %v2908
    %v2910 = vlaneseq
    %v2911 = vshrl.u32 %v2910, 7
    %v2912 = vsub.s32 %v2909, %v2911
    %v2913 = vrot.slane %v2899, %v2912
    %v2914 = vcombine.low %v2169, %v2185
    %v2915 = vcombine.high %v2169, %v2185
    %v2917 = vunpack.c.l.s4 1983009808
    %v2918 = vunpack.c.0.s8 %v2917
    %v2919 = vlaneseq
    %v2920 = vshrl.u32 %v2919, 7
    %v2921 = vsub.s32 %v2918, %v2920
    %v2922 = vrot.slane %v2914, %v2921
    %v2924 = vunpack.c.l.s4 1983009808
    %v2925 = vunpack.c.0.s8 %v2924
    %v2926 = vlaneseq
    %v2927 = vshrl.u32 %v2926, 7
    %v2928 = vsub.s32 %v2925, %v2927
    %v2929 = vrot.slane %v2915, %v2928
    %v2930 = vcombine.low %v2177, %v2193
    %v2931 = vcombine.high %v2177, %v2193
    %v2933 = vunpack.c.l.s4 1983009808
    %v2934 = vunpack.c.0.s8 %v2933
    %v2935 = vlaneseq
    %v2936 = vshrl.u32 %v2935, 7
    %v2937 = vsub.s32 %v2934, %v2936
    %v2938 = vrot.slane %v2930, %v2937
    %v2940 = vunpack.c.l.s4 1983009808
    %v2941 = vunpack.c.0.s8 %v2940
    %v2942 = vlaneseq
    %v2943 = vshrl.u32 %v2942, 7
    %v2944 = vsub.s32 %v2941, %v2943
    %v2945 = vrot.slane %v2931, %v2944
    %v2946 = vcombine.low %v2890, %v2906
    %v2947 = vcombine.high %v2890, %v2906
    %v2949 = vunpack.c.l.s4 1934713408
    %v2950 = vunpack.c.0.s8 %v2949
    %v2951 = vlaneseq
    %v2952 = vshrl.u32 %v2951, 7
    %v2953 = vsub.s32 %v2950, %v2952
    %v2954 = vrot.slane %v2946, %v2953
    %v2956 = vunpack.c.l.s4 1934713408
    %v2957 = vunpack.c.0.s8 %v2956
    %v2958 = vlaneseq
    %v2959 = vshrl.u32 %v2958, 7
    %v2960 = vsub.s32 %v2957, %v2959
    %v2961 = vrot.slane %v2947, %v2960
    %v2962 = vcombine.low %v2897, %v2913
    %v2964 = vunpack.c.l.s4 1934713408
    %v2965 = vunpack.c.0.s8 %v2964
    %v2966 = vlaneseq
    %v2967 = vshrl.u32 %v2966, 7
    %v2968 = vsub.s32 %v2965, %v2967
    %v2969 = vrot.slane %v2962, %v2968
    %v2970 = vcombine.low %v2922, %v2938
    %v2971 = vcombine.high %v2922, %v2938
    %v2973 = vunpack.c.l.s4 1934713408
    %v2974 = vunpack.c.0.s8 %v2973
    %v2975 = vlaneseq
    %v2976 = vshrl.u32 %v2975, 7
    %v2977 = vsub.s32 %v2974, %v2976
    %v2978 = vrot.slane %v2970, %v2977
    %v2980 = vunpack.c.l.s4 1934713408
    %v2981 = vunpack.c.0.s8 %v2980
    %v2982 = vlaneseq
    %v2983 = vshrl.u32 %v2982, 7
    %v2984 = vsub.s32 %v2981, %v2983
    %v2985 = vrot.slane %v2971, %v2984
    %v2986 = vcombine.low %v2929, %v2945
    %v2988 = vunpack.c.l.s4 1934713408
    %v2989 = vunpack.c.0.s8 %v2988
    %v2990 = vlaneseq
    %v2991 = vshrl.u32 %v2990, 7
    %v2992 = vsub.s32 %v2989, %v2991
    %v2993 = vrot.slane %v2986, %v2992
    %v2994 = vcombine.low %v2954, %v2978
    %v2995 = vcombine.high %v2954, %v2978
    %v2996 = vcombine.low %v2961, %v2985
    %v2997 = vcombine.high %v2961, %v2985
    %v2998 = vcombine.low %v2969, %v2993
    %v2999 = vcombine.low %v2201, %v2217
    %v3000 = vcombine.high %v2201, %v2217
    %v3002 = vunpack.c.l.s4 1983009808
    %v3003 = vunpack.c.0.s8 %v3002
    %v3004 = vlaneseq
    %v3005 = vshrl.u32 %v3004, 7
    %v3006 = vsub.s32 %v3003, %v3005
    %v3007 = vrot.slane %v2999, %v3006
    %v3009 = vunpack.c.l.s4 1983009808
    %v3010 = vunpack.c.0.s8 %v3009
    %v3011 = vlaneseq
    %v3012 = vshrl.u32 %v3011, 7
    %v3013 = vsub.s32 %v3010, %v3012
    %v3014 = vrot.slane %v3000, %v3013
    %v3015 = vcombine.low %v2209, %v2225
    %v3016 = vcombine.high %v2209, %v2225
    %v3018 = vunpack.c.l.s4 1983009808
    %v3019 = vunpack.c.0.s8 %v3018
    %v3020 = vlaneseq
    %v3021 = vshrl.u32 %v3020, 7
    %v3022 = vsub.s32 %v3019, %v3021
    %v3023 = vrot.slane %v3015, %v3022
    %v3025 = vunpack.c.l.s4 1983009808
    %v3026 = vunpack.c.0.s8 %v3025
    %v3027 = vlaneseq
    %v3028 = vshrl.u32 %v3027, 7
    %v3029 = vsub.s32 %v3026, %v3028
    %v3030 = vrot.slane %v3016, %v3029
    %v3031 = vcombine.low %v2233, %v2249
    %v3032 = vcombine.high %v2233, %v2249
    %v3034 = vunpack.c.l.s4 1983009808
    %v3035 = vunpack.c.0.s8 %v3034
    %v3036 = vlaneseq
    %v3037 = vshrl.u32 %v3036, 7
    %v3038 = vsub.s32 %v3035, %v3037
    %v3039 = vrot.slane %v3031, %v3038
    %v3041 = vunpack.c.l.s4 1983009808
    %v3042 = vunpack.c.0.s8 %v3041
    %v3043 = vlaneseq
    %v3044 = vshrl.u32 %v3043, 7
    %v3045 = vsub.s32 %v3042, %v3044
    %v3046 = vrot.slane %v3032, %v3045
    %v3047 = vcombine.low %v2241, %v2257
    %v3048 = vcombine.high %v2241, %v2257
    %v3050 = vunpack.c.l.s4 1983009808
    %v3051 = vunpack.c.0.s8 %v3050
    %v3052 = vlaneseq
    %v3053 = vshrl.u32 %v3052, 7
    %v3054 = vsub.s32 %v3051, %v3053
    %v3055 = vrot.slane %v3047, %v3054
    %v3057 = vunpack.c.l.s4 1983009808
    %v3058 = vunpack.c.0.s8 %v3057
    %v3059 = vlaneseq
    %v3060 = vshrl.u32 %v3059, 7
    %v3061 = vsub.s32 %v3058, %v3060
    %v3062 = vrot.slane %v3048, %v3061
    %v3063 = vcombine.low %v3007, %v3023
    %v3064 = vcombine.high %v3007, %v3023
    %v3066 = vunpack.c.l.s4 1934713408
    %v3067 = vunpack.c.0.s8 %v3066
    %v3068 = vlaneseq
    %v3069 = vshrl.u32 %v3068, 7
    %v3070 = vsub.s32 %v3067, %v3069
    %v3071 = vrot.slane %v3063, %v3070
    %v3073 = vunpack.c.l.s4 1934713408
    %v3074 = vunpack.c.0.s8 %v3073
    %v3075 = vlaneseq
    %v3076 = vshrl.u32 %v3075, 7
    %v3077 = vsub.s32 %v3074, %v3076
    %v3078 = vrot.slane %v3064, %v3077
    %v3079 = vcombine.low %v3014, %v3030
    %v3081 = vunpack.c.l.s4 1934713408
    %v3082 = vunpack.c.0.s8 %v3081
    %v3083 = vlaneseq
    %v3084 = vshrl.u32 %v3083, 7
    %v3085 = vsub.s32 %v3082, %v3084
    %v3086 = vrot.slane %v3079, %v3085
    %v3087 = vcombine.low %v3039, %v3055
    %v3088 = vcombine.high %v3039, %v3055
    %v3090 = vunpack.c.l.s4 1934713408
    %v3091 = vunpack.c.0.s8 %v3090
    %v3092 = vlaneseq
    %v3093 = vshrl.u32 %v3092, 7
    %v3094 = vsub.s32 %v3091, %v3093
    %v3095 = vrot.slane %v3087, %v3094
    %v3097 = vunpack.c.l.s4 1934713408
    %v3098 = vunpack.c.0.s8 %v3097
    %v3099 = vlaneseq
    %v3100 = vshrl.u32 %v3099, 7
    %v3101 = vsub.s32 %v3098, %v3100
    %v3102 = vrot.slane %v3088, %v3101
    %v3103 = vcombine.low %v3046, %v3062
    %v3105 = vunpack.c.l.s4 1934713408
    %v3106 = vunpack.c.0.s8 %v3105
    %v3107 = vlaneseq
    %v3108 = vshrl.u32 %v3107, 7
    %v3109 = vsub.s32 %v3106, %v3108
    %v3110 = vrot.slane %v3103, %v3109
    %v3111 = vcombine.low %v3071, %v3095
    %v3112 = vcombine.high %v3071, %v3095
    %v3113 = vcombine.low %v3078, %v3102
    %v3114 = vcombine.high %v3078, %v3102
    %v3115 = vcombine.low %v3086, %v3110
    %v3116 = vcombine.low %v2265, %v2281
    %v3117 = vcombine.high %v2265, %v2281
    %v3119 = vunpack.c.l.s4 1983009808
    %v3120 = vunpack.c.0.s8 %v3119
    %v3121 = vlaneseq
    %v3122 = vshrl.u32 %v3121, 7
    %v3123 = vsub.s32 %v3120, %v3122
    %v3124 = vrot.slane %v3116, %v3123
    %v3126 = vunpack.c.l.s4 1983009808
    %v3127 = vunpack.c.0.s8 %v3126
    %v3128 = vlaneseq
    %v3129 = vshrl.u32 %v3128, 7
    %v3130 = vsub.s32 %v3127, %v3129
    %v3131 = vrot.slane %v3117, %v3130
    %v3132 = vcombine.low %v2273, %v2289
    %v3133 = vcombine.high %v2273, %v2289
    %v3135 = vunpack.c.l.s4 1983009808
    %v3136 = vunpack.c.0.s8 %v3135
    %v3137 = vlaneseq
    %v3138 = vshrl.u32 %v3137, 7
    %v3139 = vsub.s32 %v3136, %v3138
    %v3140 = vrot.slane %v3132, %v3139
    %v3142 = vunpack.c.l.s4 1983009808
    %v3143 = vunpack.c.0.s8 %v3142
    %v3144 = vlaneseq
    %v3145 = vshrl.u32 %v3144, 7
    %v3146 = vsub.s32 %v3143, %v3145
    %v3147 = vrot.slane %v3133, %v3146
    %v3148 = vcombine.low %v2297, %v2313
    %v3149 = vcombine.high %v2297, %v2313
    %v3151 = vunpack.c.l.s4 1983009808
    %v3152 = vunpack.c.0.s8 %v3151
    %v3153 = vlaneseq
    %v3154 = vshrl.u32 %v3153, 7
    %v3155 = vsub.s32 %v3152, %v3154
    %v3156 = vrot.slane %v3148, %v3155
    %v3158 = vunpack.c.l.s4 1983009808
    %v3159 = vunpack.c.0.s8 %v3158
    %v3160 = vlaneseq
    %v3161 = vshrl.u32 %v3160, 7
    %v3162 = vsub.s32 %v3159, %v3161
    %v3163 = vrot.slane %v3149, %v3162
    %v3164 = vcombine.low %v2305, %v2321
    %v3165 = vcombine.high %v2305, %v2321
    %v3167 = vunpack.c.l.s4 1983009808
    %v3168 = vunpack.c.0.s8 %v3167
    %v3169 = vlaneseq
    %v3170 = vshrl.u32 %v3169, 7
    %v3171 = vsub.s32 %v3168, %v3170
    %v3172 = vrot.slane %v3164, %v3171
    %v3174 = vunpack.c.l.s4 1983009808
    %v3175 = vunpack.c.0.s8 %v3174
    %v3176 = vlaneseq
    %v3177 = vshrl.u32 %v3176, 7
    %v3178 = vsub.s32 %v3175, %v3177
    %v3179 = vrot.slane %v3165, %v3178
    %v3180 = vcombine.low %v3124, %v3140
    %v3181 = vcombine.high %v3124, %v3140
    %v3183 = vunpack.c.l.s4 1934713408
    %v3184 = vunpack.c.0.s8 %v3183
    %v3185 = vlaneseq
    %v3186 = vshrl.u32 %v3185, 7
    %v3187 = vsub.s32 %v3184, %v3186
    %v3188 = vrot.slane %v3180, %v3187
    %v3190 = vunpack.c.l.s4 1934713408
    %v3191 = vunpack.c.0.s8 %v3190
    %v3192 = vlaneseq
    %v3193 = vshrl.u32 %v3192, 7
    %v3194 = vsub.s32 %v3191, %v3193
    %v3195 = vrot.slane %v3181, %v3194
    %v3196 = vcombine.low %v3131, %v3147
    %v3198 = vunpack.c.l.s4 1934713408
    %v3199 = vunpack.c.0.s8 %v3198
    %v3200 = vlaneseq
    %v3201 = vshrl.u32 %v3200, 7
    %v3202 = vsub.s32 %v3199, %v3201
    %v3203 = vrot.slane %v3196, %v3202
    %v3204 = vcombine.low %v3156, %v3172
    %v3205 = vcombine.high %v3156, %v3172
    %v3207 = vunpack.c.l.s4 1934713408
    %v3208 = vunpack.c.0.s8 %v3207
    %v3209 = vlaneseq
    %v3210 = vshrl.u32 %v3209, 7
    %v3211 = vsub.s32 %v3208, %v3210
    %v3212 = vrot.slane %v3204, %v3211
    %v3214 = vunpack.c.l.s4 1934713408
    %v3215 = vunpack.c.0.s8 %v3214
    %v3216 = vlaneseq
    %v3217 = vshrl.u32 %v3216, 7
    %v3218 = vsub.s32 %v3215, %v3217
    %v3219 = vrot.slane %v3205, %v3218
    %v3220 = vcombine.low %v3163, %v3179
    %v3222 = vunpack.c.l.s4 1934713408
    %v3223 = vunpack.c.0.s8 %v3222
    %v3224 = vlaneseq
    %v3225 = vshrl.u32 %v3224, 7
    %v3226 = vsub.s32 %v3223, %v3225
    %v3227 = vrot.slane %v3220, %v3226
    %v3228 = vcombine.low %v3188, %v3212
    %v3229 = vcombine.high %v3188, %v3212
    %v3230 = vcombine.low %v3195, %v3219
    %v3231 = vcombine.high %v3195, %v3219
    %v3232 = vcombine.low %v3203, %v3227
    %v3233 = vcombine.low %v2329, %v2345
    %v3234 = vcombine.high %v2329, %v2345
    %v3236 = vunpack.c.l.s4 1983009808
    %v3237 = vunpack.c.0.s8 %v3236
    %v3238 = vlaneseq
    %v3239 = vshrl.u32 %v3238, 7
    %v3240 = vsub.s32 %v3237, %v3239
    %v3241 = vrot.slane %v3233, %v3240
    %v3243 = vunpack.c.l.s4 1983009808
    %v3244 = vunpack.c.0.s8 %v3243
    %v3245 = vlaneseq
    %v3246 = vshrl.u32 %v3245, 7
    %v3247 = vsub.s32 %v3244, %v3246
    %v3248 = vrot.slane %v3234, %v3247
    %v3249 = vcombine.low %v2337, %v2353
    %v3250 = vcombine.high %v2337, %v2353
    %v3252 = vunpack.c.l.s4 1983009808
    %v3253 = vunpack.c.0.s8 %v3252
    %v3254 = vlaneseq
    %v3255 = vshrl.u32 %v3254, 7
    %v3256 = vsub.s32 %v3253, %v3255
    %v3257 = vrot.slane %v3249, %v3256
    %v3259 = vunpack.c.l.s4 1983009808
    %v3260 = vunpack.c.0.s8 %v3259
    %v3261 = vlaneseq
    %v3262 = vshrl.u32 %v3261, 7
    %v3263 = vsub.s32 %v3260, %v3262
    %v3264 = vrot.slane %v3250, %v3263
    %v3266 = vunpack.c.l.s4 1983009808
    %v3267 = vunpack.c.0.s8 %v3266
    %v3268 = vlaneseq
    %v3269 = vshrl.u32 %v3268, 7
    %v3270 = vsub.s32 %v3267, %v3269
    %v3271 = vrot.slane %v2361, %v3270
    %v3272 = vcombine.high %v2361, 0.0
    %v3274 = vunpack.c.l.s4 1983009808
    %v3275 = vunpack.c.0.s8 %v3274
    %v3276 = vlaneseq
    %v3277 = vshrl.u32 %v3276, 7
    %v3278 = vsub.s32 %v3275, %v3277
    %v3279 = vrot.slane %v2369, %v3278
    %v3280 = vcombine.high %v2369, 0.0
    %v3281 = vcombine.low %v3241, %v3257
    %v3282 = vcombine.high %v3241, %v3257
    %v3284 = vunpack.c.l.s4 1934713408
    %v3285 = vunpack.c.0.s8 %v3284
    %v3286 = vlaneseq
    %v3287 = vshrl.u32 %v3286, 7
    %v3288 = vsub.s32 %v3285, %v3287
    %v3289 = vrot.slane %v3281, %v3288
    %v3291 = vunpack.c.l.s4 1934713408
    %v3292 = vunpack.c.0.s8 %v3291
    %v3293 = vlaneseq
    %v3294 = vshrl.u32 %v3293, 7
    %v3295 = vsub.s32 %v3292, %v3294
    %v3296 = vrot.slane %v3282, %v3295
    %v3297 = vcombine.low %v3248, %v3264
    %v3299 = vunpack.c.l.s4 1934713408
    %v3300 = vunpack.c.0.s8 %v3299
    %v3301 = vlaneseq
    %v3302 = vshrl.u32 %v3301, 7
    %v3303 = vsub.s32 %v3300, %v3302
    %v3304 = vrot.slane %v3297, %v3303
    %v3305 = vcombine.low %v3271, %v3279
    %v3306 = vcombine.high %v3271, %v3279
    %v3308 = vunpack.c.l.s4 1934713408
    %v3309 = vunpack.c.0.s8 %v3308
    %v3310 = vlaneseq
    %v3311 = vshrl.u32 %v3310, 7
    %v3312 = vsub.s32 %v3309, %v3311
    %v3313 = vrot.slane %v3305, %v3312
    %v3315 = vunpack.c.l.s4 1934713408
    %v3316 = vunpack.c.0.s8 %v3315
    %v3317 = vlaneseq
    %v3318 = vshrl.u32 %v3317, 7
    %v3319 = vsub.s32 %v3316, %v3318
    %v3320 = vrot.slane %v3306, %v3319
    %v3321 = vcombine.low %v3272, %v3280
    %v3323 = vunpack.c.l.s4 1934713408
    %v3324 = vunpack.c.0.s8 %v3323
    %v3325 = vlaneseq
    %v3326 = vshrl.u32 %v3325, 7
    %v3327 = vsub.s32 %v3324, %v3326
    %v3328 = vrot.slane %v3321, %v3327
    %v3329 = vcombine.low %v3289, %v3313
    %v3330 = vcombine.high %v3289, %v3313
    %v3331 = vcombine.low %v3296, %v3320
    %v3332 = vcombine.high %v3296, %v3320
    %v3333 = vcombine.low %v3304, %v3328
    %v3334 = vsel %vm282, %v2542, -inf
    %3335 = vmax.xlane.f32.xlu0 %v3334
    %v3336 = vpop.xlane.xlu0 %3335
    %v3337 = vsel %vm282, %v2659, -inf
    %3338 = vmax.xlane.f32.xlu0 %v3337
    %v3339 = vpop.xlane.xlu0 %3338
    %v3340 = vsel %vm282, %v2776, -inf
    %3341 = vmax.xlane.f32.xlu0 %v3340
    %v3342 = vpop.xlane.xlu0 %3341
    %vm3343 = vcmask 62464
    %v3344 = vsel %vm3343, %v2877, -inf
    %3345 = vmax.xlane.f32.xlu0 %v3344
    %v3346 = vpop.xlane.xlu0 %3345
    %v3347 = vsel %vm282, %v2543, -inf
    %3348 = vmax.xlane.f32.xlu0 %v3347
    %v3349 = vpop.xlane.xlu0 %3348
    %v3350 = vsel %vm282, %v2660, -inf
    %3351 = vmax.xlane.f32.xlu0 %v3350
    %v3352 = vpop.xlane.xlu0 %3351
    %v3353 = vsel %vm282, %v2777, -inf
    %3354 = vmax.xlane.f32.xlu0 %v3353
    %v3355 = vpop.xlane.xlu0 %3354
    %v3356 = vsel %vm3343, %v2878, -inf
    %3357 = vmax.xlane.f32.xlu0 %v3356
    %v3358 = vpop.xlane.xlu0 %3357
    %v3359 = vsel %vm282, %v2544, -inf
    %3360 = vmax.xlane.f32.xlu0 %v3359
    %v3361 = vpop.xlane.xlu0 %3360
    %v3362 = vsel %vm282, %v2661, -inf
    %3363 = vmax.xlane.f32.xlu0 %v3362
    %v3364 = vpop.xlane.xlu0 %3363
    %v3365 = vsel %vm282, %v2778, -inf
    %3366 = vmax.xlane.f32.xlu0 %v3365
    %v3367 = vpop.xlane.xlu0 %3366
    %v3368 = vsel %vm3343, %v2879, -inf
    %3369 = vmax.xlane.f32.xlu0 %v3368
    %v3370 = vpop.xlane.xlu0 %3369
    %v3371 = vsel %vm282, %v2545, -inf
    %3372 = vmax.xlane.f32.xlu0 %v3371
    %v3373 = vpop.xlane.xlu0 %3372
    %v3374 = vsel %vm282, %v2662, -inf
    %3375 = vmax.xlane.f32.xlu0 %v3374
    %v3376 = vpop.xlane.xlu0 %3375
    %v3377 = vsel %vm282, %v2779, -inf
    %3378 = vmax.xlane.f32.xlu0 %v3377
    %v3379 = vpop.xlane.xlu0 %3378
    %v3380 = vsel %vm3343, %v2880, -inf
    %3381 = vmax.xlane.f32.xlu0 %v3380
    %v3382 = vpop.xlane.xlu0 %3381
    %v3383 = vsel %vm282, %v2546, -inf
    %3384 = vmax.xlane.f32.xlu0 %v3383
    %v3385 = vpop.xlane.xlu0 %3384
    %v3386 = vsel %vm282, %v2663, -inf
    %3387 = vmax.xlane.f32.xlu0 %v3386
    %v3388 = vpop.xlane.xlu0 %3387
    %v3389 = vsel %vm282, %v2780, -inf
    %3390 = vmax.xlane.f32.xlu0 %v3389
    %v3391 = vpop.xlane.xlu0 %3390
    %v3392 = vsel %vm3343, %v2881, -inf
    %3393 = vmax.xlane.f32.xlu0 %v3392
    %v3394 = vpop.xlane.xlu0 %3393
    %v3395 = vsel %vm282, %v2994, -inf
    %3396 = vmax.xlane.f32.xlu0 %v3395
    %v3397 = vpop.xlane.xlu0 %3396
    %v3398 = vsel %vm282, %v3111, -inf
    %3399 = vmax.xlane.f32.xlu0 %v3398
    %v3400 = vpop.xlane.xlu0 %3399
    %v3401 = vsel %vm282, %v3228, -inf
    %3402 = vmax.xlane.f32.xlu0 %v3401
    %v3403 = vpop.xlane.xlu0 %3402
    %v3404 = vsel %vm3343, %v3329, -inf
    %3405 = vmax.xlane.f32.xlu0 %v3404
    %v3406 = vpop.xlane.xlu0 %3405
    %v3407 = vsel %vm282, %v2995, -inf
    %3408 = vmax.xlane.f32.xlu0 %v3407
    %v3409 = vpop.xlane.xlu0 %3408
    %v3410 = vsel %vm282, %v3112, -inf
    %3411 = vmax.xlane.f32.xlu0 %v3410
    %v3412 = vpop.xlane.xlu0 %3411
    %v3413 = vsel %vm282, %v3229, -inf
    %3414 = vmax.xlane.f32.xlu0 %v3413
    %v3415 = vpop.xlane.xlu0 %3414
    %v3416 = vsel %vm3343, %v3330, -inf
    %3417 = vmax.xlane.f32.xlu0 %v3416
    %v3418 = vpop.xlane.xlu0 %3417
    %v3419 = vsel %vm282, %v2996, -inf
    %3420 = vmax.xlane.f32.xlu0 %v3419
    %v3421 = vpop.xlane.xlu0 %3420
    %v3422 = vsel %vm282, %v3113, -inf
    %3423 = vmax.xlane.f32.xlu0 %v3422
    %v3424 = vpop.xlane.xlu0 %3423
    %v3425 = vsel %vm282, %v3230, -inf
    %3426 = vmax.xlane.f32.xlu0 %v3425
    %v3427 = vpop.xlane.xlu0 %3426
    %v3428 = vsel %vm3343, %v3331, -inf
    %3429 = vmax.xlane.f32.xlu0 %v3428
    %v3430 = vpop.xlane.xlu0 %3429
    %v3431 = vsel %vm282, %v2997, -inf
    %3432 = vmax.xlane.f32.xlu0 %v3431
    %v3433 = vpop.xlane.xlu0 %3432
    %v3434 = vsel %vm282, %v3114, -inf
    %3435 = vmax.xlane.f32.xlu0 %v3434
    %v3436 = vpop.xlane.xlu0 %3435
    %v3437 = vsel %vm282, %v3231, -inf
    %3438 = vmax.xlane.f32.xlu0 %v3437
    %v3439 = vpop.xlane.xlu0 %3438
    %v3440 = vsel %vm3343, %v3332, -inf
    %3441 = vmax.xlane.f32.xlu0 %v3440
    %v3442 = vpop.xlane.xlu0 %3441
    %v3443 = vsel %vm282, %v2998, -inf
    %3444 = vmax.xlane.f32.xlu0 %v3443
    %v3445 = vpop.xlane.xlu0 %3444
    %v3446 = vsel %vm282, %v3115, -inf
    %3447 = vmax.xlane.f32.xlu0 %v3446
    %v3448 = vpop.xlane.xlu0 %3447
    %v3449 = vsel %vm282, %v3232, -inf
    %3450 = vmax.xlane.f32.xlu0 %v3449
    %v3451 = vpop.xlane.xlu0 %3450
    %v3452 = vsel %vm3343, %v3333, -inf
    %3453 = vmax.xlane.f32.xlu0 %v3452
    %v3454 = vpop.xlane.xlu0 %3453
    %v3495 = vlaneseq
    %v3496 = vand.u32 %v3495, 127
    %v3497 = vlaneseq
    %v3498 = vshrl.u32 %v3497, 7
    %v3499 = vsub.s32 %v3496, %v3498
    %v3500 = vrot.slane %v3336, %v3499
    %v3501 = vadd.s32 %v3496, 4294967288
    %v3502 = vlaneseq
    %v3503 = vshrl.u32 %v3502, 7
    %v3504 = vsub.s32 %v3501, %v3503
    %v3505 = vrot.slane %v3339, %v3504
    %vm3506 = vcmask 130112
    %v3507 = vsel %vm3506, %v3505, %v3500
    %v3508 = vadd.s32 %v3496, 4294967280
    %v3509 = vlaneseq
    %v3510 = vshrl.u32 %v3509, 7
    %v3511 = vsub.s32 %v3508, %v3510
    %v3512 = vrot.slane %v3342, %v3511
    %vm3513 = vcmask 195712
    %v3514 = vsel %vm3513, %v3512, %v3507
    %v3515 = vadd.s32 %v3496, 4294967272
    %v3516 = vlaneseq
    %v3517 = vshrl.u32 %v3516, 7
    %v3518 = vsub.s32 %v3515, %v3517
    %v3519 = vrot.slane %v3346, %v3518
    %vm3520 = vcmask 261312
    %v3521 = vsel %vm3520, %v3519, %v3514
    %v3522 = vlaneseq
    %v3523 = vshrl.u32 %v3522, 7
    %v3524 = vsub.s32 %v3496, %v3523
    %v3525 = vrot.slane %v3349, %v3524
    %v3526 = vlaneseq
    %v3527 = vshrl.u32 %v3526, 7
    %v3528 = vsub.s32 %v3501, %v3527
    %v3529 = vrot.slane %v3352, %v3528
    %v3530 = vsel %vm3506, %v3529, %v3525
    %v3531 = vlaneseq
    %v3532 = vshrl.u32 %v3531, 7
    %v3533 = vsub.s32 %v3508, %v3532
    %v3534 = vrot.slane %v3355, %v3533
    %v3535 = vsel %vm3513, %v3534, %v3530
    %v3536 = vlaneseq
    %v3537 = vshrl.u32 %v3536, 7
    %v3538 = vsub.s32 %v3515, %v3537
    %v3539 = vrot.slane %v3358, %v3538
    %v3540 = vsel %vm3520, %v3539, %v3535
    %v3541 = vlaneseq
    %v3542 = vshrl.u32 %v3541, 7
    %v3543 = vsub.s32 %v3496, %v3542
    %v3544 = vrot.slane %v3361, %v3543
    %v3545 = vlaneseq
    %v3546 = vshrl.u32 %v3545, 7
    %v3547 = vsub.s32 %v3501, %v3546
    %v3548 = vrot.slane %v3364, %v3547
    %v3549 = vsel %vm3506, %v3548, %v3544
    %v3550 = vlaneseq
    %v3551 = vshrl.u32 %v3550, 7
    %v3552 = vsub.s32 %v3508, %v3551
    %v3553 = vrot.slane %v3367, %v3552
    %v3554 = vsel %vm3513, %v3553, %v3549
    %v3555 = vlaneseq
    %v3556 = vshrl.u32 %v3555, 7
    %v3557 = vsub.s32 %v3515, %v3556
    %v3558 = vrot.slane %v3370, %v3557
    %v3559 = vsel %vm3520, %v3558, %v3554
    %v3560 = vlaneseq
    %v3561 = vshrl.u32 %v3560, 7
    %v3562 = vsub.s32 %v3496, %v3561
    %v3563 = vrot.slane %v3373, %v3562
    %v3564 = vlaneseq
    %v3565 = vshrl.u32 %v3564, 7
    %v3566 = vsub.s32 %v3501, %v3565
    %v3567 = vrot.slane %v3376, %v3566
    %v3568 = vsel %vm3506, %v3567, %v3563
    %v3569 = vlaneseq
    %v3570 = vshrl.u32 %v3569, 7
    %v3571 = vsub.s32 %v3508, %v3570
    %v3572 = vrot.slane %v3379, %v3571
    %v3573 = vsel %vm3513, %v3572, %v3568
    %v3574 = vlaneseq
    %v3575 = vshrl.u32 %v3574, 7
    %v3576 = vsub.s32 %v3515, %v3575
    %v3577 = vrot.slane %v3382, %v3576
    %v3578 = vsel %vm3520, %v3577, %v3573
    %v3579 = vlaneseq
    %v3580 = vshrl.u32 %v3579, 7
    %v3581 = vsub.s32 %v3496, %v3580
    %v3582 = vrot.slane %v3385, %v3581
    %v3583 = vlaneseq
    %v3584 = vshrl.u32 %v3583, 7
    %v3585 = vsub.s32 %v3501, %v3584
    %v3586 = vrot.slane %v3388, %v3585
    %v3587 = vsel %vm3506, %v3586, %v3582
    %v3588 = vlaneseq
    %v3589 = vshrl.u32 %v3588, 7
    %v3590 = vsub.s32 %v3508, %v3589
    %v3591 = vrot.slane %v3391, %v3590
    %v3592 = vsel %vm3513, %v3591, %v3587
    %v3593 = vlaneseq
    %v3594 = vshrl.u32 %v3593, 7
    %v3595 = vsub.s32 %v3515, %v3594
    %v3596 = vrot.slane %v3394, %v3595
    %v3597 = vsel %vm3520, %v3596, %v3592
    %v3598 = vlaneseq
    %v3599 = vshrl.u32 %v3598, 7
    %v3600 = vsub.s32 %v3496, %v3599
    %v3601 = vrot.slane %v3397, %v3600
    %v3602 = vlaneseq
    %v3603 = vshrl.u32 %v3602, 7
    %v3604 = vsub.s32 %v3501, %v3603
    %v3605 = vrot.slane %v3400, %v3604
    %v3606 = vsel %vm3506, %v3605, %v3601
    %v3607 = vlaneseq
    %v3608 = vshrl.u32 %v3607, 7
    %v3609 = vsub.s32 %v3508, %v3608
    %v3610 = vrot.slane %v3403, %v3609
    %v3611 = vsel %vm3513, %v3610, %v3606
    %v3612 = vlaneseq
    %v3613 = vshrl.u32 %v3612, 7
    %v3614 = vsub.s32 %v3515, %v3613
    %v3615 = vrot.slane %v3406, %v3614
    %v3616 = vsel %vm3520, %v3615, %v3611
    %v3617 = vlaneseq
    %v3618 = vshrl.u32 %v3617, 7
    %v3619 = vsub.s32 %v3496, %v3618
    %v3620 = vrot.slane %v3409, %v3619
    %v3621 = vlaneseq
    %v3622 = vshrl.u32 %v3621, 7
    %v3623 = vsub.s32 %v3501, %v3622
    %v3624 = vrot.slane %v3412, %v3623
    %v3625 = vsel %vm3506, %v3624, %v3620
    %v3626 = vlaneseq
    %v3627 = vshrl.u32 %v3626, 7
    %v3628 = vsub.s32 %v3508, %v3627
    %v3629 = vrot.slane %v3415, %v3628
    %v3630 = vsel %vm3513, %v3629, %v3625
    %v3631 = vlaneseq
    %v3632 = vshrl.u32 %v3631, 7
    %v3633 = vsub.s32 %v3515, %v3632
    %v3634 = vrot.slane %v3418, %v3633
    %v3635 = vsel %vm3520, %v3634, %v3630
    %v3636 = vlaneseq
    %v3637 = vshrl.u32 %v3636, 7
    %v3638 = vsub.s32 %v3496, %v3637
    %v3639 = vrot.slane %v3421, %v3638
    %v3640 = vlaneseq
    %v3641 = vshrl.u32 %v3640, 7
    %v3642 = vsub.s32 %v3501, %v3641
    %v3643 = vrot.slane %v3424, %v3642
    %v3644 = vsel %vm3506, %v3643, %v3639
    %v3645 = vlaneseq
    %v3646 = vshrl.u32 %v3645, 7
    %v3647 = vsub.s32 %v3508, %v3646
    %v3648 = vrot.slane %v3427, %v3647
    %v3649 = vsel %vm3513, %v3648, %v3644
    %v3650 = vlaneseq
    %v3651 = vshrl.u32 %v3650, 7
    %v3652 = vsub.s32 %v3515, %v3651
    %v3653 = vrot.slane %v3430, %v3652
    %v3654 = vsel %vm3520, %v3653, %v3649
    %v3655 = vlaneseq
    %v3656 = vshrl.u32 %v3655, 7
    %v3657 = vsub.s32 %v3496, %v3656
    %v3658 = vrot.slane %v3433, %v3657
    %v3659 = vlaneseq
    %v3660 = vshrl.u32 %v3659, 7
    %v3661 = vsub.s32 %v3501, %v3660
    %v3662 = vrot.slane %v3436, %v3661
    %v3663 = vsel %vm3506, %v3662, %v3658
    %v3664 = vlaneseq
    %v3665 = vshrl.u32 %v3664, 7
    %v3666 = vsub.s32 %v3508, %v3665
    %v3667 = vrot.slane %v3439, %v3666
    %v3668 = vsel %vm3513, %v3667, %v3663
    %v3669 = vlaneseq
    %v3670 = vshrl.u32 %v3669, 7
    %v3671 = vsub.s32 %v3515, %v3670
    %v3672 = vrot.slane %v3442, %v3671
    %v3673 = vsel %vm3520, %v3672, %v3668
    %v3674 = vlaneseq
    %v3675 = vshrl.u32 %v3674, 7
    %v3676 = vsub.s32 %v3496, %v3675
    %v3677 = vrot.slane %v3445, %v3676
    %v3678 = vlaneseq
    %v3679 = vshrl.u32 %v3678, 7
    %v3680 = vsub.s32 %v3501, %v3679
    %v3681 = vrot.slane %v3448, %v3680
    %v3682 = vsel %vm3506, %v3681, %v3677
    %v3683 = vlaneseq
    %v3684 = vshrl.u32 %v3683, 7
    %v3685 = vsub.s32 %v3508, %v3684
    %v3686 = vrot.slane %v3451, %v3685
    %v3687 = vsel %vm3513, %v3686, %v3682
    %v3688 = vlaneseq
    %v3689 = vshrl.u32 %v3688, 7
    %v3690 = vsub.s32 %v3515, %v3689
    %v3691 = vrot.slane %v3454, %v3690
    %v3692 = vsel %vm3520, %v3691, %v3687
    %v3693 = vsel %vm1887, %v3540, %v3521
    %v3694 = vsel %vm1890, %v3559, %v3693
    %v3695 = vsel %vm1893, %v3578, %v3694
    %v3696 = vsel %vm1896, %v3597, %v3695
    %v3697 = vsel %vm1887, %v3635, %v3616
    %v3698 = vsel %vm1890, %v3654, %v3697
    %v3699 = vsel %vm1893, %v3673, %v3698
    %v3700 = vsel %vm1896, %v3692, %v3699
    %v3704 = vunpack.c.l.s4 1983009808
    %v3705 = vunpack.c.0.s8 %v3704
    %v3706 = vlaneseq
    %v3707 = vshrl.u32 %v3706, 7
    %v3708 = vsub.s32 %v3705, %v3707
    %v3709 = vrot.slane %v3696, %v3708
    %v3710 = vcombine.high %v3696, 0.0
    %v3712 = vunpack.c.l.s4 1983009808
    %v3713 = vunpack.c.0.s8 %v3712
    %v3714 = vlaneseq
    %v3715 = vshrl.u32 %v3714, 7
    %v3716 = vsub.s32 %v3713, %v3715
    %v3717 = vrot.slane %v3700, %v3716
    %v3718 = vcombine.high %v3700, 0.0
    %v3719 = vcombine.low %v3709, %v3717
    %v3720 = vcombine.high %v3709, %v3717
    %v3722 = vunpack.c.l.s4 1934713408
    %v3723 = vunpack.c.0.s8 %v3722
    %v3724 = vlaneseq
    %v3725 = vshrl.u32 %v3724, 7
    %v3726 = vsub.s32 %v3723, %v3725
    %v3727 = vrot.slane %v3719, %v3726
    %v3729 = vunpack.c.l.s4 1934713408
    %v3730 = vunpack.c.0.s8 %v3729
    %v3731 = vlaneseq
    %v3732 = vshrl.u32 %v3731, 7
    %v3733 = vsub.s32 %v3730, %v3732
    %v3734 = vrot.slane %v3720, %v3733
    %v3735 = vcombine.low %v3710, %v3718
    %v3736 = vcombine.high %v3727, 0.0
    %v3737 = vcombine.high %v3734, 0.0
    %v3739 = vunpack.c.l.s4 1934713408
    %v3740 = vunpack.c.0.s8 %v3739
    %v3741 = vlaneseq
    %v3742 = vshrl.u32 %v3741, 7
    %v3743 = vsub.s32 %v3740, %v3742
    %v3744 = vrot.slane %v3735, %v3743
    %3746 = vrot.lane.b32.xlu0 %v3736, 30
    %v3747 = vpop.permute.xlu0 %3746
    %3750 = vrot.lane.b32.xlu0 %v3734, 60
    %v3751 = vpop.permute.xlu0 %3750
    %3754 = vrot.lane.b32.xlu0 %v3737, 90
    %v3755 = vpop.permute.xlu0 %3754
    %3758 = vrot.lane.b32.xlu0 %v3744, 120
    %v3759 = vpop.permute.xlu0 %3758
    %vm3761 = vcmask 244736
    %v3762 = vsel %vm3761, %v3727, %v3747
    %vm3763 = vcmask 490496
    %v3764 = vsel %vm3763, %v3762, %v3751
    %vm3765 = vcmask 736256
    %v3766 = vsel %vm3765, %v3764, %v3755
    %vm3767 = vcmask 982016
    %v3768 = vsel %vm3767, %v3766, %v3759
    %v3769 = vld [vmem:[%s3] sm:$0xff]
    %v3770 = vld [vmem:[%s3 + $0x8] sm:$0xff]
    %v3771 = vld [vmem:[%s3 + $0x10] sm:$0xff]
    %v3772 = vld [vmem:[%s3 + $0x18] sm:$0xff]
    %v3773 = vld [vmem:[%s3 + $0x20] sm:$0xff]
    %v3774 = vld [vmem:[%s3 + $0x28] sm:$0xff]
    %v3775 = vld [vmem:[%s3 + $0x30] sm:$0xff]
    %v3776 = vld [vmem:[%s3 + $0x38] sm:$0xff]
    %v3777 = vld [vmem:[%s3 + $0x40] sm:$0xff]
    %v3778 = vld [vmem:[%s3 + $0x48] sm:$0xff]
    %v3779 = vld [vmem:[%s3 + $0x50] sm:$0xff]
    %v3780 = vld [vmem:[%s3 + $0x58] sm:$0xff]
    %v3781 = vld [vmem:[%s3 + $0x60] sm:$0xff]
    %v3782 = vld [vmem:[%s3 + $0x68] sm:$0xff]
    %v3783 = vld [vmem:[%s3 + $0x70] sm:$0xff]
    %v3784 = vld [vmem:[%s3 + $0x78] sm:$0xff]
    %v3785 = vld [vmem:[%s3 + $0x80] sm:$0xff]
    %v3786 = vld [vmem:[%s3 + $0x88] sm:$0xff]
    %v3787 = vld [vmem:[%s3 + $0x90] sm:$0x3f]
    %v3788 = vld [vmem:[%s4] sm:$0x1]
    %v3790 = vlaneseq
    %v3791 = vshrl.u32 %v3790, 7
    %v3792 = vsub.s32 0, %v3791
    %v3793 = vrot.slane %v3788, %v3792
    %vm3795 = vcmask 179200
    %v3796 = vsel %vm3795, %v3759, 0
    %v3799 = vsel %vm197, %v3787, 0
    %3801 = vmatprep.subr.mxu0 0.0
    %3802 = vmatpush1.msra.mxu0 %v3769
    %3803 = vmatprep.subr.mxu0 0.0
    %3804 = vmatpush1.msra.mxu0 %v3770
    %3805 = vmatprep.subr.mxu0 0.0
    %3806 = vmatpush1.msra.mxu0 %v3771
    %3807 = vmatprep.subr.mxu0 0.0
    %3808 = vmatpush1.msra.mxu0 %v3772
    %3809 = vmatprep.subr.mxu0 0.0
    %3810 = vmatpush1.msra.mxu0 %v3773
    %3811 = vmatprep.subr.mxu0 0.0
    %3812 = vmatpush1.msra.mxu0 %v3774
    %3813 = vmatprep.subr.mxu0 0.0
    %3814 = vmatpush1.msra.mxu0 %v3775
    %3815 = vmatprep.subr.mxu0 0.0
    %3816 = vmatpush1.msra.mxu0 %v3776
    %3817 = vmatprep.subr.mxu0 0.0
    %3818 = vmatpush1.msra.mxu0 %v3777
    %3819 = vmatprep.subr.mxu0 0.0
    %3820 = vmatpush1.msra.mxu0 %v3778
    %3821 = vmatprep.subr.mxu0 0.0
    %3822 = vmatpush1.msra.mxu0 %v3779
    %3823 = vmatprep.subr.mxu0 0.0
    %3824 = vmatpush1.msra.mxu0 %v3780
    %3825 = vmatprep.subr.mxu0 0.0
    %3826 = vmatpush1.msra.mxu0 %v3781
    %3827 = vmatprep.subr.mxu0 0.0
    %3828 = vmatpush1.msra.mxu0 %v3782
    %3829 = vmatprep.subr.mxu0 0.0
    %3830 = vmatpush1.msra.mxu0 %v3783
    %3831 = vmatprep.subr.mxu0 0.0
    %3832 = vmatpush1.msra.mxu0 %v3784
    %3833 = vmatprep.subr.mxu0 0.0
    %3834 = vmatpush1.msra.mxu0 %v3785
    %3835 = vmatprep.subr.mxu0 0.0
    %3836 = vmatpush1.msra.mxu0 %v3786
    %3837 = vmatprep.subr.mxu0 0.0
    %3838 = vmatpush1.msra.mxu0 %v3799
    %3839 = vmatprep.subr.mxu0 0.0
    %3840 = vmatpush1.msra.mxu0 0.0
    %3841 = vmatprep.subr.mxu0 0.0
    %3842 = vmatpush1.msra.mxu0 0.0
    %3843 = vmatprep.subr.mxu0 0.0
    %3844 = vmatpush1.msra.mxu0 0.0
    %3845 = vmatprep.subr.mxu0 0.0
    %3846 = vmatpush1.msra.mxu0 0.0
    %3847 = vmatprep.subr.mxu0 0.0
    %3848 = vmatpush1.msra.mxu0 0.0
    %3849 = vmatprep.subr.mxu0 0.0
    %3850 = vmatpush1.msra.mxu0 0.0
    %3851 = vmatprep.subr.mxu0 0.0
    %3852 = vmatpush1.msra.mxu0 0.0
    %3853 = vmatprep.subr.mxu0 0.0
    %3854 = vmatpush1.msra.mxu0 0.0
    %3855 = vmatprep.subr.mxu0 0.0
    %3856 = vmatpush1.msra.mxu0 0.0
    %3857 = vmatprep.subr.mxu0 0.0
    %3858 = vmatpush1.msra.mxu0 0.0
    %3859 = vmatprep.subr.mxu0 0.0
    %3860 = vmatpush1.msra.mxu0 0.0
    %3861 = vmatprep.subr.mxu0 0.0
    %3862 = vmatpush1.msra.mxu0 0.0
    %3863 = vmatprep.subr.mxu0 0.0
    %3864 = vmatpush1.msra.mxu0 0.0
    %3865 = vmatprep.mubr.f32.mxu0 %v3796
    %3866 = vmatmul.mubr.f32.gmra.mrb[0].mxu0 %v3768
    %v3867 = vpop.f32.mrb[0].mxu0
    %v3868 = vadd.f32 %v3793, %v3867
    %v3869 = vpop.f32.mrb[0].mxu0
    %3870 = vdwg.mxu0
    %v3871 = vmax.f32 %v3868, 0.0
    %v3872 = vld [vmem:[%s5] sm:$0xff]
    %v3873 = vld [vmem:[%s5 + $0x8] sm:$0xff]
    %v3874 = vld [vmem:[%s5 + $0x10] sm:$0xff]
    %v3875 = vld [vmem:[%s5 + $0x18] sm:$0xff]
    %v3876 = vld [vmem:[%s5 + $0x20] sm:$0xff]
    %v3877 = vld [vmem:[%s5 + $0x28] sm:$0xff]
    %v3878 = vld [vmem:[%s5 + $0x30] sm:$0xff]
    %v3879 = vld [vmem:[%s5 + $0x38] sm:$0xff]
    %v3880 = vld [vmem:[%s5 + $0x40] sm:$0xff]
    %v3881 = vld [vmem:[%s5 + $0x48] sm:$0xff]
    %v3882 = vld [vmem:[%s5 + $0x50] sm:$0xff]
    %v3883 = vld [vmem:[%s5 + $0x58] sm:$0xff]
    %v3884 = vld [vmem:[%s5 + $0x60] sm:$0xff]
    %v3885 = vld [vmem:[%s5 + $0x68] sm:$0xff]
    %v3886 = vld [vmem:[%s5 + $0x70] sm:$0xff]
    %v3887 = vld [vmem:[%s5 + $0x78] sm:$0xff]
    %v3888 = vld [vmem:[%s6] sm:$0x1]
    %v3890 = vlaneseq
    %v3891 = vshrl.u32 %v3890, 7
    %v3892 = vsub.s32 0, %v3891
    %v3893 = vrot.slane %v3888, %v3892
    %3895 = vmatprep.subr.mxu0 0.0
    %3896 = vmatpush1.msra.mxu0 %v3872
    %3897 = vmatprep.subr.mxu0 0.0
    %3898 = vmatpush1.msra.mxu0 %v3873
    %3899 = vmatprep.subr.mxu0 0.0
    %3900 = vmatpush1.msra.mxu0 %v3874
    %3901 = vmatprep.subr.mxu0 0.0
    %3902 = vmatpush1.msra.mxu0 %v3875
    %3903 = vmatprep.subr.mxu0 0.0
    %3904 = vmatpush1.msra.mxu0 %v3876
    %3905 = vmatprep.subr.mxu0 0.0
    %3906 = vmatpush1.msra.mxu0 %v3877
    %3907 = vmatprep.subr.mxu0 0.0
    %3908 = vmatpush1.msra.mxu0 %v3878
    %3909 = vmatprep.subr.mxu0 0.0
    %3910 = vmatpush1.msra.mxu0 %v3879
    %3911 = vmatprep.subr.mxu0 0.0
    %3912 = vmatpush1.msra.mxu0 %v3880
    %3913 = vmatprep.subr.mxu0 0.0
    %3914 = vmatpush1.msra.mxu0 %v3881
    %3915 = vmatprep.subr.mxu0 0.0
    %3916 = vmatpush1.msra.mxu0 %v3882
    %3917 = vmatprep.subr.mxu0 0.0
    %3918 = vmatpush1.msra.mxu0 %v3883
    %3919 = vmatprep.subr.mxu0 0.0
    %3920 = vmatpush1.msra.mxu0 %v3884
    %3921 = vmatprep.subr.mxu0 0.0
    %3922 = vmatpush1.msra.mxu0 %v3885
    %3923 = vmatprep.subr.mxu0 0.0
    %3924 = vmatpush1.msra.mxu0 %v3886
    %3925 = vmatprep.subr.mxu0 0.0
    %3926 = vmatpush1.msra.mxu0 %v3887
    %3927 = vmatprep.subr.mxu0 0.0
    %3928 = vmatpush1.msra.mxu0 0.0
    %3929 = vmatprep.subr.mxu0 0.0
    %3930 = vmatpush1.msra.mxu0 0.0
    %3931 = vmatprep.subr.mxu0 0.0
    %3932 = vmatpush1.msra.mxu0 0.0
    %3933 = vmatprep.subr.mxu0 0.0
    %3934 = vmatpush1.msra.mxu0 0.0
    %3935 = vmatprep.subr.mxu0 0.0
    %3936 = vmatpush1.msra.mxu0 0.0
    %3937 = vmatprep.subr.mxu0 0.0
    %3938 = vmatpush1.msra.mxu0 0.0
    %3939 = vmatprep.subr.mxu0 0.0
    %3940 = vmatpush1.msra.mxu0 0.0
    %3941 = vmatprep.subr.mxu0 0.0
    %3942 = vmatpush1.msra.mxu0 0.0
    %3943 = vmatprep.subr.mxu0 0.0
    %3944 = vmatpush1.msra.mxu0 0.0
    %3945 = vmatprep.subr.mxu0 0.0
    %3946 = vmatpush1.msra.mxu0 0.0
    %3947 = vmatprep.subr.mxu0 0.0
    %3948 = vmatpush1.msra.mxu0 0.0
    %3949 = vmatprep.subr.mxu0 0.0
    %3950 = vmatpush1.msra.mxu0 0.0
    %3951 = vmatprep.subr.mxu0 0.0
    %3952 = vmatpush1.msra.mxu0 0.0
    %3953 = vmatprep.subr.mxu0 0.0
    %3954 = vmatpush1.msra.mxu0 0.0
    %3955 = vmatprep.subr.mxu0 0.0
    %3956 = vmatpush1.msra.mxu0 0.0
    %3957 = vmatprep.subr.mxu0 0.0
    %3958 = vmatpush1.msra.mxu0 0.0
    %3959 = vmatprep.mubr.f32.mxu0 0.0
    %3960 = vmatmul.mubr.f32.gmra.mrb[0].mxu0 %v3871
    %v3961 = vpop.f32.mrb[0].mxu0
    %v3962 = vadd.f32 %v3893, %v3961
    %v3963 = vpop.f32.mrb[0].mxu0
    %3964 = vdwg.mxu0
    %v3965 = vmax.f32 %v3962, 0.0
    %v3966 = vld [vmem:[%s7] sm:$0xff]
    %v3967 = vld [vmem:[%s7 + $0x8] sm:$0xff]
    %v3968 = vld [vmem:[%s7 + $0x10] sm:$0xff]
    %v3969 = vld [vmem:[%s7 + $0x18] sm:$0xff]
    %v3970 = vld [vmem:[%s7 + $0x20] sm:$0xff]
    %v3971 = vld [vmem:[%s7 + $0x28] sm:$0xff]
    %v3972 = vld [vmem:[%s7 + $0x30] sm:$0xff]
    %v3973 = vld [vmem:[%s7 + $0x38] sm:$0xff]
    %v3974 = vld [vmem:[%s7 + $0x40] sm:$0xff]
    %v3975 = vld [vmem:[%s7 + $0x48] sm:$0xff]
    %v3976 = vld [vmem:[%s7 + $0x50] sm:$0xff]
    %v3977 = vld [vmem:[%s7 + $0x58] sm:$0xff]
    %v3978 = vld [vmem:[%s7 + $0x60] sm:$0xff]
    %v3979 = vld [vmem:[%s7 + $0x68] sm:$0xff]
    %v3980 = vld [vmem:[%s7 + $0x70] sm:$0xff]
    %v3981 = vld [vmem:[%s7 + $0x78] sm:$0xff]
    %v3982 = vld [vmem:[%s8] sm:$0x1]
    %v3984 = vlaneseq
    %v3985 = vshrl.u32 %v3984, 7
    %v3986 = vsub.s32 0, %v3985
    %v3987 = vrot.slane %v3982, %v3986
    %3989 = vmatprep.subr.mxu0 0.0
    %3990 = vmatpush1.msra.mxu0 %v3966
    %3991 = vmatprep.subr.mxu0 0.0
    %3992 = vmatpush1.msra.mxu0 %v3967
    %3993 = vmatprep.subr.mxu0 0.0
    %3994 = vmatpush1.msra.mxu0 %v3968
    %3995 = vmatprep.subr.mxu0 0.0
    %3996 = vmatpush1.msra.mxu0 %v3969
    %3997 = vmatprep.subr.mxu0 0.0
    %3998 = vmatpush1.msra.mxu0 %v3970
    %3999 = vmatprep.subr.mxu0 0.0
    %4000 = vmatpush1.msra.mxu0 %v3971
    %4001 = vmatprep.subr.mxu0 0.0
    %4002 = vmatpush1.msra.mxu0 %v3972
    %4003 = vmatprep.subr.mxu0 0.0
    %4004 = vmatpush1.msra.mxu0 %v3973
    %4005 = vmatprep.subr.mxu0 0.0
    %4006 = vmatpush1.msra.mxu0 %v3974
    %4007 = vmatprep.subr.mxu0 0.0
    %4008 = vmatpush1.msra.mxu0 %v3975
    %4009 = vmatprep.subr.mxu0 0.0
    %4010 = vmatpush1.msra.mxu0 %v3976
    %4011 = vmatprep.subr.mxu0 0.0
    %4012 = vmatpush1.msra.mxu0 %v3977
    %4013 = vmatprep.subr.mxu0 0.0
    %4014 = vmatpush1.msra.mxu0 %v3978
    %4015 = vmatprep.subr.mxu0 0.0
    %4016 = vmatpush1.msra.mxu0 %v3979
    %4017 = vmatprep.subr.mxu0 0.0
    %4018 = vmatpush1.msra.mxu0 %v3980
    %4019 = vmatprep.subr.mxu0 0.0
    %4020 = vmatpush1.msra.mxu0 %v3981
    %4021 = vmatprep.subr.mxu0 0.0
    %4022 = vmatpush1.msra.mxu0 0.0
    %4023 = vmatprep.subr.mxu0 0.0
    %4024 = vmatpush1.msra.mxu0 0.0
    %4025 = vmatprep.subr.mxu0 0.0
    %4026 = vmatpush1.msra.mxu0 0.0
    %4027 = vmatprep.subr.mxu0 0.0
    %4028 = vmatpush1.msra.mxu0 0.0
    %4029 = vmatprep.subr.mxu0 0.0
    %4030 = vmatpush1.msra.mxu0 0.0
    %4031 = vmatprep.subr.mxu0 0.0
    %4032 = vmatpush1.msra.mxu0 0.0
    %4033 = vmatprep.subr.mxu0 0.0
    %4034 = vmatpush1.msra.mxu0 0.0
    %4035 = vmatprep.subr.mxu0 0.0
    %4036 = vmatpush1.msra.mxu0 0.0
    %4037 = vmatprep.subr.mxu0 0.0
    %4038 = vmatpush1.msra.mxu0 0.0
    %4039 = vmatprep.subr.mxu0 0.0
    %4040 = vmatpush1.msra.mxu0 0.0
    %4041 = vmatprep.subr.mxu0 0.0
    %4042 = vmatpush1.msra.mxu0 0.0
    %4043 = vmatprep.subr.mxu0 0.0
    %4044 = vmatpush1.msra.mxu0 0.0
    %4045 = vmatprep.subr.mxu0 0.0
    %4046 = vmatpush1.msra.mxu0 0.0
    %4047 = vmatprep.subr.mxu0 0.0
    %4048 = vmatpush1.msra.mxu0 0.0
    %4049 = vmatprep.subr.mxu0 0.0
    %4050 = vmatpush1.msra.mxu0 0.0
    %4051 = vmatprep.subr.mxu0 0.0
    %4052 = vmatpush1.msra.mxu0 0.0
    %4053 = vmatprep.mubr.f32.mxu0 0.0
    %4054 = vmatmul.mubr.f32.gmra.mrb[0].mxu0 %v3965
    %v4055 = vpop.f32.mrb[0].mxu0
    %v4056 = vadd.f32 %v3987, %v4055
    %v4057 = vpop.f32.mrb[0].mxu0
    %4058 = vdwg.mxu0
    %4059 = vst [vmem:[#allocation2] sm:$0x3] %v4056
    // Predicated region
    $region38: #{cnn_forward.1} parent=1 // pred_check
      _
    $region39: #{cnn_forward.1} parent=1 // pred_check_branch
      %4061 = sbr.rel (0) target = $region41
    $region40: #{cnn_forward.1} parent=1 // pred_region
      %s4063 = ssub.s32 32, 32
      %4064 = vsyncadd [#allocation3], %s4063
      %s4066 = sshll.u32 [#allocation2], 4
      %s4067 = int_to_ptr.vmem [resolvable:$true] %s4066
      %4069 = dma.vmem_to_hbm [thread:$0]  %s4067, 32, %s9, [#allocation3]
    $region41: #{cnn_forward.1} parent=1 // pred_fallthru
      _
    // Predicated region
    $region42: #{cnn_forward.1} parent=1 // pred_check
      _
    $region43: #{cnn_forward.1} parent=1 // pred_check_branch
      %4071 = sbr.rel (0) target = $region45
    $region44: #{cnn_forward.1} parent=1 // pred_region
      %4072 = dma.done [#allocation3], 32
    $region45: #{cnn_forward.1} parent=1 // pred_fallthru
      _
    %4073 = vsyncpa [#allocation3], 1

</llo_original>
